<compile_context>
chip_gen: v7x
topology: tpu7x:2x2x1
jax: 0.10.0
libtpu: 0.0.40
codegen_flags: <defaults>
</compile_context>

<pallas_src>
import functools

import jax
import jax.numpy as jnp
from jax import lax
from jax.experimental import pallas as pl
from jax.experimental.pallas import tpu as pltpu

LANE = 128          # vreg lane width: every feature dim is zero-padded to this
PAD_N = 128         # node-count padding: makes every matmul operand lane/sublane dense
WS_COL = LANE - 1   # fixed padding column that carries rowsum(A) through the MXU


# ------------------------------- kernel -------------------------------------
def _pinsage_fused_kernel(n_layers, *refs):
    """refs = [h0, A_0..A_{L-1}, (Wq, bq, Wwn, Wwh, bw) x L, out_ref]."""
    out_ref = refs[-1]
    h0_ref = refs[0]
    a_refs = refs[1:1 + n_layers]
    p_refs = refs[1 + n_layers:-1]

    h = h0_ref[...]                                   # (PAD_N, LANE) f32, padded cols/rows = 0

    for l in range(n_layers):                         # static unroll; identical shapes per layer
        wq = p_refs[5 * l + 0][...]
        bq = p_refs[5 * l + 1][...]                   # bq[0, WS_COL] == 1.0 (planted in wrapper)
        wwn = p_refs[5 * l + 2][...]
        wwh = p_refs[5 * l + 3][...]
        bw = p_refs[5 * l + 4][...]
        a = a_refs[l][...]                            # (PAD_N, PAD_N), zero outside real block

        # Q projection + ReLU.  Padded Wq columns are zero, so column WS_COL is
        # exactly relu(0 + 1) == 1.0 for every row -> the next matmul also yields
        # rowsum(A) in that column for free (no separate cross-lane reduce).
        n_src = jnp.maximum(
            jnp.dot(h, wq, preferred_element_type=jnp.float32) + bq, 0.0)

        # One MXU pass: cols [:hidden] = A @ n,  col WS_COL = rowsum(A) = ws.
        agg = jnp.dot(a, n_src, preferred_element_type=jnp.float32)

        ws = jnp.maximum(agg[:, WS_COL:WS_COL + 1], 1.0)       # clamp(min=1)
        inv_ws = pl.reciprocal(ws, approx=False)

        # z = relu(W(cat([n/ws, h_dst], 1)) + bw), concat split into two matmuls.
        # dst nodes are the leading prefix of src nodes (DGL block layout); the
        # zero-padded A columns keep non-dst / padded rows from ever reaching real
        # rows, so the full resident h tile can stand in for h_dst.  Padded rows
        # of Wwn / Wwh make the ws column and all padding columns inert.
        z = (jnp.dot(agg * inv_ws, wwn, preferred_element_type=jnp.float32)
             + jnp.dot(h, wwh, preferred_element_type=jnp.float32)
             + bw)
        z = jnp.maximum(z, 0.0)

        # L2 row-normalize with zero-norm guard; padded cols are 0, so the norm
        # over LANE cols equals the norm over the true output cols.
        sumsq = jnp.sum(z * z, axis=1, keepdims=True)
        inv_norm = jnp.where(sumsq > 0.0, lax.rsqrt(sumsq), 1.0)
        h = z * inv_norm

    out_ref[...] = h                                  # unmasked lane-dense (PAD_N, LANE) store


# ------------------------------- wrapper -------------------------------------
def _pad2(x, rows, cols):
    return jnp.pad(x, ((0, rows - x.shape[0]), (0, cols - x.shape[1])))


def pinsage_forward(adjs, h0, layer_params):
    """Fused PinSAGE forward. adjs[l]: (N_dst_l, N_src_l) dense edge-weight matrix."""
    n_layers = len(adjs)
    assert len(layer_params) == n_layers
    assert h0.shape[0] <= PAD_N and h0.shape[1] <= LANE
    assert all(a.shape[0] <= PAD_N and a.shape[1] <= PAD_N for a in adjs)

    operands = [_pad2(h0.astype(jnp.float32), PAD_N, LANE)]
    operands += [_pad2(a.astype(jnp.float32), PAD_N, PAD_N) for a in adjs]
    for wq, bq, wwn, wwh, bw in layer_params:
        hid = wq.shape[1]
        d_in, d_out = wwh.shape
        assert hid < LANE, "ws-column trick needs hidden < LANE"
        assert d_in <= LANE and d_out <= LANE
        # Plant the rowsum(A) indicator into the padded Q bias (column WS_COL).
        bq_p = _pad2(bq.reshape(1, -1).astype(jnp.float32), 1, LANE).at[0, WS_COL].set(1.0)
        operands += [_pad2(wq.astype(jnp.float32), LANE, LANE), bq_p,
                     _pad2(wwn.astype(jnp.float32), LANE, LANE),
                     _pad2(wwh.astype(jnp.float32), LANE, LANE),
                     _pad2(bw.reshape(1, -1).astype(jnp.float32), 1, LANE)]

    n_dst = adjs[-1].shape[0]
    d_out = layer_params[-1][2].shape[1]

    kern = functools.partial(_pinsage_fused_kernel, n_layers)
    vmem = pl.BlockSpec(memory_space=pltpu.MemorySpace.VMEM)
    out_padded = pl.pallas_call(
        kern,
        out_shape=jax.ShapeDtypeStruct((PAD_N, LANE), jnp.float32),
        in_specs=[vmem] * len(operands),
        out_specs=vmem,
    )(*operands)
    return out_padded[:n_dst, :d_out]                 # strip padding outside kernel


# ----------------------- parameter construction -----------------------------
def _xavier_uniform(key, fan_in, fan_out, gain):
    bound = gain * (6.0 / (fan_in + fan_out)) ** 0.5
    return jax.random.uniform(key, (fan_in, fan_out), jnp.float32, -bound, bound)


def init_wsage_params(key, d_in, hidden, d_out):
    gain = 2.0 ** 0.5  # nn.init.calculate_gain('relu')
    k1, k2 = jax.random.split(key)
    wq = _xavier_uniform(k1, d_in, hidden, gain)                  # Q: (D_in, H)
    bq = jnp.zeros((1, hidden), jnp.float32)
    # W takes cat([n/ws (H), h_dst (D_in)]) -> split along the input dim
    ww = _xavier_uniform(k2, hidden + d_in, d_out, gain)
    wwn = ww[:hidden]                                             # (H, D_out)
    wwh = ww[hidden:]                                             # (D_in, D_out)
    bw = jnp.zeros((1, d_out), jnp.float32)
    return (wq, bq, wwn, wwh, bw)


# ----------------------- pure-JAX reference (for check) ----------------------
def _ref_forward(adjs, h, layer_params):
    hp = jax.lax.Precision.HIGHEST
    for adj, (wq, bq, wwn, wwh, bw) in zip(adjs, layer_params):
        n_src = jax.nn.relu(jnp.dot(h, wq, precision=hp) + bq)
        agg = jnp.dot(adj, n_src, precision=hp)
        ws = jnp.maximum(jnp.sum(adj, axis=1, keepdims=True), 1.0)
        h_dst = h[:adj.shape[0]]
        z = jax.nn.relu(jnp.dot(agg / ws, wwn, precision=hp)
                        + jnp.dot(h_dst, wwh, precision=hp) + bw)
        zn = jnp.sqrt(jnp.sum(z * z, axis=1, keepdims=True))
        zn = jnp.where(zn == 0.0, 1.0, zn)
        h = z / zn
    return h


if __name__ == "__main__":
    key = jax.random.PRNGKey(0)

    in_feats, n_hidden, n_classes, n_layers = 32, 32, 16, 3
    # node counts per block: src of layer l = node_counts[l], dst = node_counts[l+1]
    node_counts = [64, 32, 16, 8]

    dims = ([(in_feats, n_hidden, n_hidden)]
            + [(n_hidden, n_hidden, n_hidden)] * (n_layers - 2)
            + [(n_hidden, n_hidden, n_classes)])

    keys = jax.random.split(key, 2 * n_layers + 1)
    layer_params = [init_wsage_params(keys[i], di, dh, do)
                    for i, (di, dh, do) in enumerate(dims)]

    # input node features for the outermost block's source nodes
    h0 = jax.random.normal(keys[n_layers], (node_counts[0], in_feats), jnp.float32)

    # dense weighted adjacency per block (non-negative edge weights, ~50% sparse)
    adjs = []
    for l in range(n_layers):
        ka, km = jax.random.split(keys[n_layers + 1 + l])
        w = jax.random.uniform(ka, (node_counts[l + 1], node_counts[l]),
                               jnp.float32, 0.1, 2.0)
        mask = jax.random.uniform(km, w.shape) < 0.5
        adjs.append(jnp.where(mask, w, 0.0))

    out = jax.jit(pinsage_forward)(adjs, h0, layer_params)
    jax.block_until_ready(out)
    assert out.shape == (node_counts[-1], n_classes)

    ref = _ref_forward(adjs, h0, layer_params)
    assert bool(jnp.allclose(out, ref, rtol=2e-2, atol=2e-2)), \
        ("max abs diff:", float(jnp.max(jnp.abs(out - ref))))
    print("KERNEL_OK")
</pallas_src>

<mosaic_0001>
module attributes {stable_mosaic.version = 11 : i64} {
  func.func @_pinsage_fused_kernel(%arg0: memref<128x128xf32, #tpu.memory_space<vmem>>, %arg1: memref<128x128xf32, #tpu.memory_space<vmem>>, %arg2: memref<128x128xf32, #tpu.memory_space<vmem>>, %arg3: memref<128x128xf32, #tpu.memory_space<vmem>>, %arg4: memref<128x128xf32, #tpu.memory_space<vmem>>, %arg5: memref<1x128xf32, #tpu.memory_space<vmem>>, %arg6: memref<128x128xf32, #tpu.memory_space<vmem>>, %arg7: memref<128x128xf32, #tpu.memory_space<vmem>>, %arg8: memref<1x128xf32, #tpu.memory_space<vmem>>, %arg9: memref<128x128xf32, #tpu.memory_space<vmem>>, %arg10: memref<1x128xf32, #tpu.memory_space<vmem>>, %arg11: memref<128x128xf32, #tpu.memory_space<vmem>>, %arg12: memref<128x128xf32, #tpu.memory_space<vmem>>, %arg13: memref<1x128xf32, #tpu.memory_space<vmem>>, %arg14: memref<128x128xf32, #tpu.memory_space<vmem>>, %arg15: memref<1x128xf32, #tpu.memory_space<vmem>>, %arg16: memref<128x128xf32, #tpu.memory_space<vmem>>, %arg17: memref<128x128xf32, #tpu.memory_space<vmem>>, %arg18: memref<1x128xf32, #tpu.memory_space<vmem>>, %arg19: memref<128x128xf32, #tpu.memory_space<vmem>>) attributes {dimension_semantics = [], scalar_prefetch = 0 : i64, scratch_operands = 0 : i64, tpu.core_type = #tpu.core_type<tc>} {
    %c0 = arith.constant 0 : index
    %c0_0 = arith.constant 0 : index
    %0 = vector.load %arg0[%c0, %c0_0] : memref<128x128xf32, #tpu.memory_space<vmem>>, vector<128x128xf32>
    %c0_1 = arith.constant 0 : index
    %c0_2 = arith.constant 0 : index
    %1 = vector.load %arg4[%c0_1, %c0_2] : memref<128x128xf32, #tpu.memory_space<vmem>>, vector<128x128xf32>
    %c0_3 = arith.constant 0 : index
    %c0_4 = arith.constant 0 : index
    %2 = vector.load %arg5[%c0_3, %c0_4] : memref<1x128xf32, #tpu.memory_space<vmem>>, vector<1x128xf32>
    %c0_5 = arith.constant 0 : index
    %c0_6 = arith.constant 0 : index
    %3 = vector.load %arg6[%c0_5, %c0_6] : memref<128x128xf32, #tpu.memory_space<vmem>>, vector<128x128xf32>
    %c0_7 = arith.constant 0 : index
    %c0_8 = arith.constant 0 : index
    %4 = vector.load %arg7[%c0_7, %c0_8] : memref<128x128xf32, #tpu.memory_space<vmem>>, vector<128x128xf32>
    %c0_9 = arith.constant 0 : index
    %c0_10 = arith.constant 0 : index
    %5 = vector.load %arg8[%c0_9, %c0_10] : memref<1x128xf32, #tpu.memory_space<vmem>>, vector<1x128xf32>
    %c0_11 = arith.constant 0 : index
    %c0_12 = arith.constant 0 : index
    %6 = vector.load %arg1[%c0_11, %c0_12] : memref<128x128xf32, #tpu.memory_space<vmem>>, vector<128x128xf32>
    %cst = arith.constant dense<0.000000e+00> : vector<128x128xf32>
    %7 = tpu.matmul %0, %1, %cst {dimension_numbers = #tpu.dot_dimension_numbers<[1], [0], [0], [1], [0, 0, 1, 1], [], []>} : vector<128x128xf32>, vector<128x128xf32>, vector<128x128xf32> -> vector<128x128xf32>
    %8 = vector.broadcast %2 : vector<1x128xf32> to vector<128x128xf32>
    %9 = arith.addf %7, %8 : vector<128x128xf32>
    %cst_13 = arith.constant 0.000000e+00 : f32
    %10 = vector.broadcast %cst_13 : f32 to vector<128x128xf32>
    %11 = arith.maximumf %9, %10 : vector<128x128xf32>
    %cst_14 = arith.constant dense<0.000000e+00> : vector<128x128xf32>
    %12 = tpu.matmul %6, %11, %cst_14 {dimension_numbers = #tpu.dot_dimension_numbers<[1], [0], [0], [1], [0, 0, 1, 1], [], []>} : vector<128x128xf32>, vector<128x128xf32>, vector<128x128xf32> -> vector<128x128xf32>
    %13 = vector.extract_strided_slice %12 {offsets = [0, 127], sizes = [128, 1], strides = [1, 1]} : vector<128x128xf32> to vector<128x1xf32>
    %cst_15 = arith.constant 1.000000e+00 : f32
    %14 = vector.broadcast %cst_15 : f32 to vector<128x1xf32>
    %15 = arith.maximumf %13, %14 : vector<128x1xf32>
    %16 = tpu.reciprocal %15 : vector<128x1xf32> -> vector<128x1xf32>
    %17 = vector.broadcast %16 : vector<128x1xf32> to vector<128x128xf32>
    %18 = arith.mulf %12, %17 : vector<128x128xf32>
    %cst_16 = arith.constant dense<0.000000e+00> : vector<128x128xf32>
    %19 = tpu.matmul %18, %3, %cst_16 {dimension_numbers = #tpu.dot_dimension_numbers<[1], [0], [0], [1], [0, 0, 1, 1], [], []>} : vector<128x128xf32>, vector<128x128xf32>, vector<128x128xf32> -> vector<128x128xf32>
    %cst_17 = arith.constant dense<0.000000e+00> : vector<128x128xf32>
    %20 = tpu.matmul %0, %4, %cst_17 {dimension_numbers = #tpu.dot_dimension_numbers<[1], [0], [0], [1], [0, 0, 1, 1], [], []>} : vector<128x128xf32>, vector<128x128xf32>, vector<128x128xf32> -> vector<128x128xf32>
    %21 = arith.addf %19, %20 : vector<128x128xf32>
    %22 = vector.broadcast %5 : vector<1x128xf32> to vector<128x128xf32>
    %23 = arith.addf %21, %22 : vector<128x128xf32>
    %cst_18 = arith.constant 0.000000e+00 : f32
    %24 = vector.broadcast %cst_18 : f32 to vector<128x128xf32>
    %25 = arith.maximumf %23, %24 : vector<128x128xf32>
    %26 = arith.mulf %25, %25 : vector<128x128xf32>
    %cst_19 = arith.constant dense<0.000000e+00> : vector<128xf32>
    %27 = vector.multi_reduction <add>, %26, %cst_19 [1] : vector<128x128xf32> to vector<128xf32>
    %28 = vector.shape_cast %27 : vector<128xf32> to vector<128x1xf32>
    %cst_20 = arith.constant 0.000000e+00 : f32
    %29 = vector.broadcast %cst_20 : f32 to vector<128x1xf32>
    %30 = arith.cmpf ogt, %28, %29 : vector<128x1xf32>
    %31 = math.rsqrt %28 : vector<128x1xf32>
    %cst_21 = arith.constant 1.000000e+00 : f32
    %32 = vector.broadcast %cst_21 : f32 to vector<128x1xf32>
    %33 = arith.select %30, %31, %32 : vector<128x1xi1>, vector<128x1xf32>
    %34 = vector.broadcast %33 : vector<128x1xf32> to vector<128x128xf32>
    %35 = arith.mulf %25, %34 : vector<128x128xf32>
    %c0_22 = arith.constant 0 : index
    %c0_23 = arith.constant 0 : index
    %36 = vector.load %arg9[%c0_22, %c0_23] : memref<128x128xf32, #tpu.memory_space<vmem>>, vector<128x128xf32>
    %c0_24 = arith.constant 0 : index
    %c0_25 = arith.constant 0 : index
    %37 = vector.load %arg10[%c0_24, %c0_25] : memref<1x128xf32, #tpu.memory_space<vmem>>, vector<1x128xf32>
    %c0_26 = arith.constant 0 : index
    %c0_27 = arith.constant 0 : index
    %38 = vector.load %arg11[%c0_26, %c0_27] : memref<128x128xf32, #tpu.memory_space<vmem>>, vector<128x128xf32>
    %c0_28 = arith.constant 0 : index
    %c0_29 = arith.constant 0 : index
    %39 = vector.load %arg12[%c0_28, %c0_29] : memref<128x128xf32, #tpu.memory_space<vmem>>, vector<128x128xf32>
    %c0_30 = arith.constant 0 : index
    %c0_31 = arith.constant 0 : index
    %40 = vector.load %arg13[%c0_30, %c0_31] : memref<1x128xf32, #tpu.memory_space<vmem>>, vector<1x128xf32>
    %c0_32 = arith.constant 0 : index
    %c0_33 = arith.constant 0 : index
    %41 = vector.load %arg2[%c0_32, %c0_33] : memref<128x128xf32, #tpu.memory_space<vmem>>, vector<128x128xf32>
    %cst_34 = arith.constant dense<0.000000e+00> : vector<128x128xf32>
    %42 = tpu.matmul %35, %36, %cst_34 {dimension_numbers = #tpu.dot_dimension_numbers<[1], [0], [0], [1], [0, 0, 1, 1], [], []>} : vector<128x128xf32>, vector<128x128xf32>, vector<128x128xf32> -> vector<128x128xf32>
    %43 = vector.broadcast %37 : vector<1x128xf32> to vector<128x128xf32>
    %44 = arith.addf %42, %43 : vector<128x128xf32>
    %cst_35 = arith.constant 0.000000e+00 : f32
    %45 = vector.broadcast %cst_35 : f32 to vector<128x128xf32>
    %46 = arith.maximumf %44, %45 : vector<128x128xf32>
    %cst_36 = arith.constant dense<0.000000e+00> : vector<128x128xf32>
    %47 = tpu.matmul %41, %46, %cst_36 {dimension_numbers = #tpu.dot_dimension_numbers<[1], [0], [0], [1], [0, 0, 1, 1], [], []>} : vector<128x128xf32>, vector<128x128xf32>, vector<128x128xf32> -> vector<128x128xf32>
    %48 = vector.extract_strided_slice %47 {offsets = [0, 127], sizes = [128, 1], strides = [1, 1]} : vector<128x128xf32> to vector<128x1xf32>
    %cst_37 = arith.constant 1.000000e+00 : f32
    %49 = vector.broadcast %cst_37 : f32 to vector<128x1xf32>
    %50 = arith.maximumf %48, %49 : vector<128x1xf32>
    %51 = tpu.reciprocal %50 : vector<128x1xf32> -> vector<128x1xf32>
    %52 = vector.broadcast %51 : vector<128x1xf32> to vector<128x128xf32>
    %53 = arith.mulf %47, %52 : vector<128x128xf32>
    %cst_38 = arith.constant dense<0.000000e+00> : vector<128x128xf32>
    %54 = tpu.matmul %53, %38, %cst_38 {dimension_numbers = #tpu.dot_dimension_numbers<[1], [0], [0], [1], [0, 0, 1, 1], [], []>} : vector<128x128xf32>, vector<128x128xf32>, vector<128x128xf32> -> vector<128x128xf32>
    %cst_39 = arith.constant dense<0.000000e+00> : vector<128x128xf32>
    %55 = tpu.matmul %35, %39, %cst_39 {dimension_numbers = #tpu.dot_dimension_numbers<[1], [0], [0], [1], [0, 0, 1, 1], [], []>} : vector<128x128xf32>, vector<128x128xf32>, vector<128x128xf32> -> vector<128x128xf32>
    %56 = arith.addf %54, %55 : vector<128x128xf32>
    %57 = vector.broadcast %40 : vector<1x128xf32> to vector<128x128xf32>
    %58 = arith.addf %56, %57 : vector<128x128xf32>
    %cst_40 = arith.constant 0.000000e+00 : f32
    %59 = vector.broadcast %cst_40 : f32 to vector<128x128xf32>
    %60 = arith.maximumf %58, %59 : vector<128x128xf32>
    %61 = arith.mulf %60, %60 : vector<128x128xf32>
    %cst_41 = arith.constant dense<0.000000e+00> : vector<128xf32>
    %62 = vector.multi_reduction <add>, %61, %cst_41 [1] : vector<128x128xf32> to vector<128xf32>
    %63 = vector.shape_cast %62 : vector<128xf32> to vector<128x1xf32>
    %cst_42 = arith.constant 0.000000e+00 : f32
    %64 = vector.broadcast %cst_42 : f32 to vector<128x1xf32>
    %65 = arith.cmpf ogt, %63, %64 : vector<128x1xf32>
    %66 = math.rsqrt %63 : vector<128x1xf32>
    %cst_43 = arith.constant 1.000000e+00 : f32
    %67 = vector.broadcast %cst_43 : f32 to vector<128x1xf32>
    %68 = arith.select %65, %66, %67 : vector<128x1xi1>, vector<128x1xf32>
    %69 = vector.broadcast %68 : vector<128x1xf32> to vector<128x128xf32>
    %70 = arith.mulf %60, %69 : vector<128x128xf32>
    %c0_44 = arith.constant 0 : index
    %c0_45 = arith.constant 0 : index
    %71 = vector.load %arg14[%c0_44, %c0_45] : memref<128x128xf32, #tpu.memory_space<vmem>>, vector<128x128xf32>
    %c0_46 = arith.constant 0 : index
    %c0_47 = arith.constant 0 : index
    %72 = vector.load %arg15[%c0_46, %c0_47] : memref<1x128xf32, #tpu.memory_space<vmem>>, vector<1x128xf32>
    %c0_48 = arith.constant 0 : index
    %c0_49 = arith.constant 0 : index
    %73 = vector.load %arg16[%c0_48, %c0_49] : memref<128x128xf32, #tpu.memory_space<vmem>>, vector<128x128xf32>
    %c0_50 = arith.constant 0 : index
    %c0_51 = arith.constant 0 : index
    %74 = vector.load %arg17[%c0_50, %c0_51] : memref<128x128xf32, #tpu.memory_space<vmem>>, vector<128x128xf32>
    %c0_52 = arith.constant 0 : index
    %c0_53 = arith.constant 0 : index
    %75 = vector.load %arg18[%c0_52, %c0_53] : memref<1x128xf32, #tpu.memory_space<vmem>>, vector<1x128xf32>
    %c0_54 = arith.constant 0 : index
    %c0_55 = arith.constant 0 : index
    %76 = vector.load %arg3[%c0_54, %c0_55] : memref<128x128xf32, #tpu.memory_space<vmem>>, vector<128x128xf32>
    %cst_56 = arith.constant dense<0.000000e+00> : vector<128x128xf32>
    %77 = tpu.matmul %70, %71, %cst_56 {dimension_numbers = #tpu.dot_dimension_numbers<[1], [0], [0], [1], [0, 0, 1, 1], [], []>} : vector<128x128xf32>, vector<128x128xf32>, vector<128x128xf32> -> vector<128x128xf32>
    %78 = vector.broadcast %72 : vector<1x128xf32> to vector<128x128xf32>
    %79 = arith.addf %77, %78 : vector<128x128xf32>
    %cst_57 = arith.constant 0.000000e+00 : f32
    %80 = vector.broadcast %cst_57 : f32 to vector<128x128xf32>
    %81 = arith.maximumf %79, %80 : vector<128x128xf32>
    %cst_58 = arith.constant dense<0.000000e+00> : vector<128x128xf32>
    %82 = tpu.matmul %76, %81, %cst_58 {dimension_numbers = #tpu.dot_dimension_numbers<[1], [0], [0], [1], [0, 0, 1, 1], [], []>} : vector<128x128xf32>, vector<128x128xf32>, vector<128x128xf32> -> vector<128x128xf32>
    %83 = vector.extract_strided_slice %82 {offsets = [0, 127], sizes = [128, 1], strides = [1, 1]} : vector<128x128xf32> to vector<128x1xf32>
    %cst_59 = arith.constant 1.000000e+00 : f32
    %84 = vector.broadcast %cst_59 : f32 to vector<128x1xf32>
    %85 = arith.maximumf %83, %84 : vector<128x1xf32>
    %86 = tpu.reciprocal %85 : vector<128x1xf32> -> vector<128x1xf32>
    %87 = vector.broadcast %86 : vector<128x1xf32> to vector<128x128xf32>
    %88 = arith.mulf %82, %87 : vector<128x128xf32>
    %cst_60 = arith.constant dense<0.000000e+00> : vector<128x128xf32>
    %89 = tpu.matmul %88, %73, %cst_60 {dimension_numbers = #tpu.dot_dimension_numbers<[1], [0], [0], [1], [0, 0, 1, 1], [], []>} : vector<128x128xf32>, vector<128x128xf32>, vector<128x128xf32> -> vector<128x128xf32>
    %cst_61 = arith.constant dense<0.000000e+00> : vector<128x128xf32>
    %90 = tpu.matmul %70, %74, %cst_61 {dimension_numbers = #tpu.dot_dimension_numbers<[1], [0], [0], [1], [0, 0, 1, 1], [], []>} : vector<128x128xf32>, vector<128x128xf32>, vector<128x128xf32> -> vector<128x128xf32>
    %91 = arith.addf %89, %90 : vector<128x128xf32>
    %92 = vector.broadcast %75 : vector<1x128xf32> to vector<128x128xf32>
    %93 = arith.addf %91, %92 : vector<128x128xf32>
    %cst_62 = arith.constant 0.000000e+00 : f32
    %94 = vector.broadcast %cst_62 : f32 to vector<128x128xf32>
    %95 = arith.maximumf %93, %94 : vector<128x128xf32>
    %96 = arith.mulf %95, %95 : vector<128x128xf32>
    %cst_63 = arith.constant dense<0.000000e+00> : vector<128xf32>
    %97 = vector.multi_reduction <add>, %96, %cst_63 [1] : vector<128x128xf32> to vector<128xf32>
    %98 = vector.shape_cast %97 : vector<128xf32> to vector<128x1xf32>
    %cst_64 = arith.constant 0.000000e+00 : f32
    %99 = vector.broadcast %cst_64 : f32 to vector<128x1xf32>
    %100 = arith.cmpf ogt, %98, %99 : vector<128x1xf32>
    %101 = math.rsqrt %98 : vector<128x1xf32>
    %cst_65 = arith.constant 1.000000e+00 : f32
    %102 = vector.broadcast %cst_65 : f32 to vector<128x1xf32>
    %103 = arith.select %100, %101, %102 : vector<128x1xi1>, vector<128x1xf32>
    %104 = vector.broadcast %103 : vector<128x1xf32> to vector<128x128xf32>
    %105 = arith.mulf %95, %104 : vector<128x128xf32>
    %c0_66 = arith.constant 0 : index
    %c0_67 = arith.constant 0 : index
    %106 = vector.load %arg19[%c0_66, %c0_67] : memref<128x128xf32, #tpu.memory_space<vmem>>, vector<128x128xf32>
    tpu.vector_store %arg19[%c0_66, %c0_67], %105 {strides = array<i32>} : memref<128x128xf32, #tpu.memory_space<vmem>>, vector<128x128xf32>,
    return
  }
}

</mosaic_0001>

<llo_original>
// kernel: pinsage_forward.1
$region0: #{pinsage_forward.1}
  #allocation0 [shape = 'u32[]', space=smem, size = 0x4, offset = 0x4, fixed_abs, tag = 'smem constant byte address 0x4 - core index']
  #allocation1 [shape = 'u32[144,128]{1,0:T(1,128)}', space=vmem, size = 0x12000, scoped, tag = 'internal scratch']
  %s0 = inlined_call_operand.vmem [shape: f32[128,128], index: 0, kind: input, shape index: {}]
  %s1 = inlined_call_operand.vmem [shape: f32[128,128], index: 1, kind: input, shape index: {}]
  %s2 = inlined_call_operand.vmem [shape: f32[128,128], index: 2, kind: input, shape index: {}]
  %s3 = inlined_call_operand.vmem [shape: f32[128,128], index: 3, kind: input, shape index: {}]
  %s4 = inlined_call_operand.vmem [shape: f32[128,128], index: 4, kind: input, shape index: {}]
  %s5 = inlined_call_operand.vmem [shape: f32[1,128], index: 5, kind: input, shape index: {}]
  %s6 = inlined_call_operand.vmem [shape: f32[128,128], index: 6, kind: input, shape index: {}]
  %s7 = inlined_call_operand.vmem [shape: f32[128,128], index: 7, kind: input, shape index: {}]
  %s8 = inlined_call_operand.vmem [shape: f32[1,128], index: 8, kind: input, shape index: {}]
  %s9 = inlined_call_operand.vmem [shape: f32[128,128], index: 9, kind: input, shape index: {}]
  %s10 = inlined_call_operand.vmem [shape: f32[1,128], index: 10, kind: input, shape index: {}]
  %s11 = inlined_call_operand.vmem [shape: f32[128,128], index: 11, kind: input, shape index: {}]
  %s12 = inlined_call_operand.vmem [shape: f32[128,128], index: 12, kind: input, shape index: {}]
  %s13 = inlined_call_operand.vmem [shape: f32[1,128], index: 13, kind: input, shape index: {}]
  %s14 = inlined_call_operand.vmem [shape: f32[128,128], index: 14, kind: input, shape index: {}]
  %s15 = inlined_call_operand.vmem [shape: f32[1,128], index: 15, kind: input, shape index: {}]
  %s16 = inlined_call_operand.vmem [shape: f32[128,128], index: 16, kind: input, shape index: {}]
  %s17 = inlined_call_operand.vmem [shape: f32[128,128], index: 17, kind: input, shape index: {}]
  %s18 = inlined_call_operand.vmem [shape: f32[1,128], index: 18, kind: input, shape index: {}]
  %s19 = inlined_call_operand.vmem [shape: f32[128,128], index: 19, kind: output, shape index: {}]
  %s20 = sld [smem:[#allocation0]]
  $region86: #{pinsage_forward.1} parent=0
    _
  %s22 = ssub.s32 1, %s20
  %s23 = scalar_select 0, %s22, %s20
  // Predicated region
  $region2: #{pinsage_forward.1} parent=0 // pred_check
    _
  $region3: #{pinsage_forward.1} parent=0 // pred_check_branch
    %25 = sbr.rel (0) target = $region5
  $region4: #{pinsage_forward.1} parent=0 // pred_region
    _
  $region5: #{pinsage_forward.1} parent=0 // pred_fallthru
    _
  // Predicated region
  $region6: #{pinsage_forward.1} parent=0 // pred_check
    _
  $region7: #{pinsage_forward.1} parent=0 // pred_check_branch
    %27 = sbr.rel (0) target = $region9
  $region8: #{pinsage_forward.1} parent=0 // pred_region
    _
  $region9: #{pinsage_forward.1} parent=0 // pred_fallthru
    _
  // Predicated region
  $region10: #{pinsage_forward.1} parent=0 // pred_check
    _
  $region11: #{pinsage_forward.1} parent=0 // pred_check_branch
    %29 = sbr.rel (0) target = $region13
  $region12: #{pinsage_forward.1} parent=0 // pred_region
    _
  $region13: #{pinsage_forward.1} parent=0 // pred_fallthru
    _
  // Predicated region
  $region14: #{pinsage_forward.1} parent=0 // pred_check
    _
  $region15: #{pinsage_forward.1} parent=0 // pred_check_branch
    %31 = sbr.rel (0) target = $region17
  $region16: #{pinsage_forward.1} parent=0 // pred_region
    _
  $region17: #{pinsage_forward.1} parent=0 // pred_fallthru
    _
  // Predicated region
  $region18: #{pinsage_forward.1} parent=0 // pred_check
    _
  $region19: #{pinsage_forward.1} parent=0 // pred_check_branch
    %33 = sbr.rel (0) target = $region21
  $region20: #{pinsage_forward.1} parent=0 // pred_region
    _
  $region21: #{pinsage_forward.1} parent=0 // pred_fallthru
    _
  // Predicated region
  $region22: #{pinsage_forward.1} parent=0 // pred_check
    _
  $region23: #{pinsage_forward.1} parent=0 // pred_check_branch
    %35 = sbr.rel (0) target = $region25
  $region24: #{pinsage_forward.1} parent=0 // pred_region
    _
  $region25: #{pinsage_forward.1} parent=0 // pred_fallthru
    _
  // Predicated region
  $region26: #{pinsage_forward.1} parent=0 // pred_check
    _
  $region27: #{pinsage_forward.1} parent=0 // pred_check_branch
    %37 = sbr.rel (0) target = $region29
  $region28: #{pinsage_forward.1} parent=0 // pred_region
    _
  $region29: #{pinsage_forward.1} parent=0 // pred_fallthru
    _
  // Predicated region
  $region30: #{pinsage_forward.1} parent=0 // pred_check
    _
  $region31: #{pinsage_forward.1} parent=0 // pred_check_branch
    %39 = sbr.rel (0) target = $region33
  $region32: #{pinsage_forward.1} parent=0 // pred_region
    _
  $region33: #{pinsage_forward.1} parent=0 // pred_fallthru
    _
  // Predicated region
  $region34: #{pinsage_forward.1} parent=0 // pred_check
    _
  $region35: #{pinsage_forward.1} parent=0 // pred_check_branch
    %41 = sbr.rel (0) target = $region37
  $region36: #{pinsage_forward.1} parent=0 // pred_region
    _
  $region37: #{pinsage_forward.1} parent=0 // pred_fallthru
    _
  // Predicated region
  $region38: #{pinsage_forward.1} parent=0 // pred_check
    _
  $region39: #{pinsage_forward.1} parent=0 // pred_check_branch
    %43 = sbr.rel (0) target = $region41
  $region40: #{pinsage_forward.1} parent=0 // pred_region
    _
  $region41: #{pinsage_forward.1} parent=0 // pred_fallthru
    _
  // Predicated region
  $region42: #{pinsage_forward.1} parent=0 // pred_check
    _
  $region43: #{pinsage_forward.1} parent=0 // pred_check_branch
    %45 = sbr.rel (0) target = $region45
  $region44: #{pinsage_forward.1} parent=0 // pred_region
    _
  $region45: #{pinsage_forward.1} parent=0 // pred_fallthru
    _
  // Predicated region
  $region46: #{pinsage_forward.1} parent=0 // pred_check
    _
  $region47: #{pinsage_forward.1} parent=0 // pred_check_branch
    %47 = sbr.rel (0) target = $region49
  $region48: #{pinsage_forward.1} parent=0 // pred_region
    _
  $region49: #{pinsage_forward.1} parent=0 // pred_fallthru
    _
  // Predicated region
  $region50: #{pinsage_forward.1} parent=0 // pred_check
    _
  $region51: #{pinsage_forward.1} parent=0 // pred_check_branch
    %49 = sbr.rel (0) target = $region53
  $region52: #{pinsage_forward.1} parent=0 // pred_region
    _
  $region53: #{pinsage_forward.1} parent=0 // pred_fallthru
    _
  // Predicated region
  $region54: #{pinsage_forward.1} parent=0 // pred_check
    _
  $region55: #{pinsage_forward.1} parent=0 // pred_check_branch
    %51 = sbr.rel (0) target = $region57
  $region56: #{pinsage_forward.1} parent=0 // pred_region
    _
  $region57: #{pinsage_forward.1} parent=0 // pred_fallthru
    _
  // Predicated region
  $region58: #{pinsage_forward.1} parent=0 // pred_check
    _
  $region59: #{pinsage_forward.1} parent=0 // pred_check_branch
    %53 = sbr.rel (0) target = $region61
  $region60: #{pinsage_forward.1} parent=0 // pred_region
    _
  $region61: #{pinsage_forward.1} parent=0 // pred_fallthru
    _
  // Predicated region
  $region62: #{pinsage_forward.1} parent=0 // pred_check
    _
  $region63: #{pinsage_forward.1} parent=0 // pred_check_branch
    %55 = sbr.rel (0) target = $region65
  $region64: #{pinsage_forward.1} parent=0 // pred_region
    _
  $region65: #{pinsage_forward.1} parent=0 // pred_fallthru
    _
  // Predicated region
  $region66: #{pinsage_forward.1} parent=0 // pred_check
    _
  $region67: #{pinsage_forward.1} parent=0 // pred_check_branch
    %57 = sbr.rel (0) target = $region69
  $region68: #{pinsage_forward.1} parent=0 // pred_region
    _
  $region69: #{pinsage_forward.1} parent=0 // pred_fallthru
    _
  // Predicated region
  $region70: #{pinsage_forward.1} parent=0 // pred_check
    _
  $region71: #{pinsage_forward.1} parent=0 // pred_check_branch
    %59 = sbr.rel (0) target = $region73
  $region72: #{pinsage_forward.1} parent=0 // pred_region
    _
  $region73: #{pinsage_forward.1} parent=0 // pred_fallthru
    _
  // Predicated region
  $region74: #{pinsage_forward.1} parent=0 // pred_check
    _
  $region75: #{pinsage_forward.1} parent=0 // pred_check_branch
    %61 = sbr.rel (0) target = $region77
  $region76: #{pinsage_forward.1} parent=0 // pred_region
    _
  $region77: #{pinsage_forward.1} parent=0 // pred_fallthru
    _
  %v62 = vld [vmem:[%s0] sm:$0xff]
  %v63 = vld [vmem:[%s0 + $0x8] sm:$0xff]
  %v64 = vld [vmem:[%s0 + $0x10] sm:$0xff]
  %v65 = vld [vmem:[%s0 + $0x18] sm:$0xff]
  %v66 = vld [vmem:[%s0 + $0x20] sm:$0xff]
  %v67 = vld [vmem:[%s0 + $0x28] sm:$0xff]
  %v68 = vld [vmem:[%s0 + $0x30] sm:$0xff]
  %v69 = vld [vmem:[%s0 + $0x38] sm:$0xff]
  %v70 = vld [vmem:[%s0 + $0x40] sm:$0xff]
  %v71 = vld [vmem:[%s0 + $0x48] sm:$0xff]
  %v72 = vld [vmem:[%s0 + $0x50] sm:$0xff]
  %v73 = vld [vmem:[%s0 + $0x58] sm:$0xff]
  %v74 = vld [vmem:[%s0 + $0x60] sm:$0xff]
  %v75 = vld [vmem:[%s0 + $0x68] sm:$0xff]
  %v76 = vld [vmem:[%s0 + $0x70] sm:$0xff]
  %v77 = vld [vmem:[%s0 + $0x78] sm:$0xff]
  %v78 = vld [vmem:[%s4] sm:$0xff]
  %v79 = vld [vmem:[%s4 + $0x8] sm:$0xff]
  %v80 = vld [vmem:[%s4 + $0x10] sm:$0xff]
  %v81 = vld [vmem:[%s4 + $0x18] sm:$0xff]
  %v82 = vld [vmem:[%s4 + $0x20] sm:$0xff]
  %v83 = vld [vmem:[%s4 + $0x28] sm:$0xff]
  %v84 = vld [vmem:[%s4 + $0x30] sm:$0xff]
  %v85 = vld [vmem:[%s4 + $0x38] sm:$0xff]
  %v86 = vld [vmem:[%s4 + $0x40] sm:$0xff]
  %v87 = vld [vmem:[%s4 + $0x48] sm:$0xff]
  %v88 = vld [vmem:[%s4 + $0x50] sm:$0xff]
  %v89 = vld [vmem:[%s4 + $0x58] sm:$0xff]
  %v90 = vld [vmem:[%s4 + $0x60] sm:$0xff]
  %v91 = vld [vmem:[%s4 + $0x68] sm:$0xff]
  %v92 = vld [vmem:[%s4 + $0x70] sm:$0xff]
  %v93 = vld [vmem:[%s4 + $0x78] sm:$0xff]
  %v94 = vld [vmem:[%s5] sm:$0x1]
  %v95 = vld [vmem:[%s6] sm:$0xff]
  %v96 = vld [vmem:[%s6 + $0x8] sm:$0xff]
  %v97 = vld [vmem:[%s6 + $0x10] sm:$0xff]
  %v98 = vld [vmem:[%s6 + $0x18] sm:$0xff]
  %v99 = vld [vmem:[%s6 + $0x20] sm:$0xff]
  %v100 = vld [vmem:[%s6 + $0x28] sm:$0xff]
  %v101 = vld [vmem:[%s6 + $0x30] sm:$0xff]
  %v102 = vld [vmem:[%s6 + $0x38] sm:$0xff]
  %v103 = vld [vmem:[%s6 + $0x40] sm:$0xff]
  %v104 = vld [vmem:[%s6 + $0x48] sm:$0xff]
  %v105 = vld [vmem:[%s6 + $0x50] sm:$0xff]
  %v106 = vld [vmem:[%s6 + $0x58] sm:$0xff]
  %v107 = vld [vmem:[%s6 + $0x60] sm:$0xff]
  %v108 = vld [vmem:[%s6 + $0x68] sm:$0xff]
  %v109 = vld [vmem:[%s6 + $0x70] sm:$0xff]
  %v110 = vld [vmem:[%s6 + $0x78] sm:$0xff]
  %v111 = vld [vmem:[%s7] sm:$0xff]
  %v112 = vld [vmem:[%s7 + $0x8] sm:$0xff]
  %v113 = vld [vmem:[%s7 + $0x10] sm:$0xff]
  %v114 = vld [vmem:[%s7 + $0x18] sm:$0xff]
  %v115 = vld [vmem:[%s7 + $0x20] sm:$0xff]
  %v116 = vld [vmem:[%s7 + $0x28] sm:$0xff]
  %v117 = vld [vmem:[%s7 + $0x30] sm:$0xff]
  %v118 = vld [vmem:[%s7 + $0x38] sm:$0xff]
  %v119 = vld [vmem:[%s7 + $0x40] sm:$0xff]
  %v120 = vld [vmem:[%s7 + $0x48] sm:$0xff]
  %v121 = vld [vmem:[%s7 + $0x50] sm:$0xff]
  %v122 = vld [vmem:[%s7 + $0x58] sm:$0xff]
  %v123 = vld [vmem:[%s7 + $0x60] sm:$0xff]
  %v124 = vld [vmem:[%s7 + $0x68] sm:$0xff]
  %v125 = vld [vmem:[%s7 + $0x70] sm:$0xff]
  %v126 = vld [vmem:[%s7 + $0x78] sm:$0xff]
  %v127 = vld [vmem:[%s8] sm:$0x1]
  %v128 = vld [vmem:[%s1] sm:$0xff]
  %v129 = vld [vmem:[%s1 + $0x8] sm:$0xff]
  %v130 = vld [vmem:[%s1 + $0x10] sm:$0xff]
  %v131 = vld [vmem:[%s1 + $0x18] sm:$0xff]
  %v132 = vld [vmem:[%s1 + $0x20] sm:$0xff]
  %v133 = vld [vmem:[%s1 + $0x28] sm:$0xff]
  %v134 = vld [vmem:[%s1 + $0x30] sm:$0xff]
  %v135 = vld [vmem:[%s1 + $0x38] sm:$0xff]
  %v136 = vld [vmem:[%s1 + $0x40] sm:$0xff]
  %v137 = vld [vmem:[%s1 + $0x48] sm:$0xff]
  %v138 = vld [vmem:[%s1 + $0x50] sm:$0xff]
  %v139 = vld [vmem:[%s1 + $0x58] sm:$0xff]
  %v140 = vld [vmem:[%s1 + $0x60] sm:$0xff]
  %v141 = vld [vmem:[%s1 + $0x68] sm:$0xff]
  %v142 = vld [vmem:[%s1 + $0x70] sm:$0xff]
  %v143 = vld [vmem:[%s1 + $0x78] sm:$0xff]
  %v145 = vlaneseq
  %v146 = vshrl.u32 %v145, 7
  %v147 = vsub.s32 0, %v146
  %v148 = vrot.slane %v94, %v147
  %150 = vmatprep.subr.mxu0 0.0
  %151 = vmatpush1.msra.mxu0 %v78
  %152 = vmatprep.subr.mxu0 0.0
  %153 = vmatpush1.msra.mxu0 %v79
  %154 = vmatprep.subr.mxu0 0.0
  %155 = vmatpush1.msra.mxu0 %v80
  %156 = vmatprep.subr.mxu0 0.0
  %157 = vmatpush1.msra.mxu0 %v81
  %158 = vmatprep.subr.mxu0 0.0
  %159 = vmatpush1.msra.mxu0 %v82
  %160 = vmatprep.subr.mxu0 0.0
  %161 = vmatpush1.msra.mxu0 %v83
  %162 = vmatprep.subr.mxu0 0.0
  %163 = vmatpush1.msra.mxu0 %v84
  %164 = vmatprep.subr.mxu0 0.0
  %165 = vmatpush1.msra.mxu0 %v85
  %166 = vmatprep.subr.mxu0 0.0
  %167 = vmatpush1.msra.mxu0 %v86
  %168 = vmatprep.subr.mxu0 0.0
  %169 = vmatpush1.msra.mxu0 %v87
  %170 = vmatprep.subr.mxu0 0.0
  %171 = vmatpush1.msra.mxu0 %v88
  %172 = vmatprep.subr.mxu0 0.0
  %173 = vmatpush1.msra.mxu0 %v89
  %174 = vmatprep.subr.mxu0 0.0
  %175 = vmatpush1.msra.mxu0 %v90
  %176 = vmatprep.subr.mxu0 0.0
  %177 = vmatpush1.msra.mxu0 %v91
  %178 = vmatprep.subr.mxu0 0.0
  %179 = vmatpush1.msra.mxu0 %v92
  %180 = vmatprep.subr.mxu0 0.0
  %181 = vmatpush1.msra.mxu0 %v93
  %182 = vmatprep.subr.mxu0 0.0
  %183 = vmatpush1.msra.mxu0 0.0
  %184 = vmatprep.subr.mxu0 0.0
  %185 = vmatpush1.msra.mxu0 0.0
  %186 = vmatprep.subr.mxu0 0.0
  %187 = vmatpush1.msra.mxu0 0.0
  %188 = vmatprep.subr.mxu0 0.0
  %189 = vmatpush1.msra.mxu0 0.0
  %190 = vmatprep.subr.mxu0 0.0
  %191 = vmatpush1.msra.mxu0 0.0
  %192 = vmatprep.subr.mxu0 0.0
  %193 = vmatpush1.msra.mxu0 0.0
  %194 = vmatprep.subr.mxu0 0.0
  %195 = vmatpush1.msra.mxu0 0.0
  %196 = vmatprep.subr.mxu0 0.0
  %197 = vmatpush1.msra.mxu0 0.0
  %198 = vmatprep.subr.mxu0 0.0
  %199 = vmatpush1.msra.mxu0 0.0
  %200 = vmatprep.subr.mxu0 0.0
  %201 = vmatpush1.msra.mxu0 0.0
  %202 = vmatprep.subr.mxu0 0.0
  %203 = vmatpush1.msra.mxu0 0.0
  %204 = vmatprep.subr.mxu0 0.0
  %205 = vmatpush1.msra.mxu0 0.0
  %206 = vmatprep.subr.mxu0 0.0
  %207 = vmatpush1.msra.mxu0 0.0
  %208 = vmatprep.subr.mxu0 0.0
  %209 = vmatpush1.msra.mxu0 0.0
  %210 = vmatprep.subr.mxu0 0.0
  %211 = vmatpush1.msra.mxu0 0.0
  %212 = vmatprep.subr.mxu0 0.0
  %213 = vmatpush1.msra.mxu0 0.0
  %214 = vmatprep.mubr.f32.mxu0 0.0
  %215 = vmatmul.mubr.f32.gmra.mrb[0].mxu0 %v62
  %v216 = vpop.f32.mrb[0].mxu0
  %v217 = vadd.f32 %v148, %v216
  %v218 = vpop.f32.mrb[0].mxu0
  %219 = vmatprep.mubr.f32.mxu0 0.0
  %220 = vmatmul.mubr.f32.gmra.mrb[0].mxu0 %v63
  %v221 = vpop.f32.mrb[0].mxu0
  %v222 = vadd.f32 %v148, %v221
  %v223 = vpop.f32.mrb[0].mxu0
  %224 = vmatprep.mubr.f32.mxu0 0.0
  %225 = vmatmul.mubr.f32.gmra.mrb[0].mxu0 %v64
  %v226 = vpop.f32.mrb[0].mxu0
  %v227 = vadd.f32 %v148, %v226
  %v228 = vpop.f32.mrb[0].mxu0
  %229 = vmatprep.mubr.f32.mxu0 0.0
  %230 = vmatmul.mubr.f32.gmra.mrb[0].mxu0 %v65
  %v231 = vpop.f32.mrb[0].mxu0
  %v232 = vadd.f32 %v148, %v231
  %v233 = vpop.f32.mrb[0].mxu0
  %234 = vmatprep.mubr.f32.mxu0 0.0
  %235 = vmatmul.mubr.f32.gmra.mrb[0].mxu0 %v66
  %v236 = vpop.f32.mrb[0].mxu0
  %v237 = vadd.f32 %v148, %v236
  %v238 = vpop.f32.mrb[0].mxu0
  %239 = vmatprep.mubr.f32.mxu0 0.0
  %240 = vmatmul.mubr.f32.gmra.mrb[0].mxu0 %v67
  %v241 = vpop.f32.mrb[0].mxu0
  %v242 = vadd.f32 %v148, %v241
  %v243 = vpop.f32.mrb[0].mxu0
  %244 = vmatprep.mubr.f32.mxu0 0.0
  %245 = vmatmul.mubr.f32.gmra.mrb[0].mxu0 %v68
  %v246 = vpop.f32.mrb[0].mxu0
  %v247 = vadd.f32 %v148, %v246
  %v248 = vpop.f32.mrb[0].mxu0
  %249 = vmatprep.mubr.f32.mxu0 0.0
  %250 = vmatmul.mubr.f32.gmra.mrb[0].mxu0 %v69
  %v251 = vpop.f32.mrb[0].mxu0
  %v252 = vadd.f32 %v148, %v251
  %v253 = vpop.f32.mrb[0].mxu0
  %254 = vmatprep.mubr.f32.mxu0 0.0
  %255 = vmatmul.mubr.f32.gmra.mrb[0].mxu0 %v70
  %v256 = vpop.f32.mrb[0].mxu0
  %v257 = vadd.f32 %v148, %v256
  %v258 = vpop.f32.mrb[0].mxu0
  %259 = vmatprep.mubr.f32.mxu0 0.0
  %260 = vmatmul.mubr.f32.gmra.mrb[0].mxu0 %v71
  %v261 = vpop.f32.mrb[0].mxu0
  %v262 = vadd.f32 %v148, %v261
  %v263 = vpop.f32.mrb[0].mxu0
  %264 = vmatprep.mubr.f32.mxu0 0.0
  %265 = vmatmul.mubr.f32.gmra.mrb[0].mxu0 %v72
  %v266 = vpop.f32.mrb[0].mxu0
  %v267 = vadd.f32 %v148, %v266
  %v268 = vpop.f32.mrb[0].mxu0
  %269 = vmatprep.mubr.f32.mxu0 0.0
  %270 = vmatmul.mubr.f32.gmra.mrb[0].mxu0 %v73
  %v271 = vpop.f32.mrb[0].mxu0
  %v272 = vadd.f32 %v148, %v271
  %v273 = vpop.f32.mrb[0].mxu0
  %274 = vmatprep.mubr.f32.mxu0 0.0
  %275 = vmatmul.mubr.f32.gmra.mrb[0].mxu0 %v74
  %v276 = vpop.f32.mrb[0].mxu0
  %v277 = vadd.f32 %v148, %v276
  %v278 = vpop.f32.mrb[0].mxu0
  %279 = vmatprep.mubr.f32.mxu0 0.0
  %280 = vmatmul.mubr.f32.gmra.mrb[0].mxu0 %v75
  %v281 = vpop.f32.mrb[0].mxu0
  %v282 = vadd.f32 %v148, %v281
  %v283 = vpop.f32.mrb[0].mxu0
  %284 = vmatprep.mubr.f32.mxu0 0.0
  %285 = vmatmul.mubr.f32.gmra.mrb[0].mxu0 %v76
  %v286 = vpop.f32.mrb[0].mxu0
  %v287 = vadd.f32 %v148, %v286
  %v288 = vpop.f32.mrb[0].mxu0
  %289 = vmatprep.mubr.f32.mxu0 0.0
  %290 = vmatmul.mubr.f32.gmra.mrb[0].mxu0 %v77
  %v291 = vpop.f32.mrb[0].mxu0
  %v292 = vadd.f32 %v148, %v291
  %v293 = vpop.f32.mrb[0].mxu0
  %294 = vdwg.mxu0
  %v295 = vmax.f32 %v217, 0.0
  %v296 = vmax.f32 %v222, 0.0
  %v297 = vmax.f32 %v227, 0.0
  %v298 = vmax.f32 %v232, 0.0
  %v299 = vmax.f32 %v237, 0.0
  %v300 = vmax.f32 %v242, 0.0
  %v301 = vmax.f32 %v247, 0.0
  %v302 = vmax.f32 %v252, 0.0
  %v303 = vmax.f32 %v257, 0.0
  %v304 = vmax.f32 %v262, 0.0
  %v305 = vmax.f32 %v267, 0.0
  %v306 = vmax.f32 %v272, 0.0
  %v307 = vmax.f32 %v277, 0.0
  %v308 = vmax.f32 %v282, 0.0
  %v309 = vmax.f32 %v287, 0.0
  %v310 = vmax.f32 %v292, 0.0
  %311 = vmatprep.subr.mxu0 0.0
  %312 = vmatpush1.msra.mxu0 %v295
  %313 = vmatprep.subr.mxu0 0.0
  %314 = vmatpush1.msra.mxu0 %v296
  %315 = vmatprep.subr.mxu0 0.0
  %316 = vmatpush1.msra.mxu0 %v297
  %317 = vmatprep.subr.mxu0 0.0
  %318 = vmatpush1.msra.mxu0 %v298
  %319 = vmatprep.subr.mxu0 0.0
  %320 = vmatpush1.msra.mxu0 %v299
  %321 = vmatprep.subr.mxu0 0.0
  %322 = vmatpush1.msra.mxu0 %v300
  %323 = vmatprep.subr.mxu0 0.0
  %324 = vmatpush1.msra.mxu0 %v301
  %325 = vmatprep.subr.mxu0 0.0
  %326 = vmatpush1.msra.mxu0 %v302
  %327 = vmatprep.subr.mxu0 0.0
  %328 = vmatpush1.msra.mxu0 %v303
  %329 = vmatprep.subr.mxu0 0.0
  %330 = vmatpush1.msra.mxu0 %v304
  %331 = vmatprep.subr.mxu0 0.0
  %332 = vmatpush1.msra.mxu0 %v305
  %333 = vmatprep.subr.mxu0 0.0
  %334 = vmatpush1.msra.mxu0 %v306
  %335 = vmatprep.subr.mxu0 0.0
  %336 = vmatpush1.msra.mxu0 %v307
  %337 = vmatprep.subr.mxu0 0.0
  %338 = vmatpush1.msra.mxu0 %v308
  %339 = vmatprep.subr.mxu0 0.0
  %340 = vmatpush1.msra.mxu0 %v309
  %341 = vmatprep.subr.mxu0 0.0
  %342 = vmatpush1.msra.mxu0 %v310
  %343 = vmatprep.subr.mxu0 0.0
  %344 = vmatpush1.msra.mxu0 0.0
  %345 = vmatprep.subr.mxu0 0.0
  %346 = vmatpush1.msra.mxu0 0.0
  %347 = vmatprep.subr.mxu0 0.0
  %348 = vmatpush1.msra.mxu0 0.0
  %349 = vmatprep.subr.mxu0 0.0
  %350 = vmatpush1.msra.mxu0 0.0
  %351 = vmatprep.subr.mxu0 0.0
  %352 = vmatpush1.msra.mxu0 0.0
  %353 = vmatprep.subr.mxu0 0.0
  %354 = vmatpush1.msra.mxu0 0.0
  %355 = vmatprep.subr.mxu0 0.0
  %356 = vmatpush1.msra.mxu0 0.0
  %357 = vmatprep.subr.mxu0 0.0
  %358 = vmatpush1.msra.mxu0 0.0
  %359 = vmatprep.subr.mxu0 0.0
  %360 = vmatpush1.msra.mxu0 0.0
  %361 = vmatprep.subr.mxu0 0.0
  %362 = vmatpush1.msra.mxu0 0.0
  %363 = vmatprep.subr.mxu0 0.0
  %364 = vmatpush1.msra.mxu0 0.0
  %365 = vmatprep.subr.mxu0 0.0
  %366 = vmatpush1.msra.mxu0 0.0
  %367 = vmatprep.subr.mxu0 0.0
  %368 = vmatpush1.msra.mxu0 0.0
  %369 = vmatprep.subr.mxu0 0.0
  %370 = vmatpush1.msra.mxu0 0.0
  %371 = vmatprep.subr.mxu0 0.0
  %372 = vmatpush1.msra.mxu0 0.0
  %373 = vmatprep.subr.mxu0 0.0
  %374 = vmatpush1.msra.mxu0 0.0
  %375 = vmatprep.mubr.f32.mxu0 0.0
  %376 = vmatmul.mubr.f32.gmra.mrb[0].mxu0 %v128
  %v377 = vpop.f32.mrb[0].mxu0
  %v378 = vadd.f32 0.0, %v377
  %v379 = vpop.f32.mrb[0].mxu0
  %380 = vmatprep.mubr.f32.mxu0 0.0
  %381 = vmatmul.mubr.f32.gmra.mrb[0].mxu0 %v129
  %v382 = vpop.f32.mrb[0].mxu0
  %v383 = vadd.f32 0.0, %v382
  %v384 = vpop.f32.mrb[0].mxu0
  %385 = vmatprep.mubr.f32.mxu0 0.0
  %386 = vmatmul.mubr.f32.gmra.mrb[0].mxu0 %v130
  %v387 = vpop.f32.mrb[0].mxu0
  %v388 = vadd.f32 0.0, %v387
  %v389 = vpop.f32.mrb[0].mxu0
  %390 = vmatprep.mubr.f32.mxu0 0.0
  %391 = vmatmul.mubr.f32.gmra.mrb[0].mxu0 %v131
  %v392 = vpop.f32.mrb[0].mxu0
  %v393 = vadd.f32 0.0, %v392
  %v394 = vpop.f32.mrb[0].mxu0
  %395 = vmatprep.mubr.f32.mxu0 0.0
  %396 = vmatmul.mubr.f32.gmra.mrb[0].mxu0 %v132
  %v397 = vpop.f32.mrb[0].mxu0
  %v398 = vadd.f32 0.0, %v397
  %v399 = vpop.f32.mrb[0].mxu0
  %400 = vmatprep.mubr.f32.mxu0 0.0
  %401 = vmatmul.mubr.f32.gmra.mrb[0].mxu0 %v133
  %v402 = vpop.f32.mrb[0].mxu0
  %v403 = vadd.f32 0.0, %v402
  %v404 = vpop.f32.mrb[0].mxu0
  %405 = vmatprep.mubr.f32.mxu0 0.0
  %406 = vmatmul.mubr.f32.gmra.mrb[0].mxu0 %v134
  %v407 = vpop.f32.mrb[0].mxu0
  %v408 = vadd.f32 0.0, %v407
  %v409 = vpop.f32.mrb[0].mxu0
  %410 = vmatprep.mubr.f32.mxu0 0.0
  %411 = vmatmul.mubr.f32.gmra.mrb[0].mxu0 %v135
  %v412 = vpop.f32.mrb[0].mxu0
  %v413 = vadd.f32 0.0, %v412
  %v414 = vpop.f32.mrb[0].mxu0
  %415 = vmatprep.mubr.f32.mxu0 0.0
  %416 = vmatmul.mubr.f32.gmra.mrb[0].mxu0 %v136
  %v417 = vpop.f32.mrb[0].mxu0
  %v418 = vadd.f32 0.0, %v417
  %v419 = vpop.f32.mrb[0].mxu0
  %420 = vmatprep.mubr.f32.mxu0 0.0
  %421 = vmatmul.mubr.f32.gmra.mrb[0].mxu0 %v137
  %v422 = vpop.f32.mrb[0].mxu0
  %v423 = vadd.f32 0.0, %v422
  %v424 = vpop.f32.mrb[0].mxu0
  %425 = vmatprep.mubr.f32.mxu0 0.0
  %426 = vmatmul.mubr.f32.gmra.mrb[0].mxu0 %v138
  %v427 = vpop.f32.mrb[0].mxu0
  %v428 = vadd.f32 0.0, %v427
  %v429 = vpop.f32.mrb[0].mxu0
  %430 = vmatprep.mubr.f32.mxu0 0.0
  %431 = vmatmul.mubr.f32.gmra.mrb[0].mxu0 %v139
  %v432 = vpop.f32.mrb[0].mxu0
  %v433 = vadd.f32 0.0, %v432
  %v434 = vpop.f32.mrb[0].mxu0
  %435 = vmatprep.mubr.f32.mxu0 0.0
  %436 = vmatmul.mubr.f32.gmra.mrb[0].mxu0 %v140
  %v437 = vpop.f32.mrb[0].mxu0
  %v438 = vadd.f32 0.0, %v437
  %v439 = vpop.f32.mrb[0].mxu0
  %440 = vmatprep.mubr.f32.mxu0 0.0
  %441 = vmatmul.mubr.f32.gmra.mrb[0].mxu0 %v141
  %v442 = vpop.f32.mrb[0].mxu0
  %v443 = vadd.f32 0.0, %v442
  %v444 = vpop.f32.mrb[0].mxu0
  %445 = vmatprep.mubr.f32.mxu0 0.0
  %446 = vmatmul.mubr.f32.gmra.mrb[0].mxu0 %v142
  %v447 = vpop.f32.mrb[0].mxu0
  %v448 = vadd.f32 0.0, %v447
  %v449 = vpop.f32.mrb[0].mxu0
  %450 = vmatprep.mubr.f32.mxu0 0.0
  %451 = vmatmul.mubr.f32.gmra.mrb[0].mxu0 %v143
  %v452 = vpop.f32.mrb[0].mxu0
  %v453 = vadd.f32 0.0, %v452
  %v454 = vpop.f32.mrb[0].mxu0
  %455 = vdwg.mxu0
  %v456 = vmax.f32 %v378, 1.0
  %v457 = vmax.f32 %v383, 1.0
  %v458 = vmax.f32 %v388, 1.0
  %v459 = vmax.f32 %v393, 1.0
  %v460 = vmax.f32 %v398, 1.0
  %v461 = vmax.f32 %v403, 1.0
  %v462 = vmax.f32 %v408, 1.0
  %v463 = vmax.f32 %v413, 1.0
  %v464 = vmax.f32 %v418, 1.0
  %v465 = vmax.f32 %v423, 1.0
  %v466 = vmax.f32 %v428, 1.0
  %v467 = vmax.f32 %v433, 1.0
  %v468 = vmax.f32 %v438, 1.0
  %v469 = vmax.f32 %v443, 1.0
  %v470 = vmax.f32 %v448, 1.0
  %v471 = vmax.f32 %v453, 1.0
  %v472 = vrcp.pop %v456
  %v473 = vrcp.pop %v457
  %v474 = vrcp.pop %v458
  %v475 = vrcp.pop %v459
  %v476 = vrcp.pop %v460
  %v477 = vrcp.pop %v461
  %v478 = vrcp.pop %v462
  %v479 = vrcp.pop %v463
  %v480 = vrcp.pop %v464
  %v481 = vrcp.pop %v465
  %v482 = vrcp.pop %v466
  %v483 = vrcp.pop %v467
  %v484 = vrcp.pop %v468
  %v485 = vrcp.pop %v469
  %v486 = vrcp.pop %v470
  %v487 = vrcp.pop %v471
  %489 = vset.pattern.permute.xlu0 127
  %490 = vperm.xlu0 %489, %v472
  %v491 = vpop.permute.xlu0 %490
  %494 = vset.pattern.permute.xlu0 127
  %495 = vperm.xlu0 %494, %v473
  %v496 = vpop.permute.xlu0 %495
  %499 = vset.pattern.permute.xlu0 127
  %500 = vperm.xlu0 %499, %v474
  %v501 = vpop.permute.xlu0 %500
  %504 = vset.pattern.permute.xlu0 127
  %505 = vperm.xlu0 %504, %v475
  %v506 = vpop.permute.xlu0 %505
  %509 = vset.pattern.permute.xlu0 127
  %510 = vperm.xlu0 %509, %v476
  %v511 = vpop.permute.xlu0 %510
  %514 = vset.pattern.permute.xlu0 127
  %515 = vperm.xlu0 %514, %v477
  %v516 = vpop.permute.xlu0 %515
  %519 = vset.pattern.permute.xlu0 127
  %520 = vperm.xlu0 %519, %v478
  %v521 = vpop.permute.xlu0 %520
  %524 = vset.pattern.permute.xlu0 127
  %525 = vperm.xlu0 %524, %v479
  %v526 = vpop.permute.xlu0 %525
  %529 = vset.pattern.permute.xlu0 127
  %530 = vperm.xlu0 %529, %v480
  %v531 = vpop.permute.xlu0 %530
  %534 = vset.pattern.permute.xlu0 127
  %535 = vperm.xlu0 %534, %v481
  %v536 = vpop.permute.xlu0 %535
  %539 = vset.pattern.permute.xlu0 127
  %540 = vperm.xlu0 %539, %v482
  %v541 = vpop.permute.xlu0 %540
  %544 = vset.pattern.permute.xlu0 127
  %545 = vperm.xlu0 %544, %v483
  %v546 = vpop.permute.xlu0 %545
  %549 = vset.pattern.permute.xlu0 127
  %550 = vperm.xlu0 %549, %v484
  %v551 = vpop.permute.xlu0 %550
  %554 = vset.pattern.permute.xlu0 127
  %555 = vperm.xlu0 %554, %v485
  %v556 = vpop.permute.xlu0 %555
  %559 = vset.pattern.permute.xlu0 127
  %560 = vperm.xlu0 %559, %v486
  %v561 = vpop.permute.xlu0 %560
  %564 = vset.pattern.permute.xlu0 127
  %565 = vperm.xlu0 %564, %v487
  %v566 = vpop.permute.xlu0 %565
  %v568 = vmul.f32 %v378, %v491
  %v569 = vmul.f32 %v383, %v496
  %v570 = vmul.f32 %v388, %v501
  %v571 = vmul.f32 %v393, %v506
  %v572 = vmul.f32 %v398, %v511
  %v573 = vmul.f32 %v403, %v516
  %v574 = vmul.f32 %v408, %v521
  %v575 = vmul.f32 %v413, %v526
  %v576 = vmul.f32 %v418, %v531
  %v577 = vmul.f32 %v423, %v536
  %v578 = vmul.f32 %v428, %v541
  %v579 = vmul.f32 %v433, %v546
  %v580 = vmul.f32 %v438, %v551
  %v581 = vmul.f32 %v443, %v556
  %v582 = vmul.f32 %v448, %v561
  %v583 = vmul.f32 %v453, %v566
  %584 = vmatprep.subr.mxu0 0.0
  %585 = vmatpush1.msra.mxu0 %v111
  %586 = vmatprep.subr.mxu0 0.0
  %587 = vmatpush1.msra.mxu0 %v112
  %588 = vmatprep.subr.mxu0 0.0
  %589 = vmatpush1.msra.mxu0 %v113
  %590 = vmatprep.subr.mxu0 0.0
  %591 = vmatpush1.msra.mxu0 %v114
  %592 = vmatprep.subr.mxu0 0.0
  %593 = vmatpush1.msra.mxu0 %v115
  %594 = vmatprep.subr.mxu0 0.0
  %595 = vmatpush1.msra.mxu0 %v116
  %596 = vmatprep.subr.mxu0 0.0
  %597 = vmatpush1.msra.mxu0 %v117
  %598 = vmatprep.subr.mxu0 0.0
  %599 = vmatpush1.msra.mxu0 %v118
  %600 = vmatprep.subr.mxu0 0.0
  %601 = vmatpush1.msra.mxu0 %v119
  %602 = vmatprep.subr.mxu0 0.0
  %603 = vmatpush1.msra.mxu0 %v120
  %604 = vmatprep.subr.mxu0 0.0
  %605 = vmatpush1.msra.mxu0 %v121
  %606 = vmatprep.subr.mxu0 0.0
  %607 = vmatpush1.msra.mxu0 %v122
  %608 = vmatprep.subr.mxu0 0.0
  %609 = vmatpush1.msra.mxu0 %v123
  %610 = vmatprep.subr.mxu0 0.0
  %611 = vmatpush1.msra.mxu0 %v124
  %612 = vmatprep.subr.mxu0 0.0
  %613 = vmatpush1.msra.mxu0 %v125
  %614 = vmatprep.subr.mxu0 0.0
  %615 = vmatpush1.msra.mxu0 %v126
  %616 = vmatprep.subr.mxu0 0.0
  %617 = vmatpush1.msra.mxu0 0.0
  %618 = vmatprep.subr.mxu0 0.0
  %619 = vmatpush1.msra.mxu0 0.0
  %620 = vmatprep.subr.mxu0 0.0
  %621 = vmatpush1.msra.mxu0 0.0
  %622 = vmatprep.subr.mxu0 0.0
  %623 = vmatpush1.msra.mxu0 0.0
  %624 = vmatprep.subr.mxu0 0.0
  %625 = vmatpush1.msra.mxu0 0.0
  %626 = vmatprep.subr.mxu0 0.0
  %627 = vmatpush1.msra.mxu0 0.0
  %628 = vmatprep.subr.mxu0 0.0
  %629 = vmatpush1.msra.mxu0 0.0
  %630 = vmatprep.subr.mxu0 0.0
  %631 = vmatpush1.msra.mxu0 0.0
  %632 = vmatprep.subr.mxu0 0.0
  %633 = vmatpush1.msra.mxu0 0.0
  %634 = vmatprep.subr.mxu0 0.0
  %635 = vmatpush1.msra.mxu0 0.0
  %636 = vmatprep.subr.mxu0 0.0
  %637 = vmatpush1.msra.mxu0 0.0
  %638 = vmatprep.subr.mxu0 0.0
  %639 = vmatpush1.msra.mxu0 0.0
  %640 = vmatprep.subr.mxu0 0.0
  %641 = vmatpush1.msra.mxu0 0.0
  %642 = vmatprep.subr.mxu0 0.0
  %643 = vmatpush1.msra.mxu0 0.0
  %644 = vmatprep.subr.mxu0 0.0
  %645 = vmatpush1.msra.mxu0 0.0
  %646 = vmatprep.subr.mxu0 0.0
  %647 = vmatpush1.msra.mxu0 0.0
  %648 = vmatprep.mubr.f32.mxu0 0.0
  %649 = vmatmul.mubr.f32.gmra.mrb[0].mxu0 %v62
  %v650 = vpop.f32.mrb[0].mxu0
  %v651 = vadd.f32 0.0, %v650
  %v652 = vpop.f32.mrb[0].mxu0
  %653 = vmatprep.mubr.f32.mxu0 0.0
  %654 = vmatmul.mubr.f32.gmra.mrb[0].mxu0 %v63
  %v655 = vpop.f32.mrb[0].mxu0
  %v656 = vadd.f32 0.0, %v655
  %v657 = vpop.f32.mrb[0].mxu0
  %658 = vmatprep.mubr.f32.mxu0 0.0
  %659 = vmatmul.mubr.f32.gmra.mrb[0].mxu0 %v64
  %v660 = vpop.f32.mrb[0].mxu0
  %v661 = vadd.f32 0.0, %v660
  %v662 = vpop.f32.mrb[0].mxu0
  %663 = vmatprep.mubr.f32.mxu0 0.0
  %664 = vmatmul.mubr.f32.gmra.mrb[0].mxu0 %v65
  %v665 = vpop.f32.mrb[0].mxu0
  %v666 = vadd.f32 0.0, %v665
  %v667 = vpop.f32.mrb[0].mxu0
  %668 = vmatprep.mubr.f32.mxu0 0.0
  %669 = vmatmul.mubr.f32.gmra.mrb[0].mxu0 %v66
  %v670 = vpop.f32.mrb[0].mxu0
  %v671 = vadd.f32 0.0, %v670
  %v672 = vpop.f32.mrb[0].mxu0
  %673 = vmatprep.mubr.f32.mxu0 0.0
  %674 = vmatmul.mubr.f32.gmra.mrb[0].mxu0 %v67
  %v675 = vpop.f32.mrb[0].mxu0
  %v676 = vadd.f32 0.0, %v675
  %v677 = vpop.f32.mrb[0].mxu0
  %678 = vmatprep.mubr.f32.mxu0 0.0
  %679 = vmatmul.mubr.f32.gmra.mrb[0].mxu0 %v68
  %v680 = vpop.f32.mrb[0].mxu0
  %v681 = vadd.f32 0.0, %v680
  %v682 = vpop.f32.mrb[0].mxu0
  %683 = vmatprep.mubr.f32.mxu0 0.0
  %684 = vmatmul.mubr.f32.gmra.mrb[0].mxu0 %v69
  %v685 = vpop.f32.mrb[0].mxu0
  %v686 = vadd.f32 0.0, %v685
  %v687 = vpop.f32.mrb[0].mxu0
  %688 = vmatprep.mubr.f32.mxu0 0.0
  %689 = vmatmul.mubr.f32.gmra.mrb[0].mxu0 %v70
  %v690 = vpop.f32.mrb[0].mxu0
  %v691 = vadd.f32 0.0, %v690
  %v692 = vpop.f32.mrb[0].mxu0
  %693 = vmatprep.mubr.f32.mxu0 0.0
  %694 = vmatmul.mubr.f32.gmra.mrb[0].mxu0 %v71
  %v695 = vpop.f32.mrb[0].mxu0
  %v696 = vadd.f32 0.0, %v695
  %v697 = vpop.f32.mrb[0].mxu0
  %698 = vmatprep.mubr.f32.mxu0 0.0
  %699 = vmatmul.mubr.f32.gmra.mrb[0].mxu0 %v72
  %v700 = vpop.f32.mrb[0].mxu0
  %v701 = vadd.f32 0.0, %v700
  %v702 = vpop.f32.mrb[0].mxu0
  %703 = vmatprep.mubr.f32.mxu0 0.0
  %704 = vmatmul.mubr.f32.gmra.mrb[0].mxu0 %v73
  %v705 = vpop.f32.mrb[0].mxu0
  %v706 = vadd.f32 0.0, %v705
  %v707 = vpop.f32.mrb[0].mxu0
  %708 = vmatprep.mubr.f32.mxu0 0.0
  %709 = vmatmul.mubr.f32.gmra.mrb[0].mxu0 %v74
  %v710 = vpop.f32.mrb[0].mxu0
  %v711 = vadd.f32 0.0, %v710
  %v712 = vpop.f32.mrb[0].mxu0
  %713 = vmatprep.mubr.f32.mxu0 0.0
  %714 = vmatmul.mubr.f32.gmra.mrb[0].mxu0 %v75
  %v715 = vpop.f32.mrb[0].mxu0
  %v716 = vadd.f32 0.0, %v715
  %v717 = vpop.f32.mrb[0].mxu0
  %718 = vmatprep.mubr.f32.mxu0 0.0
  %719 = vmatmul.mubr.f32.gmra.mrb[0].mxu0 %v76
  %v720 = vpop.f32.mrb[0].mxu0
  %v721 = vadd.f32 0.0, %v720
  %v722 = vpop.f32.mrb[0].mxu0
  %723 = vmatprep.mubr.f32.mxu0 0.0
  %724 = vmatmul.mubr.f32.gmra.mrb[0].mxu0 %v77
  %v725 = vpop.f32.mrb[0].mxu0
  %v726 = vadd.f32 0.0, %v725
  %v727 = vpop.f32.mrb[0].mxu0
  %728 = vdwg.mxu0
  %729 = vmatprep.subr.mxu0 0.0
  %730 = vmatpush1.msra.mxu0 %v95
  %731 = vmatprep.subr.mxu0 0.0
  %732 = vmatpush1.msra.mxu0 %v96
  %733 = vmatprep.subr.mxu0 0.0
  %734 = vmatpush1.msra.mxu0 %v97
  %735 = vmatprep.subr.mxu0 0.0
  %736 = vmatpush1.msra.mxu0 %v98
  %737 = vmatprep.subr.mxu0 0.0
  %738 = vmatpush1.msra.mxu0 %v99
  %739 = vmatprep.subr.mxu0 0.0
  %740 = vmatpush1.msra.mxu0 %v100
  %741 = vmatprep.subr.mxu0 0.0
  %742 = vmatpush1.msra.mxu0 %v101
  %743 = vmatprep.subr.mxu0 0.0
  %744 = vmatpush1.msra.mxu0 %v102
  %745 = vmatprep.subr.mxu0 0.0
  %746 = vmatpush1.msra.mxu0 %v103
  %747 = vmatprep.subr.mxu0 0.0
  %748 = vmatpush1.msra.mxu0 %v104
  %749 = vmatprep.subr.mxu0 0.0
  %750 = vmatpush1.msra.mxu0 %v105
  %751 = vmatprep.subr.mxu0 0.0
  %752 = vmatpush1.msra.mxu0 %v106
  %753 = vmatprep.subr.mxu0 0.0
  %754 = vmatpush1.msra.mxu0 %v107
  %755 = vmatprep.subr.mxu0 0.0
  %756 = vmatpush1.msra.mxu0 %v108
  %757 = vmatprep.subr.mxu0 0.0
  %758 = vmatpush1.msra.mxu0 %v109
  %759 = vmatprep.subr.mxu0 0.0
  %760 = vmatpush1.msra.mxu0 %v110
  %761 = vmatprep.subr.mxu0 0.0
  %762 = vmatpush1.msra.mxu0 0.0
  %763 = vmatprep.subr.mxu0 0.0
  %764 = vmatpush1.msra.mxu0 0.0
  %765 = vmatprep.subr.mxu0 0.0
  %766 = vmatpush1.msra.mxu0 0.0
  %767 = vmatprep.subr.mxu0 0.0
  %768 = vmatpush1.msra.mxu0 0.0
  %769 = vmatprep.subr.mxu0 0.0
  %770 = vmatpush1.msra.mxu0 0.0
  %771 = vmatprep.subr.mxu0 0.0
  %772 = vmatpush1.msra.mxu0 0.0
  %773 = vmatprep.subr.mxu0 0.0
  %774 = vmatpush1.msra.mxu0 0.0
  %775 = vmatprep.subr.mxu0 0.0
  %776 = vmatpush1.msra.mxu0 0.0
  %777 = vmatprep.subr.mxu0 0.0
  %778 = vmatpush1.msra.mxu0 0.0
  %779 = vmatprep.subr.mxu0 0.0
  %780 = vmatpush1.msra.mxu0 0.0
  %781 = vmatprep.subr.mxu0 0.0
  %782 = vmatpush1.msra.mxu0 0.0
  %783 = vmatprep.subr.mxu0 0.0
  %784 = vmatpush1.msra.mxu0 0.0
  %785 = vmatprep.subr.mxu0 0.0
  %786 = vmatpush1.msra.mxu0 0.0
  %787 = vmatprep.subr.mxu0 0.0
  %788 = vmatpush1.msra.mxu0 0.0
  %789 = vmatprep.subr.mxu0 0.0
  %790 = vmatpush1.msra.mxu0 0.0
  %791 = vmatprep.subr.mxu0 0.0
  %792 = vmatpush1.msra.mxu0 0.0
  %793 = vmatprep.mubr.f32.mxu0 0.0
  %794 = vmatmul.mubr.f32.gmra.mrb[0].mxu0 %v568
  %v795 = vpop.f32.mrb[0].mxu0
  %v796 = vadd.f32 %v651, %v795
  %v797 = vpop.f32.mrb[0].mxu0
  %798 = vmatprep.mubr.f32.mxu0 0.0
  %799 = vmatmul.mubr.f32.gmra.mrb[0].mxu0 %v569
  %v800 = vpop.f32.mrb[0].mxu0
  %v801 = vadd.f32 %v656, %v800
  %v802 = vpop.f32.mrb[0].mxu0
  %803 = vmatprep.mubr.f32.mxu0 0.0
  %804 = vmatmul.mubr.f32.gmra.mrb[0].mxu0 %v570
  %v805 = vpop.f32.mrb[0].mxu0
  %v806 = vadd.f32 %v661, %v805
  %v807 = vpop.f32.mrb[0].mxu0
  %808 = vmatprep.mubr.f32.mxu0 0.0
  %809 = vmatmul.mubr.f32.gmra.mrb[0].mxu0 %v571
  %v810 = vpop.f32.mrb[0].mxu0
  %v811 = vadd.f32 %v666, %v810
  %v812 = vpop.f32.mrb[0].mxu0
  %813 = vmatprep.mubr.f32.mxu0 0.0
  %814 = vmatmul.mubr.f32.gmra.mrb[0].mxu0 %v572
  %v815 = vpop.f32.mrb[0].mxu0
  %v816 = vadd.f32 %v671, %v815
  %v817 = vpop.f32.mrb[0].mxu0
  %818 = vmatprep.mubr.f32.mxu0 0.0
  %819 = vmatmul.mubr.f32.gmra.mrb[0].mxu0 %v573
  %v820 = vpop.f32.mrb[0].mxu0
  %v821 = vadd.f32 %v676, %v820
  %v822 = vpop.f32.mrb[0].mxu0
  %823 = vmatprep.mubr.f32.mxu0 0.0
  %824 = vmatmul.mubr.f32.gmra.mrb[0].mxu0 %v574
  %v825 = vpop.f32.mrb[0].mxu0
  %v826 = vadd.f32 %v681, %v825
  %v827 = vpop.f32.mrb[0].mxu0
  %828 = vmatprep.mubr.f32.mxu0 0.0
  %829 = vmatmul.mubr.f32.gmra.mrb[0].mxu0 %v575
  %v830 = vpop.f32.mrb[0].mxu0
  %v831 = vadd.f32 %v686, %v830
  %v832 = vpop.f32.mrb[0].mxu0
  %833 = vmatprep.mubr.f32.mxu0 0.0
  %834 = vmatmul.mubr.f32.gmra.mrb[0].mxu0 %v576
  %v835 = vpop.f32.mrb[0].mxu0
  %v836 = vadd.f32 %v691, %v835
  %v837 = vpop.f32.mrb[0].mxu0
  %838 = vmatprep.mubr.f32.mxu0 0.0
  %839 = vmatmul.mubr.f32.gmra.mrb[0].mxu0 %v577
  %v840 = vpop.f32.mrb[0].mxu0
  %v841 = vadd.f32 %v696, %v840
  %v842 = vpop.f32.mrb[0].mxu0
  %843 = vmatprep.mubr.f32.mxu0 0.0
  %844 = vmatmul.mubr.f32.gmra.mrb[0].mxu0 %v578
  %v845 = vpop.f32.mrb[0].mxu0
  %v846 = vadd.f32 %v701, %v845
  %v847 = vpop.f32.mrb[0].mxu0
  %848 = vmatprep.mubr.f32.mxu0 0.0
  %849 = vmatmul.mubr.f32.gmra.mrb[0].mxu0 %v579
  %v850 = vpop.f32.mrb[0].mxu0
  %v851 = vadd.f32 %v706, %v850
  %v852 = vpop.f32.mrb[0].mxu0
  %853 = vmatprep.mubr.f32.mxu0 0.0
  %854 = vmatmul.mubr.f32.gmra.mrb[0].mxu0 %v580
  %v855 = vpop.f32.mrb[0].mxu0
  %v856 = vadd.f32 %v711, %v855
  %v857 = vpop.f32.mrb[0].mxu0
  %858 = vmatprep.mubr.f32.mxu0 0.0
  %859 = vmatmul.mubr.f32.gmra.mrb[0].mxu0 %v581
  %v860 = vpop.f32.mrb[0].mxu0
  %v861 = vadd.f32 %v716, %v860
  %v862 = vpop.f32.mrb[0].mxu0
  %863 = vmatprep.mubr.f32.mxu0 0.0
  %864 = vmatmul.mubr.f32.gmra.mrb[0].mxu0 %v582
  %v865 = vpop.f32.mrb[0].mxu0
  %v866 = vadd.f32 %v721, %v865
  %v867 = vpop.f32.mrb[0].mxu0
  %868 = vmatprep.mubr.f32.mxu0 0.0
  %869 = vmatmul.mubr.f32.gmra.mrb[0].mxu0 %v583
  %v870 = vpop.f32.mrb[0].mxu0
  %v871 = vadd.f32 %v726, %v870
  %v872 = vpop.f32.mrb[0].mxu0
  %873 = vdwg.mxu0
  %v875 = vlaneseq
  %v876 = vshrl.u32 %v875, 7
  %v877 = vsub.s32 0, %v876
  %v878 = vrot.slane %v127, %v877
  %v880 = vadd.f32 %v796, %v878
  %v881 = vadd.f32 %v801, %v878
  %v882 = vadd.f32 %v806, %v878
  %v883 = vadd.f32 %v811, %v878
  %v884 = vadd.f32 %v816, %v878
  %v885 = vadd.f32 %v821, %v878
  %v886 = vadd.f32 %v826, %v878
  %v887 = vadd.f32 %v831, %v878
  %v888 = vadd.f32 %v836, %v878
  %v889 = vadd.f32 %v841, %v878
  %v890 = vadd.f32 %v846, %v878
  %v891 = vadd.f32 %v851, %v878
  %v892 = vadd.f32 %v856, %v878
  %v893 = vadd.f32 %v861, %v878
  %v894 = vadd.f32 %v866, %v878
  %v895 = vadd.f32 %v871, %v878
  %v896 = vmax.f32 %v880, 0.0
  %v897 = vmax.f32 %v881, 0.0
  %v898 = vmax.f32 %v882, 0.0
  %v899 = vmax.f32 %v883, 0.0
  %v900 = vmax.f32 %v884, 0.0
  %v901 = vmax.f32 %v885, 0.0
  %v902 = vmax.f32 %v886, 0.0
  %v903 = vmax.f32 %v887, 0.0
  %v904 = vmax.f32 %v888, 0.0
  %v905 = vmax.f32 %v889, 0.0
  %v906 = vmax.f32 %v890, 0.0
  %v907 = vmax.f32 %v891, 0.0
  %v908 = vmax.f32 %v892, 0.0
  %v909 = vmax.f32 %v893, 0.0
  %v910 = vmax.f32 %v894, 0.0
  %v911 = vmax.f32 %v895, 0.0
  %v912 = vmul.f32 %v896, %v896
  %v913 = vmul.f32 %v897, %v897
  %v914 = vmul.f32 %v898, %v898
  %v915 = vmul.f32 %v899, %v899
  %v916 = vmul.f32 %v900, %v900
  %v917 = vmul.f32 %v901, %v901
  %v918 = vmul.f32 %v902, %v902
  %v919 = vmul.f32 %v903, %v903
  %v920 = vmul.f32 %v904, %v904
  %v921 = vmul.f32 %v905, %v905
  %v922 = vmul.f32 %v906, %v906
  %v923 = vmul.f32 %v907, %v907
  %v924 = vmul.f32 %v908, %v908
  %v925 = vmul.f32 %v909, %v909
  %v926 = vmul.f32 %v910, %v910
  %v927 = vmul.f32 %v911, %v911
  %928 = vadd.xlane.f32.xlu0 %v912
  %v929 = vpop.xlane.xlu0 %928
  %930 = vadd.xlane.f32.xlu0 %v913
  %v931 = vpop.xlane.xlu0 %930
  %932 = vadd.xlane.f32.xlu0 %v914
  %v933 = vpop.xlane.xlu0 %932
  %934 = vadd.xlane.f32.xlu0 %v915
  %v935 = vpop.xlane.xlu0 %934
  %936 = vadd.xlane.f32.xlu0 %v916
  %v937 = vpop.xlane.xlu0 %936
  %938 = vadd.xlane.f32.xlu0 %v917
  %v939 = vpop.xlane.xlu0 %938
  %940 = vadd.xlane.f32.xlu0 %v918
  %v941 = vpop.xlane.xlu0 %940
  %942 = vadd.xlane.f32.xlu0 %v919
  %v943 = vpop.xlane.xlu0 %942
  %944 = vadd.xlane.f32.xlu0 %v920
  %v945 = vpop.xlane.xlu0 %944
  %946 = vadd.xlane.f32.xlu0 %v921
  %v947 = vpop.xlane.xlu0 %946
  %948 = vadd.xlane.f32.xlu0 %v922
  %v949 = vpop.xlane.xlu0 %948
  %950 = vadd.xlane.f32.xlu0 %v923
  %v951 = vpop.xlane.xlu0 %950
  %952 = vadd.xlane.f32.xlu0 %v924
  %v953 = vpop.xlane.xlu0 %952
  %954 = vadd.xlane.f32.xlu0 %v925
  %v955 = vpop.xlane.xlu0 %954
  %956 = vadd.xlane.f32.xlu0 %v926
  %v957 = vpop.xlane.xlu0 %956
  %958 = vadd.xlane.f32.xlu0 %v927
  %v959 = vpop.xlane.xlu0 %958
  %vm960 = vcmp.gt.f32.partialorder %v929, 0.0
  %vm961 = vcmp.gt.f32.partialorder %v931, 0.0
  %vm962 = vcmp.gt.f32.partialorder %v933, 0.0
  %vm963 = vcmp.gt.f32.partialorder %v935, 0.0
  %vm964 = vcmp.gt.f32.partialorder %v937, 0.0
  %vm965 = vcmp.gt.f32.partialorder %v939, 0.0
  %vm966 = vcmp.gt.f32.partialorder %v941, 0.0
  %vm967 = vcmp.gt.f32.partialorder %v943, 0.0
  %vm968 = vcmp.gt.f32.partialorder %v945, 0.0
  %vm969 = vcmp.gt.f32.partialorder %v947, 0.0
  %vm970 = vcmp.gt.f32.partialorder %v949, 0.0
  %vm971 = vcmp.gt.f32.partialorder %v951, 0.0
  %vm972 = vcmp.gt.f32.partialorder %v953, 0.0
  %vm973 = vcmp.gt.f32.partialorder %v955, 0.0
  %vm974 = vcmp.gt.f32.partialorder %v957, 0.0
  %vm975 = vcmp.gt.f32.partialorder %v959, 0.0
  %v976 = vrsqrt.pop %v929
  %v977 = vrsqrt.pop %v931
  %v978 = vrsqrt.pop %v933
  %v979 = vrsqrt.pop %v935
  %v980 = vrsqrt.pop %v937
  %v981 = vrsqrt.pop %v939
  %v982 = vrsqrt.pop %v941
  %v983 = vrsqrt.pop %v943
  %v984 = vrsqrt.pop %v945
  %v985 = vrsqrt.pop %v947
  %v986 = vrsqrt.pop %v949
  %v987 = vrsqrt.pop %v951
  %v988 = vrsqrt.pop %v953
  %v989 = vrsqrt.pop %v955
  %v990 = vrsqrt.pop %v957
  %v991 = vrsqrt.pop %v959
  %v992 = vsel %vm960, %v976, 1.0
  %v993 = vsel %vm961, %v977, 1.0
  %v994 = vsel %vm962, %v978, 1.0
  %v995 = vsel %vm963, %v979, 1.0
  %v996 = vsel %vm964, %v980, 1.0
  %v997 = vsel %vm965, %v981, 1.0
  %v998 = vsel %vm966, %v982, 1.0
  %v999 = vsel %vm967, %v983, 1.0
  %v1000 = vsel %vm968, %v984, 1.0
  %v1001 = vsel %vm969, %v985, 1.0
  %v1002 = vsel %vm970, %v986, 1.0
  %v1003 = vsel %vm971, %v987, 1.0
  %v1004 = vsel %vm972, %v988, 1.0
  %v1005 = vsel %vm973, %v989, 1.0
  %v1006 = vsel %vm974, %v990, 1.0
  %v1007 = vsel %vm975, %v991, 1.0
  %v1008 = vmul.f32 %v896, %v992
  %v1009 = vmul.f32 %v897, %v993
  %v1010 = vmul.f32 %v898, %v994
  %v1011 = vmul.f32 %v899, %v995
  %v1012 = vmul.f32 %v900, %v996
  %v1013 = vmul.f32 %v901, %v997
  %v1014 = vmul.f32 %v902, %v998
  %v1015 = vmul.f32 %v903, %v999
  %v1016 = vmul.f32 %v904, %v1000
  %v1017 = vmul.f32 %v905, %v1001
  %v1018 = vmul.f32 %v906, %v1002
  %v1019 = vmul.f32 %v907, %v1003
  %v1020 = vmul.f32 %v908, %v1004
  %v1021 = vmul.f32 %v909, %v1005
  %v1022 = vmul.f32 %v910, %v1006
  %v1023 = vmul.f32 %v911, %v1007
  %v1024 = vld [vmem:[%s9] sm:$0xff]
  %v1025 = vld [vmem:[%s9 + $0x8] sm:$0xff]
  %v1026 = vld [vmem:[%s9 + $0x10] sm:$0xff]
  %v1027 = vld [vmem:[%s9 + $0x18] sm:$0xff]
  %v1028 = vld [vmem:[%s9 + $0x20] sm:$0xff]
  %v1029 = vld [vmem:[%s9 + $0x28] sm:$0xff]
  %v1030 = vld [vmem:[%s9 + $0x30] sm:$0xff]
  %v1031 = vld [vmem:[%s9 + $0x38] sm:$0xff]
  %v1032 = vld [vmem:[%s9 + $0x40] sm:$0xff]
  %v1033 = vld [vmem:[%s9 + $0x48] sm:$0xff]
  %v1034 = vld [vmem:[%s9 + $0x50] sm:$0xff]
  %v1035 = vld [vmem:[%s9 + $0x58] sm:$0xff]
  %v1036 = vld [vmem:[%s9 + $0x60] sm:$0xff]
  %v1037 = vld [vmem:[%s9 + $0x68] sm:$0xff]
  %v1038 = vld [vmem:[%s9 + $0x70] sm:$0xff]
  %v1039 = vld [vmem:[%s9 + $0x78] sm:$0xff]
  %v1040 = vld [vmem:[%s10] sm:$0x1]
  %v1041 = vld [vmem:[%s11] sm:$0xff]
  %v1042 = vld [vmem:[%s11 + $0x8] sm:$0xff]
  %v1043 = vld [vmem:[%s11 + $0x10] sm:$0xff]
  %v1044 = vld [vmem:[%s11 + $0x18] sm:$0xff]
  %v1045 = vld [vmem:[%s11 + $0x20] sm:$0xff]
  %v1046 = vld [vmem:[%s11 + $0x28] sm:$0xff]
  %v1047 = vld [vmem:[%s11 + $0x30] sm:$0xff]
  %v1048 = vld [vmem:[%s11 + $0x38] sm:$0xff]
  %v1049 = vld [vmem:[%s11 + $0x40] sm:$0xff]
  %v1050 = vld [vmem:[%s11 + $0x48] sm:$0xff]
  %v1051 = vld [vmem:[%s11 + $0x50] sm:$0xff]
  %v1052 = vld [vmem:[%s11 + $0x58] sm:$0xff]
  %v1053 = vld [vmem:[%s11 + $0x60] sm:$0xff]
  %v1054 = vld [vmem:[%s11 + $0x68] sm:$0xff]
  %v1055 = vld [vmem:[%s11 + $0x70] sm:$0xff]
  %v1056 = vld [vmem:[%s11 + $0x78] sm:$0xff]
  %v1057 = vld [vmem:[%s12] sm:$0xff]
  %v1058 = vld [vmem:[%s12 + $0x8] sm:$0xff]
  %v1059 = vld [vmem:[%s12 + $0x10] sm:$0xff]
  %v1060 = vld [vmem:[%s12 + $0x18] sm:$0xff]
  %v1061 = vld [vmem:[%s12 + $0x20] sm:$0xff]
  %v1062 = vld [vmem:[%s12 + $0x28] sm:$0xff]
  %v1063 = vld [vmem:[%s12 + $0x30] sm:$0xff]
  %v1064 = vld [vmem:[%s12 + $0x38] sm:$0xff]
  %v1065 = vld [vmem:[%s12 + $0x40] sm:$0xff]
  %v1066 = vld [vmem:[%s12 + $0x48] sm:$0xff]
  %v1067 = vld [vmem:[%s12 + $0x50] sm:$0xff]
  %v1068 = vld [vmem:[%s12 + $0x58] sm:$0xff]
  %v1069 = vld [vmem:[%s12 + $0x60] sm:$0xff]
  %v1070 = vld [vmem:[%s12 + $0x68] sm:$0xff]
  %v1071 = vld [vmem:[%s12 + $0x70] sm:$0xff]
  %v1072 = vld [vmem:[%s12 + $0x78] sm:$0xff]
  %v1073 = vld [vmem:[%s13] sm:$0x1]
  %v1074 = vld [vmem:[%s2] sm:$0xff]
  %v1075 = vld [vmem:[%s2 + $0x8] sm:$0xff]
  %v1076 = vld [vmem:[%s2 + $0x10] sm:$0xff]
  %v1077 = vld [vmem:[%s2 + $0x18] sm:$0xff]
  %v1078 = vld [vmem:[%s2 + $0x20] sm:$0xff]
  %v1079 = vld [vmem:[%s2 + $0x28] sm:$0xff]
  %v1080 = vld [vmem:[%s2 + $0x30] sm:$0xff]
  %v1081 = vld [vmem:[%s2 + $0x38] sm:$0xff]
  %v1082 = vld [vmem:[%s2 + $0x40] sm:$0xff]
  %v1083 = vld [vmem:[%s2 + $0x48] sm:$0xff]
  %v1084 = vld [vmem:[%s2 + $0x50] sm:$0xff]
  %v1085 = vld [vmem:[%s2 + $0x58] sm:$0xff]
  %v1086 = vld [vmem:[%s2 + $0x60] sm:$0xff]
  %v1087 = vld [vmem:[%s2 + $0x68] sm:$0xff]
  %v1088 = vld [vmem:[%s2 + $0x70] sm:$0xff]
  %v1089 = vld [vmem:[%s2 + $0x78] sm:$0xff]
  %v1091 = vlaneseq
  %v1092 = vshrl.u32 %v1091, 7
  %v1093 = vsub.s32 0, %v1092
  %v1094 = vrot.slane %v1040, %v1093
  %1096 = vmatprep.subr.mxu0 0.0
  %1097 = vmatpush1.msra.mxu0 %v1024
  %1098 = vmatprep.subr.mxu0 0.0
  %1099 = vmatpush1.msra.mxu0 %v1025
  %1100 = vmatprep.subr.mxu0 0.0
  %1101 = vmatpush1.msra.mxu0 %v1026
  %1102 = vmatprep.subr.mxu0 0.0
  %1103 = vmatpush1.msra.mxu0 %v1027
  %1104 = vmatprep.subr.mxu0 0.0
  %1105 = vmatpush1.msra.mxu0 %v1028
  %1106 = vmatprep.subr.mxu0 0.0
  %1107 = vmatpush1.msra.mxu0 %v1029
  %1108 = vmatprep.subr.mxu0 0.0
  %1109 = vmatpush1.msra.mxu0 %v1030
  %1110 = vmatprep.subr.mxu0 0.0
  %1111 = vmatpush1.msra.mxu0 %v1031
  %1112 = vmatprep.subr.mxu0 0.0
  %1113 = vmatpush1.msra.mxu0 %v1032
  %1114 = vmatprep.subr.mxu0 0.0
  %1115 = vmatpush1.msra.mxu0 %v1033
  %1116 = vmatprep.subr.mxu0 0.0
  %1117 = vmatpush1.msra.mxu0 %v1034
  %1118 = vmatprep.subr.mxu0 0.0
  %1119 = vmatpush1.msra.mxu0 %v1035
  %1120 = vmatprep.subr.mxu0 0.0
  %1121 = vmatpush1.msra.mxu0 %v1036
  %1122 = vmatprep.subr.mxu0 0.0
  %1123 = vmatpush1.msra.mxu0 %v1037
  %1124 = vmatprep.subr.mxu0 0.0
  %1125 = vmatpush1.msra.mxu0 %v1038
  %1126 = vmatprep.subr.mxu0 0.0
  %1127 = vmatpush1.msra.mxu0 %v1039
  %1128 = vmatprep.subr.mxu0 0.0
  %1129 = vmatpush1.msra.mxu0 0.0
  %1130 = vmatprep.subr.mxu0 0.0
  %1131 = vmatpush1.msra.mxu0 0.0
  %1132 = vmatprep.subr.mxu0 0.0
  %1133 = vmatpush1.msra.mxu0 0.0
  %1134 = vmatprep.subr.mxu0 0.0
  %1135 = vmatpush1.msra.mxu0 0.0
  %1136 = vmatprep.subr.mxu0 0.0
  %1137 = vmatpush1.msra.mxu0 0.0
  %1138 = vmatprep.subr.mxu0 0.0
  %1139 = vmatpush1.msra.mxu0 0.0
  %1140 = vmatprep.subr.mxu0 0.0
  %1141 = vmatpush1.msra.mxu0 0.0
  %1142 = vmatprep.subr.mxu0 0.0
  %1143 = vmatpush1.msra.mxu0 0.0
  %1144 = vmatprep.subr.mxu0 0.0
  %1145 = vmatpush1.msra.mxu0 0.0
  %1146 = vmatprep.subr.mxu0 0.0
  %1147 = vmatpush1.msra.mxu0 0.0
  %1148 = vmatprep.subr.mxu0 0.0
  %1149 = vmatpush1.msra.mxu0 0.0
  %1150 = vmatprep.subr.mxu0 0.0
  %1151 = vmatpush1.msra.mxu0 0.0
  %1152 = vmatprep.subr.mxu0 0.0
  %1153 = vmatpush1.msra.mxu0 0.0
  %1154 = vmatprep.subr.mxu0 0.0
  %1155 = vmatpush1.msra.mxu0 0.0
  %1156 = vmatprep.subr.mxu0 0.0
  %1157 = vmatpush1.msra.mxu0 0.0
  %1158 = vmatprep.subr.mxu0 0.0
  %1159 = vmatpush1.msra.mxu0 0.0
  %1160 = vmatprep.mubr.f32.mxu0 0.0
  %1161 = vmatmul.mubr.f32.gmra.mrb[0].mxu0 %v1008
  %v1162 = vpop.f32.mrb[0].mxu0
  %v1163 = vadd.f32 %v1094, %v1162
  %v1164 = vpop.f32.mrb[0].mxu0
  %1165 = vmatprep.mubr.f32.mxu0 0.0
  %1166 = vmatmul.mubr.f32.gmra.mrb[0].mxu0 %v1009
  %v1167 = vpop.f32.mrb[0].mxu0
  %v1168 = vadd.f32 %v1094, %v1167
  %v1169 = vpop.f32.mrb[0].mxu0
  %1170 = vmatprep.mubr.f32.mxu0 0.0
  %1171 = vmatmul.mubr.f32.gmra.mrb[0].mxu0 %v1010
  %v1172 = vpop.f32.mrb[0].mxu0
  %v1173 = vadd.f32 %v1094, %v1172
  %v1174 = vpop.f32.mrb[0].mxu0
  %1175 = vmatprep.mubr.f32.mxu0 0.0
  %1176 = vmatmul.mubr.f32.gmra.mrb[0].mxu0 %v1011
  %v1177 = vpop.f32.mrb[0].mxu0
  %v1178 = vadd.f32 %v1094, %v1177
  %v1179 = vpop.f32.mrb[0].mxu0
  %1180 = vmatprep.mubr.f32.mxu0 0.0
  %1181 = vmatmul.mubr.f32.gmra.mrb[0].mxu0 %v1012
  %v1182 = vpop.f32.mrb[0].mxu0
  %v1183 = vadd.f32 %v1094, %v1182
  %v1184 = vpop.f32.mrb[0].mxu0
  %1185 = vmatprep.mubr.f32.mxu0 0.0
  %1186 = vmatmul.mubr.f32.gmra.mrb[0].mxu0 %v1013
  %v1187 = vpop.f32.mrb[0].mxu0
  %v1188 = vadd.f32 %v1094, %v1187
  %v1189 = vpop.f32.mrb[0].mxu0
  %1190 = vmatprep.mubr.f32.mxu0 0.0
  %1191 = vmatmul.mubr.f32.gmra.mrb[0].mxu0 %v1014
  %v1192 = vpop.f32.mrb[0].mxu0
  %v1193 = vadd.f32 %v1094, %v1192
  %v1194 = vpop.f32.mrb[0].mxu0
  %1195 = vmatprep.mubr.f32.mxu0 0.0
  %1196 = vmatmul.mubr.f32.gmra.mrb[0].mxu0 %v1015
  %v1197 = vpop.f32.mrb[0].mxu0
  %v1198 = vadd.f32 %v1094, %v1197
  %v1199 = vpop.f32.mrb[0].mxu0
  %1200 = vmatprep.mubr.f32.mxu0 0.0
  %1201 = vmatmul.mubr.f32.gmra.mrb[0].mxu0 %v1016
  %v1202 = vpop.f32.mrb[0].mxu0
  %v1203 = vadd.f32 %v1094, %v1202
  %v1204 = vpop.f32.mrb[0].mxu0
  %1205 = vmatprep.mubr.f32.mxu0 0.0
  %1206 = vmatmul.mubr.f32.gmra.mrb[0].mxu0 %v1017
  %v1207 = vpop.f32.mrb[0].mxu0
  %v1208 = vadd.f32 %v1094, %v1207
  %v1209 = vpop.f32.mrb[0].mxu0
  %1210 = vmatprep.mubr.f32.mxu0 0.0
  %1211 = vmatmul.mubr.f32.gmra.mrb[0].mxu0 %v1018
  %v1212 = vpop.f32.mrb[0].mxu0
  %v1213 = vadd.f32 %v1094, %v1212
  %v1214 = vpop.f32.mrb[0].mxu0
  %1215 = vmatprep.mubr.f32.mxu0 0.0
  %1216 = vmatmul.mubr.f32.gmra.mrb[0].mxu0 %v1019
  %v1217 = vpop.f32.mrb[0].mxu0
  %v1218 = vadd.f32 %v1094, %v1217
  %v1219 = vpop.f32.mrb[0].mxu0
  %1220 = vmatprep.mubr.f32.mxu0 0.0
  %1221 = vmatmul.mubr.f32.gmra.mrb[0].mxu0 %v1020
  %v1222 = vpop.f32.mrb[0].mxu0
  %v1223 = vadd.f32 %v1094, %v1222
  %v1224 = vpop.f32.mrb[0].mxu0
  %1225 = vmatprep.mubr.f32.mxu0 0.0
  %1226 = vmatmul.mubr.f32.gmra.mrb[0].mxu0 %v1021
  %v1227 = vpop.f32.mrb[0].mxu0
  %v1228 = vadd.f32 %v1094, %v1227
  %v1229 = vpop.f32.mrb[0].mxu0
  %1230 = vmatprep.mubr.f32.mxu0 0.0
  %1231 = vmatmul.mubr.f32.gmra.mrb[0].mxu0 %v1022
  %v1232 = vpop.f32.mrb[0].mxu0
  %v1233 = vadd.f32 %v1094, %v1232
  %v1234 = vpop.f32.mrb[0].mxu0
  %1235 = vmatprep.mubr.f32.mxu0 0.0
  %1236 = vmatmul.mubr.f32.gmra.mrb[0].mxu0 %v1023
  %v1237 = vpop.f32.mrb[0].mxu0
  %v1238 = vadd.f32 %v1094, %v1237
  %v1239 = vpop.f32.mrb[0].mxu0
  %1240 = vdwg.mxu0
  %v1241 = vmax.f32 %v1163, 0.0
  %v1242 = vmax.f32 %v1168, 0.0
  %v1243 = vmax.f32 %v1173, 0.0
  %v1244 = vmax.f32 %v1178, 0.0
  %v1245 = vmax.f32 %v1183, 0.0
  %v1246 = vmax.f32 %v1188, 0.0
  %v1247 = vmax.f32 %v1193, 0.0
  %v1248 = vmax.f32 %v1198, 0.0
  %v1249 = vmax.f32 %v1203, 0.0
  %v1250 = vmax.f32 %v1208, 0.0
  %v1251 = vmax.f32 %v1213, 0.0
  %v1252 = vmax.f32 %v1218, 0.0
  %v1253 = vmax.f32 %v1223, 0.0
  %v1254 = vmax.f32 %v1228, 0.0
  %v1255 = vmax.f32 %v1233, 0.0
  %v1256 = vmax.f32 %v1238, 0.0
  %1257 = vmatprep.subr.mxu0 0.0
  %1258 = vmatpush1.msra.mxu0 %v1241
  %1259 = vmatprep.subr.mxu0 0.0
  %1260 = vmatpush1.msra.mxu0 %v1242
  %1261 = vmatprep.subr.mxu0 0.0
  %1262 = vmatpush1.msra.mxu0 %v1243
  %1263 = vmatprep.subr.mxu0 0.0
  %1264 = vmatpush1.msra.mxu0 %v1244
  %1265 = vmatprep.subr.mxu0 0.0
  %1266 = vmatpush1.msra.mxu0 %v1245
  %1267 = vmatprep.subr.mxu0 0.0
  %1268 = vmatpush1.msra.mxu0 %v1246
  %1269 = vmatprep.subr.mxu0 0.0
  %1270 = vmatpush1.msra.mxu0 %v1247
  %1271 = vmatprep.subr.mxu0 0.0
  %1272 = vmatpush1.msra.mxu0 %v1248
  %1273 = vmatprep.subr.mxu0 0.0
  %1274 = vmatpush1.msra.mxu0 %v1249
  %1275 = vmatprep.subr.mxu0 0.0
  %1276 = vmatpush1.msra.mxu0 %v1250
  %1277 = vmatprep.subr.mxu0 0.0
  %1278 = vmatpush1.msra.mxu0 %v1251
  %1279 = vmatprep.subr.mxu0 0.0
  %1280 = vmatpush1.msra.mxu0 %v1252
  %1281 = vmatprep.subr.mxu0 0.0
  %1282 = vmatpush1.msra.mxu0 %v1253
  %1283 = vmatprep.subr.mxu0 0.0
  %1284 = vmatpush1.msra.mxu0 %v1254
  %1285 = vmatprep.subr.mxu0 0.0
  %1286 = vmatpush1.msra.mxu0 %v1255
  %1287 = vmatprep.subr.mxu0 0.0
  %1288 = vmatpush1.msra.mxu0 %v1256
  %1289 = vmatprep.subr.mxu0 0.0
  %1290 = vmatpush1.msra.mxu0 0.0
  %1291 = vmatprep.subr.mxu0 0.0
  %1292 = vmatpush1.msra.mxu0 0.0
  %1293 = vmatprep.subr.mxu0 0.0
  %1294 = vmatpush1.msra.mxu0 0.0
  %1295 = vmatprep.subr.mxu0 0.0
  %1296 = vmatpush1.msra.mxu0 0.0
  %1297 = vmatprep.subr.mxu0 0.0
  %1298 = vmatpush1.msra.mxu0 0.0
  %1299 = vmatprep.subr.mxu0 0.0
  %1300 = vmatpush1.msra.mxu0 0.0
  %1301 = vmatprep.subr.mxu0 0.0
  %1302 = vmatpush1.msra.mxu0 0.0
  %1303 = vmatprep.subr.mxu0 0.0
  %1304 = vmatpush1.msra.mxu0 0.0
  %1305 = vmatprep.subr.mxu0 0.0
  %1306 = vmatpush1.msra.mxu0 0.0
  %1307 = vmatprep.subr.mxu0 0.0
  %1308 = vmatpush1.msra.mxu0 0.0
  %1309 = vmatprep.subr.mxu0 0.0
  %1310 = vmatpush1.msra.mxu0 0.0
  %1311 = vmatprep.subr.mxu0 0.0
  %1312 = vmatpush1.msra.mxu0 0.0
  %1313 = vmatprep.subr.mxu0 0.0
  %1314 = vmatpush1.msra.mxu0 0.0
  %1315 = vmatprep.subr.mxu0 0.0
  %1316 = vmatpush1.msra.mxu0 0.0
  %1317 = vmatprep.subr.mxu0 0.0
  %1318 = vmatpush1.msra.mxu0 0.0
  %1319 = vmatprep.subr.mxu0 0.0
  %1320 = vmatpush1.msra.mxu0 0.0
  %1321 = vmatprep.mubr.f32.mxu0 0.0
  %1322 = vmatmul.mubr.f32.gmra.mrb[0].mxu0 %v1074
  %v1323 = vpop.f32.mrb[0].mxu0
  %v1324 = vadd.f32 0.0, %v1323
  %v1325 = vpop.f32.mrb[0].mxu0
  %1326 = vmatprep.mubr.f32.mxu0 0.0
  %1327 = vmatmul.mubr.f32.gmra.mrb[0].mxu0 %v1075
  %v1328 = vpop.f32.mrb[0].mxu0
  %v1329 = vadd.f32 0.0, %v1328
  %v1330 = vpop.f32.mrb[0].mxu0
  %1331 = vmatprep.mubr.f32.mxu0 0.0
  %1332 = vmatmul.mubr.f32.gmra.mrb[0].mxu0 %v1076
  %v1333 = vpop.f32.mrb[0].mxu0
  %v1334 = vadd.f32 0.0, %v1333
  %v1335 = vpop.f32.mrb[0].mxu0
  %1336 = vmatprep.mubr.f32.mxu0 0.0
  %1337 = vmatmul.mubr.f32.gmra.mrb[0].mxu0 %v1077
  %v1338 = vpop.f32.mrb[0].mxu0
  %v1339 = vadd.f32 0.0, %v1338
  %v1340 = vpop.f32.mrb[0].mxu0
  %1341 = vmatprep.mubr.f32.mxu0 0.0
  %1342 = vmatmul.mubr.f32.gmra.mrb[0].mxu0 %v1078
  %v1343 = vpop.f32.mrb[0].mxu0
  %v1344 = vadd.f32 0.0, %v1343
  %v1345 = vpop.f32.mrb[0].mxu0
  %1346 = vmatprep.mubr.f32.mxu0 0.0
  %1347 = vmatmul.mubr.f32.gmra.mrb[0].mxu0 %v1079
  %v1348 = vpop.f32.mrb[0].mxu0
  %v1349 = vadd.f32 0.0, %v1348
  %v1350 = vpop.f32.mrb[0].mxu0
  %1351 = vmatprep.mubr.f32.mxu0 0.0
  %1352 = vmatmul.mubr.f32.gmra.mrb[0].mxu0 %v1080
  %v1353 = vpop.f32.mrb[0].mxu0
  %v1354 = vadd.f32 0.0, %v1353
  %v1355 = vpop.f32.mrb[0].mxu0
  %1356 = vmatprep.mubr.f32.mxu0 0.0
  %1357 = vmatmul.mubr.f32.gmra.mrb[0].mxu0 %v1081
  %v1358 = vpop.f32.mrb[0].mxu0
  %v1359 = vadd.f32 0.0, %v1358
  %v1360 = vpop.f32.mrb[0].mxu0
  %1361 = vmatprep.mubr.f32.mxu0 0.0
  %1362 = vmatmul.mubr.f32.gmra.mrb[0].mxu0 %v1082
  %v1363 = vpop.f32.mrb[0].mxu0
  %v1364 = vadd.f32 0.0, %v1363
  %v1365 = vpop.f32.mrb[0].mxu0
  %1366 = vmatprep.mubr.f32.mxu0 0.0
  %1367 = vmatmul.mubr.f32.gmra.mrb[0].mxu0 %v1083
  %v1368 = vpop.f32.mrb[0].mxu0
  %v1369 = vadd.f32 0.0, %v1368
  %v1370 = vpop.f32.mrb[0].mxu0
  %1371 = vmatprep.mubr.f32.mxu0 0.0
  %1372 = vmatmul.mubr.f32.gmra.mrb[0].mxu0 %v1084
  %v1373 = vpop.f32.mrb[0].mxu0
  %v1374 = vadd.f32 0.0, %v1373
  %v1375 = vpop.f32.mrb[0].mxu0
  %1376 = vmatprep.mubr.f32.mxu0 0.0
  %1377 = vmatmul.mubr.f32.gmra.mrb[0].mxu0 %v1085
  %v1378 = vpop.f32.mrb[0].mxu0
  %v1379 = vadd.f32 0.0, %v1378
  %v1380 = vpop.f32.mrb[0].mxu0
  %1381 = vmatprep.mubr.f32.mxu0 0.0
  %1382 = vmatmul.mubr.f32.gmra.mrb[0].mxu0 %v1086
  %v1383 = vpop.f32.mrb[0].mxu0
  %v1384 = vadd.f32 0.0, %v1383
  %v1385 = vpop.f32.mrb[0].mxu0
  %1386 = vmatprep.mubr.f32.mxu0 0.0
  %1387 = vmatmul.mubr.f32.gmra.mrb[0].mxu0 %v1087
  %v1388 = vpop.f32.mrb[0].mxu0
  %v1389 = vadd.f32 0.0, %v1388
  %v1390 = vpop.f32.mrb[0].mxu0
  %1391 = vmatprep.mubr.f32.mxu0 0.0
  %1392 = vmatmul.mubr.f32.gmra.mrb[0].mxu0 %v1088
  %v1393 = vpop.f32.mrb[0].mxu0
  %v1394 = vadd.f32 0.0, %v1393
  %v1395 = vpop.f32.mrb[0].mxu0
  %1396 = vmatprep.mubr.f32.mxu0 0.0
  %1397 = vmatmul.mubr.f32.gmra.mrb[0].mxu0 %v1089
  %v1398 = vpop.f32.mrb[0].mxu0
  %v1399 = vadd.f32 0.0, %v1398
  %v1400 = vpop.f32.mrb[0].mxu0
  %1401 = vdwg.mxu0
  %v1402 = vmax.f32 %v1324, 1.0
  %v1403 = vmax.f32 %v1329, 1.0
  %v1404 = vmax.f32 %v1334, 1.0
  %v1405 = vmax.f32 %v1339, 1.0
  %v1406 = vmax.f32 %v1344, 1.0
  %v1407 = vmax.f32 %v1349, 1.0
  %v1408 = vmax.f32 %v1354, 1.0
  %v1409 = vmax.f32 %v1359, 1.0
  %v1410 = vmax.f32 %v1364, 1.0
  %v1411 = vmax.f32 %v1369, 1.0
  %v1412 = vmax.f32 %v1374, 1.0
  %v1413 = vmax.f32 %v1379, 1.0
  %v1414 = vmax.f32 %v1384, 1.0
  %v1415 = vmax.f32 %v1389, 1.0
  %v1416 = vmax.f32 %v1394, 1.0
  %v1417 = vmax.f32 %v1399, 1.0
  %v1418 = vrcp.pop %v1402
  %v1419 = vrcp.pop %v1403
  %v1420 = vrcp.pop %v1404
  %v1421 = vrcp.pop %v1405
  %v1422 = vrcp.pop %v1406
  %v1423 = vrcp.pop %v1407
  %v1424 = vrcp.pop %v1408
  %v1425 = vrcp.pop %v1409
  %v1426 = vrcp.pop %v1410
  %v1427 = vrcp.pop %v1411
  %v1428 = vrcp.pop %v1412
  %v1429 = vrcp.pop %v1413
  %v1430 = vrcp.pop %v1414
  %v1431 = vrcp.pop %v1415
  %v1432 = vrcp.pop %v1416
  %v1433 = vrcp.pop %v1417
  %1435 = vset.pattern.permute.xlu0 127
  %1436 = vperm.xlu0 %1435, %v1418
  %v1437 = vpop.permute.xlu0 %1436
  %1440 = vset.pattern.permute.xlu0 127
  %1441 = vperm.xlu0 %1440, %v1419
  %v1442 = vpop.permute.xlu0 %1441
  %1445 = vset.pattern.permute.xlu0 127
  %1446 = vperm.xlu0 %1445, %v1420
  %v1447 = vpop.permute.xlu0 %1446
  %1450 = vset.pattern.permute.xlu0 127
  %1451 = vperm.xlu0 %1450, %v1421
  %v1452 = vpop.permute.xlu0 %1451
  %1455 = vset.pattern.permute.xlu0 127
  %1456 = vperm.xlu0 %1455, %v1422
  %v1457 = vpop.permute.xlu0 %1456
  %1460 = vset.pattern.permute.xlu0 127
  %1461 = vperm.xlu0 %1460, %v1423
  %v1462 = vpop.permute.xlu0 %1461
  %1465 = vset.pattern.permute.xlu0 127
  %1466 = vperm.xlu0 %1465, %v1424
  %v1467 = vpop.permute.xlu0 %1466
  %1470 = vset.pattern.permute.xlu0 127
  %1471 = vperm.xlu0 %1470, %v1425
  %v1472 = vpop.permute.xlu0 %1471
  %1475 = vset.pattern.permute.xlu0 127
  %1476 = vperm.xlu0 %1475, %v1426
  %v1477 = vpop.permute.xlu0 %1476
  %1480 = vset.pattern.permute.xlu0 127
  %1481 = vperm.xlu0 %1480, %v1427
  %v1482 = vpop.permute.xlu0 %1481
  %1485 = vset.pattern.permute.xlu0 127
  %1486 = vperm.xlu0 %1485, %v1428
  %v1487 = vpop.permute.xlu0 %1486
  %1490 = vset.pattern.permute.xlu0 127
  %1491 = vperm.xlu0 %1490, %v1429
  %v1492 = vpop.permute.xlu0 %1491
  %1495 = vset.pattern.permute.xlu0 127
  %1496 = vperm.xlu0 %1495, %v1430
  %v1497 = vpop.permute.xlu0 %1496
  %1500 = vset.pattern.permute.xlu0 127
  %1501 = vperm.xlu0 %1500, %v1431
  %v1502 = vpop.permute.xlu0 %1501
  %1505 = vset.pattern.permute.xlu0 127
  %1506 = vperm.xlu0 %1505, %v1432
  %v1507 = vpop.permute.xlu0 %1506
  %1510 = vset.pattern.permute.xlu0 127
  %1511 = vperm.xlu0 %1510, %v1433
  %v1512 = vpop.permute.xlu0 %1511
  %v1514 = vmul.f32 %v1324, %v1437
  %v1515 = vmul.f32 %v1329, %v1442
  %v1516 = vmul.f32 %v1334, %v1447
  %v1517 = vmul.f32 %v1339, %v1452
  %v1518 = vmul.f32 %v1344, %v1457
  %v1519 = vmul.f32 %v1349, %v1462
  %v1520 = vmul.f32 %v1354, %v1467
  %v1521 = vmul.f32 %v1359, %v1472
  %v1522 = vmul.f32 %v1364, %v1477
  %v1523 = vmul.f32 %v1369, %v1482
  %v1524 = vmul.f32 %v1374, %v1487
  %v1525 = vmul.f32 %v1379, %v1492
  %v1526 = vmul.f32 %v1384, %v1497
  %v1527 = vmul.f32 %v1389, %v1502
  %v1528 = vmul.f32 %v1394, %v1507
  %v1529 = vmul.f32 %v1399, %v1512
  %1530 = vmatprep.subr.mxu0 0.0
  %1531 = vmatpush1.msra.mxu0 %v1057
  %1532 = vmatprep.subr.mxu0 0.0
  %1533 = vmatpush1.msra.mxu0 %v1058
  %1534 = vmatprep.subr.mxu0 0.0
  %1535 = vmatpush1.msra.mxu0 %v1059
  %1536 = vmatprep.subr.mxu0 0.0
  %1537 = vmatpush1.msra.mxu0 %v1060
  %1538 = vmatprep.subr.mxu0 0.0
  %1539 = vmatpush1.msra.mxu0 %v1061
  %1540 = vmatprep.subr.mxu0 0.0
  %1541 = vmatpush1.msra.mxu0 %v1062
  %1542 = vmatprep.subr.mxu0 0.0
  %1543 = vmatpush1.msra.mxu0 %v1063
  %1544 = vmatprep.subr.mxu0 0.0
  %1545 = vmatpush1.msra.mxu0 %v1064
  %1546 = vmatprep.subr.mxu0 0.0
  %1547 = vmatpush1.msra.mxu0 %v1065
  %1548 = vmatprep.subr.mxu0 0.0
  %1549 = vmatpush1.msra.mxu0 %v1066
  %1550 = vmatprep.subr.mxu0 0.0
  %1551 = vmatpush1.msra.mxu0 %v1067
  %1552 = vmatprep.subr.mxu0 0.0
  %1553 = vmatpush1.msra.mxu0 %v1068
  %1554 = vmatprep.subr.mxu0 0.0
  %1555 = vmatpush1.msra.mxu0 %v1069
  %1556 = vmatprep.subr.mxu0 0.0
  %1557 = vmatpush1.msra.mxu0 %v1070
  %1558 = vmatprep.subr.mxu0 0.0
  %1559 = vmatpush1.msra.mxu0 %v1071
  %1560 = vmatprep.subr.mxu0 0.0
  %1561 = vmatpush1.msra.mxu0 %v1072
  %1562 = vmatprep.subr.mxu0 0.0
  %1563 = vmatpush1.msra.mxu0 0.0
  %1564 = vmatprep.subr.mxu0 0.0
  %1565 = vmatpush1.msra.mxu0 0.0
  %1566 = vmatprep.subr.mxu0 0.0
  %1567 = vmatpush1.msra.mxu0 0.0
  %1568 = vmatprep.subr.mxu0 0.0
  %1569 = vmatpush1.msra.mxu0 0.0
  %1570 = vmatprep.subr.mxu0 0.0
  %1571 = vmatpush1.msra.mxu0 0.0
  %1572 = vmatprep.subr.mxu0 0.0
  %1573 = vmatpush1.msra.mxu0 0.0
  %1574 = vmatprep.subr.mxu0 0.0
  %1575 = vmatpush1.msra.mxu0 0.0
  %1576 = vmatprep.subr.mxu0 0.0
  %1577 = vmatpush1.msra.mxu0 0.0
  %1578 = vmatprep.subr.mxu0 0.0
  %1579 = vmatpush1.msra.mxu0 0.0
  %1580 = vmatprep.subr.mxu0 0.0
  %1581 = vmatpush1.msra.mxu0 0.0
  %1582 = vmatprep.subr.mxu0 0.0
  %1583 = vmatpush1.msra.mxu0 0.0
  %1584 = vmatprep.subr.mxu0 0.0
  %1585 = vmatpush1.msra.mxu0 0.0
  %1586 = vmatprep.subr.mxu0 0.0
  %1587 = vmatpush1.msra.mxu0 0.0
  %1588 = vmatprep.subr.mxu0 0.0
  %1589 = vmatpush1.msra.mxu0 0.0
  %1590 = vmatprep.subr.mxu0 0.0
  %1591 = vmatpush1.msra.mxu0 0.0
  %1592 = vmatprep.subr.mxu0 0.0
  %1593 = vmatpush1.msra.mxu0 0.0
  %1594 = vmatprep.mubr.f32.mxu0 0.0
  %1595 = vmatmul.mubr.f32.gmra.mrb[0].mxu0 %v1008
  %v1596 = vpop.f32.mrb[0].mxu0
  %v1597 = vadd.f32 0.0, %v1596
  %v1598 = vpop.f32.mrb[0].mxu0
  %1599 = vmatprep.mubr.f32.mxu0 0.0
  %1600 = vmatmul.mubr.f32.gmra.mrb[0].mxu0 %v1009
  %v1601 = vpop.f32.mrb[0].mxu0
  %v1602 = vadd.f32 0.0, %v1601
  %v1603 = vpop.f32.mrb[0].mxu0
  %1604 = vmatprep.mubr.f32.mxu0 0.0
  %1605 = vmatmul.mubr.f32.gmra.mrb[0].mxu0 %v1010
  %v1606 = vpop.f32.mrb[0].mxu0
  %v1607 = vadd.f32 0.0, %v1606
  %v1608 = vpop.f32.mrb[0].mxu0
  %1609 = vmatprep.mubr.f32.mxu0 0.0
  %1610 = vmatmul.mubr.f32.gmra.mrb[0].mxu0 %v1011
  %v1611 = vpop.f32.mrb[0].mxu0
  %v1612 = vadd.f32 0.0, %v1611
  %v1613 = vpop.f32.mrb[0].mxu0
  %1614 = vmatprep.mubr.f32.mxu0 0.0
  %1615 = vmatmul.mubr.f32.gmra.mrb[0].mxu0 %v1012
  %v1616 = vpop.f32.mrb[0].mxu0
  %v1617 = vadd.f32 0.0, %v1616
  %v1618 = vpop.f32.mrb[0].mxu0
  %1619 = vmatprep.mubr.f32.mxu0 0.0
  %1620 = vmatmul.mubr.f32.gmra.mrb[0].mxu0 %v1013
  %v1621 = vpop.f32.mrb[0].mxu0
  %v1622 = vadd.f32 0.0, %v1621
  %v1623 = vpop.f32.mrb[0].mxu0
  %1624 = vmatprep.mubr.f32.mxu0 0.0
  %1625 = vmatmul.mubr.f32.gmra.mrb[0].mxu0 %v1014
  %v1626 = vpop.f32.mrb[0].mxu0
  %v1627 = vadd.f32 0.0, %v1626
  %v1628 = vpop.f32.mrb[0].mxu0
  %1629 = vmatprep.mubr.f32.mxu0 0.0
  %1630 = vmatmul.mubr.f32.gmra.mrb[0].mxu0 %v1015
  %v1631 = vpop.f32.mrb[0].mxu0
  %v1632 = vadd.f32 0.0, %v1631
  %v1633 = vpop.f32.mrb[0].mxu0
  %1634 = vmatprep.mubr.f32.mxu0 0.0
  %1635 = vmatmul.mubr.f32.gmra.mrb[0].mxu0 %v1016
  %v1636 = vpop.f32.mrb[0].mxu0
  %v1637 = vadd.f32 0.0, %v1636
  %v1638 = vpop.f32.mrb[0].mxu0
  %1639 = vmatprep.mubr.f32.mxu0 0.0
  %1640 = vmatmul.mubr.f32.gmra.mrb[0].mxu0 %v1017
  %v1641 = vpop.f32.mrb[0].mxu0
  %v1642 = vadd.f32 0.0, %v1641
  %v1643 = vpop.f32.mrb[0].mxu0
  %1644 = vmatprep.mubr.f32.mxu0 0.0
  %1645 = vmatmul.mubr.f32.gmra.mrb[0].mxu0 %v1018
  %v1646 = vpop.f32.mrb[0].mxu0
  %v1647 = vadd.f32 0.0, %v1646
  %v1648 = vpop.f32.mrb[0].mxu0
  %1649 = vmatprep.mubr.f32.mxu0 0.0
  %1650 = vmatmul.mubr.f32.gmra.mrb[0].mxu0 %v1019
  %v1651 = vpop.f32.mrb[0].mxu0
  %v1652 = vadd.f32 0.0, %v1651
  %v1653 = vpop.f32.mrb[0].mxu0
  %1654 = vmatprep.mubr.f32.mxu0 0.0
  %1655 = vmatmul.mubr.f32.gmra.mrb[0].mxu0 %v1020
  %v1656 = vpop.f32.mrb[0].mxu0
  %v1657 = vadd.f32 0.0, %v1656
  %v1658 = vpop.f32.mrb[0].mxu0
  %1659 = vmatprep.mubr.f32.mxu0 0.0
  %1660 = vmatmul.mubr.f32.gmra.mrb[0].mxu0 %v1021
  %v1661 = vpop.f32.mrb[0].mxu0
  %v1662 = vadd.f32 0.0, %v1661
  %v1663 = vpop.f32.mrb[0].mxu0
  %1664 = vmatprep.mubr.f32.mxu0 0.0
  %1665 = vmatmul.mubr.f32.gmra.mrb[0].mxu0 %v1022
  %v1666 = vpop.f32.mrb[0].mxu0
  %v1667 = vadd.f32 0.0, %v1666
  %v1668 = vpop.f32.mrb[0].mxu0
  %1669 = vmatprep.mubr.f32.mxu0 0.0
  %1670 = vmatmul.mubr.f32.gmra.mrb[0].mxu0 %v1023
  %v1671 = vpop.f32.mrb[0].mxu0
  %v1672 = vadd.f32 0.0, %v1671
  %v1673 = vpop.f32.mrb[0].mxu0
  %1674 = vdwg.mxu0
  %1675 = vmatprep.subr.mxu0 0.0
  %1676 = vmatpush1.msra.mxu0 %v1041
  %1677 = vmatprep.subr.mxu0 0.0
  %1678 = vmatpush1.msra.mxu0 %v1042
  %1679 = vmatprep.subr.mxu0 0.0
  %1680 = vmatpush1.msra.mxu0 %v1043
  %1681 = vmatprep.subr.mxu0 0.0
  %1682 = vmatpush1.msra.mxu0 %v1044
  %1683 = vmatprep.subr.mxu0 0.0
  %1684 = vmatpush1.msra.mxu0 %v1045
  %1685 = vmatprep.subr.mxu0 0.0
  %1686 = vmatpush1.msra.mxu0 %v1046
  %1687 = vmatprep.subr.mxu0 0.0
  %1688 = vmatpush1.msra.mxu0 %v1047
  %1689 = vmatprep.subr.mxu0 0.0
  %1690 = vmatpush1.msra.mxu0 %v1048
  %1691 = vmatprep.subr.mxu0 0.0
  %1692 = vmatpush1.msra.mxu0 %v1049
  %1693 = vmatprep.subr.mxu0 0.0
  %1694 = vmatpush1.msra.mxu0 %v1050
  %1695 = vmatprep.subr.mxu0 0.0
  %1696 = vmatpush1.msra.mxu0 %v1051
  %1697 = vmatprep.subr.mxu0 0.0
  %1698 = vmatpush1.msra.mxu0 %v1052
  %1699 = vmatprep.subr.mxu0 0.0
  %1700 = vmatpush1.msra.mxu0 %v1053
  %1701 = vmatprep.subr.mxu0 0.0
  %1702 = vmatpush1.msra.mxu0 %v1054
  %1703 = vmatprep.subr.mxu0 0.0
  %1704 = vmatpush1.msra.mxu0 %v1055
  %1705 = vmatprep.subr.mxu0 0.0
  %1706 = vmatpush1.msra.mxu0 %v1056
  %1707 = vmatprep.subr.mxu0 0.0
  %1708 = vmatpush1.msra.mxu0 0.0
  %1709 = vmatprep.subr.mxu0 0.0
  %1710 = vmatpush1.msra.mxu0 0.0
  %1711 = vmatprep.subr.mxu0 0.0
  %1712 = vmatpush1.msra.mxu0 0.0
  %1713 = vmatprep.subr.mxu0 0.0
  %1714 = vmatpush1.msra.mxu0 0.0
  %1715 = vmatprep.subr.mxu0 0.0
  %1716 = vmatpush1.msra.mxu0 0.0
  %1717 = vmatprep.subr.mxu0 0.0
  %1718 = vmatpush1.msra.mxu0 0.0
  %1719 = vmatprep.subr.mxu0 0.0
  %1720 = vmatpush1.msra.mxu0 0.0
  %1721 = vmatprep.subr.mxu0 0.0
  %1722 = vmatpush1.msra.mxu0 0.0
  %1723 = vmatprep.subr.mxu0 0.0
  %1724 = vmatpush1.msra.mxu0 0.0
  %1725 = vmatprep.subr.mxu0 0.0
  %1726 = vmatpush1.msra.mxu0 0.0
  %1727 = vmatprep.subr.mxu0 0.0
  %1728 = vmatpush1.msra.mxu0 0.0
  %1729 = vmatprep.subr.mxu0 0.0
  %1730 = vmatpush1.msra.mxu0 0.0
  %1731 = vmatprep.subr.mxu0 0.0
  %1732 = vmatpush1.msra.mxu0 0.0
  %1733 = vmatprep.subr.mxu0 0.0
  %1734 = vmatpush1.msra.mxu0 0.0
  %1735 = vmatprep.subr.mxu0 0.0
  %1736 = vmatpush1.msra.mxu0 0.0
  %1737 = vmatprep.subr.mxu0 0.0
  %1738 = vmatpush1.msra.mxu0 0.0
  %1739 = vmatprep.mubr.f32.mxu0 0.0
  %1740 = vmatmul.mubr.f32.gmra.mrb[0].mxu0 %v1514
  %v1741 = vpop.f32.mrb[0].mxu0
  %v1742 = vadd.f32 %v1597, %v1741
  %v1743 = vpop.f32.mrb[0].mxu0
  %1744 = vmatprep.mubr.f32.mxu0 0.0
  %1745 = vmatmul.mubr.f32.gmra.mrb[0].mxu0 %v1515
  %v1746 = vpop.f32.mrb[0].mxu0
  %v1747 = vadd.f32 %v1602, %v1746
  %v1748 = vpop.f32.mrb[0].mxu0
  %1749 = vmatprep.mubr.f32.mxu0 0.0
  %1750 = vmatmul.mubr.f32.gmra.mrb[0].mxu0 %v1516
  %v1751 = vpop.f32.mrb[0].mxu0
  %v1752 = vadd.f32 %v1607, %v1751
  %v1753 = vpop.f32.mrb[0].mxu0
  %1754 = vmatprep.mubr.f32.mxu0 0.0
  %1755 = vmatmul.mubr.f32.gmra.mrb[0].mxu0 %v1517
  %v1756 = vpop.f32.mrb[0].mxu0
  %v1757 = vadd.f32 %v1612, %v1756
  %v1758 = vpop.f32.mrb[0].mxu0
  %1759 = vmatprep.mubr.f32.mxu0 0.0
  %1760 = vmatmul.mubr.f32.gmra.mrb[0].mxu0 %v1518
  %v1761 = vpop.f32.mrb[0].mxu0
  %v1762 = vadd.f32 %v1617, %v1761
  %v1763 = vpop.f32.mrb[0].mxu0
  %1764 = vmatprep.mubr.f32.mxu0 0.0
  %1765 = vmatmul.mubr.f32.gmra.mrb[0].mxu0 %v1519
  %v1766 = vpop.f32.mrb[0].mxu0
  %v1767 = vadd.f32 %v1622, %v1766
  %v1768 = vpop.f32.mrb[0].mxu0
  %1769 = vmatprep.mubr.f32.mxu0 0.0
  %1770 = vmatmul.mubr.f32.gmra.mrb[0].mxu0 %v1520
  %v1771 = vpop.f32.mrb[0].mxu0
  %v1772 = vadd.f32 %v1627, %v1771
  %v1773 = vpop.f32.mrb[0].mxu0
  %1774 = vmatprep.mubr.f32.mxu0 0.0
  %1775 = vmatmul.mubr.f32.gmra.mrb[0].mxu0 %v1521
  %v1776 = vpop.f32.mrb[0].mxu0
  %v1777 = vadd.f32 %v1632, %v1776
  %v1778 = vpop.f32.mrb[0].mxu0
  %1779 = vmatprep.mubr.f32.mxu0 0.0
  %1780 = vmatmul.mubr.f32.gmra.mrb[0].mxu0 %v1522
  %v1781 = vpop.f32.mrb[0].mxu0
  %v1782 = vadd.f32 %v1637, %v1781
  %v1783 = vpop.f32.mrb[0].mxu0
  %1784 = vmatprep.mubr.f32.mxu0 0.0
  %1785 = vmatmul.mubr.f32.gmra.mrb[0].mxu0 %v1523
  %v1786 = vpop.f32.mrb[0].mxu0
  %v1787 = vadd.f32 %v1642, %v1786
  %v1788 = vpop.f32.mrb[0].mxu0
  %1789 = vmatprep.mubr.f32.mxu0 0.0
  %1790 = vmatmul.mubr.f32.gmra.mrb[0].mxu0 %v1524
  %v1791 = vpop.f32.mrb[0].mxu0
  %v1792 = vadd.f32 %v1647, %v1791
  %v1793 = vpop.f32.mrb[0].mxu0
  %1794 = vmatprep.mubr.f32.mxu0 0.0
  %1795 = vmatmul.mubr.f32.gmra.mrb[0].mxu0 %v1525
  %v1796 = vpop.f32.mrb[0].mxu0
  %v1797 = vadd.f32 %v1652, %v1796
  %v1798 = vpop.f32.mrb[0].mxu0
  %1799 = vmatprep.mubr.f32.mxu0 0.0
  %1800 = vmatmul.mubr.f32.gmra.mrb[0].mxu0 %v1526
  %v1801 = vpop.f32.mrb[0].mxu0
  %v1802 = vadd.f32 %v1657, %v1801
  %v1803 = vpop.f32.mrb[0].mxu0
  %1804 = vmatprep.mubr.f32.mxu0 0.0
  %1805 = vmatmul.mubr.f32.gmra.mrb[0].mxu0 %v1527
  %v1806 = vpop.f32.mrb[0].mxu0
  %v1807 = vadd.f32 %v1662, %v1806
  %v1808 = vpop.f32.mrb[0].mxu0
  %1809 = vmatprep.mubr.f32.mxu0 0.0
  %1810 = vmatmul.mubr.f32.gmra.mrb[0].mxu0 %v1528
  %v1811 = vpop.f32.mrb[0].mxu0
  %v1812 = vadd.f32 %v1667, %v1811
  %v1813 = vpop.f32.mrb[0].mxu0
  %1814 = vmatprep.mubr.f32.mxu0 0.0
  %1815 = vmatmul.mubr.f32.gmra.mrb[0].mxu0 %v1529
  %v1816 = vpop.f32.mrb[0].mxu0
  %v1817 = vadd.f32 %v1672, %v1816
  %v1818 = vpop.f32.mrb[0].mxu0
  %1819 = vdwg.mxu0
  %v1821 = vlaneseq
  %v1822 = vshrl.u32 %v1821, 7
  %v1823 = vsub.s32 0, %v1822
  %v1824 = vrot.slane %v1073, %v1823
  %v1826 = vadd.f32 %v1742, %v1824
  %v1827 = vadd.f32 %v1747, %v1824
  %v1828 = vadd.f32 %v1752, %v1824
  %v1829 = vadd.f32 %v1757, %v1824
  %v1830 = vadd.f32 %v1762, %v1824
  %v1831 = vadd.f32 %v1767, %v1824
  %v1832 = vadd.f32 %v1772, %v1824
  %v1833 = vadd.f32 %v1777, %v1824
  %v1834 = vadd.f32 %v1782, %v1824
  %v1835 = vadd.f32 %v1787, %v1824
  %v1836 = vadd.f32 %v1792, %v1824
  %v1837 = vadd.f32 %v1797, %v1824
  %v1838 = vadd.f32 %v1802, %v1824
  %v1839 = vadd.f32 %v1807, %v1824
  %v1840 = vadd.f32 %v1812, %v1824
  %v1841 = vadd.f32 %v1817, %v1824
  %v1842 = vmax.f32 %v1826, 0.0
  %v1843 = vmax.f32 %v1827, 0.0
  %v1844 = vmax.f32 %v1828, 0.0
  %v1845 = vmax.f32 %v1829, 0.0
  %v1846 = vmax.f32 %v1830, 0.0
  %v1847 = vmax.f32 %v1831, 0.0
  %v1848 = vmax.f32 %v1832, 0.0
  %v1849 = vmax.f32 %v1833, 0.0
  %v1850 = vmax.f32 %v1834, 0.0
  %v1851 = vmax.f32 %v1835, 0.0
  %v1852 = vmax.f32 %v1836, 0.0
  %v1853 = vmax.f32 %v1837, 0.0
  %v1854 = vmax.f32 %v1838, 0.0
  %v1855 = vmax.f32 %v1839, 0.0
  %v1856 = vmax.f32 %v1840, 0.0
  %v1857 = vmax.f32 %v1841, 0.0
  %v1858 = vmul.f32 %v1842, %v1842
  %v1859 = vmul.f32 %v1843, %v1843
  %v1860 = vmul.f32 %v1844, %v1844
  %v1861 = vmul.f32 %v1845, %v1845
  %v1862 = vmul.f32 %v1846, %v1846
  %v1863 = vmul.f32 %v1847, %v1847
  %v1864 = vmul.f32 %v1848, %v1848
  %v1865 = vmul.f32 %v1849, %v1849
  %v1866 = vmul.f32 %v1850, %v1850
  %v1867 = vmul.f32 %v1851, %v1851
  %v1868 = vmul.f32 %v1852, %v1852
  %v1869 = vmul.f32 %v1853, %v1853
  %v1870 = vmul.f32 %v1854, %v1854
  %v1871 = vmul.f32 %v1855, %v1855
  %v1872 = vmul.f32 %v1856, %v1856
  %v1873 = vmul.f32 %v1857, %v1857
  %1874 = vadd.xlane.f32.xlu0 %v1858
  %v1875 = vpop.xlane.xlu0 %1874
  %1876 = vadd.xlane.f32.xlu0 %v1859
  %v1877 = vpop.xlane.xlu0 %1876
  %1878 = vadd.xlane.f32.xlu0 %v1860
  %v1879 = vpop.xlane.xlu0 %1878
  %1880 = vadd.xlane.f32.xlu0 %v1861
  %v1881 = vpop.xlane.xlu0 %1880
  %1882 = vadd.xlane.f32.xlu0 %v1862
  %v1883 = vpop.xlane.xlu0 %1882
  %1884 = vadd.xlane.f32.xlu0 %v1863
  %v1885 = vpop.xlane.xlu0 %1884
  %1886 = vadd.xlane.f32.xlu0 %v1864
  %v1887 = vpop.xlane.xlu0 %1886
  %1888 = vadd.xlane.f32.xlu0 %v1865
  %v1889 = vpop.xlane.xlu0 %1888
  %1890 = vadd.xlane.f32.xlu0 %v1866
  %v1891 = vpop.xlane.xlu0 %1890
  %1892 = vadd.xlane.f32.xlu0 %v1867
  %v1893 = vpop.xlane.xlu0 %1892
  %1894 = vadd.xlane.f32.xlu0 %v1868
  %v1895 = vpop.xlane.xlu0 %1894
  %1896 = vadd.xlane.f32.xlu0 %v1869
  %v1897 = vpop.xlane.xlu0 %1896
  %1898 = vadd.xlane.f32.xlu0 %v1870
  %v1899 = vpop.xlane.xlu0 %1898
  %1900 = vadd.xlane.f32.xlu0 %v1871
  %v1901 = vpop.xlane.xlu0 %1900
  %1902 = vadd.xlane.f32.xlu0 %v1872
  %v1903 = vpop.xlane.xlu0 %1902
  %1904 = vadd.xlane.f32.xlu0 %v1873
  %v1905 = vpop.xlane.xlu0 %1904
  %vm1906 = vcmp.gt.f32.partialorder %v1875, 0.0
  %vm1907 = vcmp.gt.f32.partialorder %v1877, 0.0
  %vm1908 = vcmp.gt.f32.partialorder %v1879, 0.0
  %vm1909 = vcmp.gt.f32.partialorder %v1881, 0.0
  %vm1910 = vcmp.gt.f32.partialorder %v1883, 0.0
  %vm1911 = vcmp.gt.f32.partialorder %v1885, 0.0
  %vm1912 = vcmp.gt.f32.partialorder %v1887, 0.0
  %vm1913 = vcmp.gt.f32.partialorder %v1889, 0.0
  %vm1914 = vcmp.gt.f32.partialorder %v1891, 0.0
  %vm1915 = vcmp.gt.f32.partialorder %v1893, 0.0
  %vm1916 = vcmp.gt.f32.partialorder %v1895, 0.0
  %vm1917 = vcmp.gt.f32.partialorder %v1897, 0.0
  %vm1918 = vcmp.gt.f32.partialorder %v1899, 0.0
  %vm1919 = vcmp.gt.f32.partialorder %v1901, 0.0
  %vm1920 = vcmp.gt.f32.partialorder %v1903, 0.0
  %vm1921 = vcmp.gt.f32.partialorder %v1905, 0.0
  %v1922 = vrsqrt.pop %v1875
  %v1923 = vrsqrt.pop %v1877
  %v1924 = vrsqrt.pop %v1879
  %v1925 = vrsqrt.pop %v1881
  %v1926 = vrsqrt.pop %v1883
  %v1927 = vrsqrt.pop %v1885
  %v1928 = vrsqrt.pop %v1887
  %v1929 = vrsqrt.pop %v1889
  %v1930 = vrsqrt.pop %v1891
  %v1931 = vrsqrt.pop %v1893
  %v1932 = vrsqrt.pop %v1895
  %v1933 = vrsqrt.pop %v1897
  %v1934 = vrsqrt.pop %v1899
  %v1935 = vrsqrt.pop %v1901
  %v1936 = vrsqrt.pop %v1903
  %v1937 = vrsqrt.pop %v1905
  %v1938 = vsel %vm1906, %v1922, 1.0
  %v1939 = vsel %vm1907, %v1923, 1.0
  %v1940 = vsel %vm1908, %v1924, 1.0
  %v1941 = vsel %vm1909, %v1925, 1.0
  %v1942 = vsel %vm1910, %v1926, 1.0
  %v1943 = vsel %vm1911, %v1927, 1.0
  %v1944 = vsel %vm1912, %v1928, 1.0
  %v1945 = vsel %vm1913, %v1929, 1.0
  %v1946 = vsel %vm1914, %v1930, 1.0
  %v1947 = vsel %vm1915, %v1931, 1.0
  %v1948 = vsel %vm1916, %v1932, 1.0
  %v1949 = vsel %vm1917, %v1933, 1.0
  %v1950 = vsel %vm1918, %v1934, 1.0
  %v1951 = vsel %vm1919, %v1935, 1.0
  %v1952 = vsel %vm1920, %v1936, 1.0
  %v1953 = vsel %vm1921, %v1937, 1.0
  %v1954 = vmul.f32 %v1842, %v1938
  %v1955 = vmul.f32 %v1843, %v1939
  %v1956 = vmul.f32 %v1844, %v1940
  %v1957 = vmul.f32 %v1845, %v1941
  %v1958 = vmul.f32 %v1846, %v1942
  %v1959 = vmul.f32 %v1847, %v1943
  %v1960 = vmul.f32 %v1848, %v1944
  %v1961 = vmul.f32 %v1849, %v1945
  %v1962 = vmul.f32 %v1850, %v1946
  %v1963 = vmul.f32 %v1851, %v1947
  %v1964 = vmul.f32 %v1852, %v1948
  %v1965 = vmul.f32 %v1853, %v1949
  %v1966 = vmul.f32 %v1854, %v1950
  %v1967 = vmul.f32 %v1855, %v1951
  %v1968 = vmul.f32 %v1856, %v1952
  %v1969 = vmul.f32 %v1857, %v1953
  %v1970 = vld [vmem:[%s14] sm:$0xff]
  %v1971 = vld [vmem:[%s14 + $0x8] sm:$0xff]
  %v1972 = vld [vmem:[%s14 + $0x10] sm:$0xff]
  %v1973 = vld [vmem:[%s14 + $0x18] sm:$0xff]
  %v1974 = vld [vmem:[%s14 + $0x20] sm:$0xff]
  %v1975 = vld [vmem:[%s14 + $0x28] sm:$0xff]
  %v1976 = vld [vmem:[%s14 + $0x30] sm:$0xff]
  %v1977 = vld [vmem:[%s14 + $0x38] sm:$0xff]
  %v1978 = vld [vmem:[%s14 + $0x40] sm:$0xff]
  %v1979 = vld [vmem:[%s14 + $0x48] sm:$0xff]
  %v1980 = vld [vmem:[%s14 + $0x50] sm:$0xff]
  %v1981 = vld [vmem:[%s14 + $0x58] sm:$0xff]
  %v1982 = vld [vmem:[%s14 + $0x60] sm:$0xff]
  %v1983 = vld [vmem:[%s14 + $0x68] sm:$0xff]
  %v1984 = vld [vmem:[%s14 + $0x70] sm:$0xff]
  %v1985 = vld [vmem:[%s14 + $0x78] sm:$0xff]
  %v1986 = vld [vmem:[%s15] sm:$0x1]
  %v1987 = vld [vmem:[%s16] sm:$0xff]
  %v1988 = vld [vmem:[%s16 + $0x8] sm:$0xff]
  %v1989 = vld [vmem:[%s16 + $0x10] sm:$0xff]
  %v1990 = vld [vmem:[%s16 + $0x18] sm:$0xff]
  %v1991 = vld [vmem:[%s16 + $0x20] sm:$0xff]
  %v1992 = vld [vmem:[%s16 + $0x28] sm:$0xff]
  %v1993 = vld [vmem:[%s16 + $0x30] sm:$0xff]
  %v1994 = vld [vmem:[%s16 + $0x38] sm:$0xff]
  %v1995 = vld [vmem:[%s16 + $0x40] sm:$0xff]
  %v1996 = vld [vmem:[%s16 + $0x48] sm:$0xff]
  %v1997 = vld [vmem:[%s16 + $0x50] sm:$0xff]
  %v1998 = vld [vmem:[%s16 + $0x58] sm:$0xff]
  %v1999 = vld [vmem:[%s16 + $0x60] sm:$0xff]
  %v2000 = vld [vmem:[%s16 + $0x68] sm:$0xff]
  %v2001 = vld [vmem:[%s16 + $0x70] sm:$0xff]
  %v2002 = vld [vmem:[%s16 + $0x78] sm:$0xff]
  %v2003 = vld [vmem:[%s17] sm:$0xff]
  %v2004 = vld [vmem:[%s17 + $0x8] sm:$0xff]
  %v2005 = vld [vmem:[%s17 + $0x10] sm:$0xff]
  %v2006 = vld [vmem:[%s17 + $0x18] sm:$0xff]
  %v2007 = vld [vmem:[%s17 + $0x20] sm:$0xff]
  %v2008 = vld [vmem:[%s17 + $0x28] sm:$0xff]
  %v2009 = vld [vmem:[%s17 + $0x30] sm:$0xff]
  %v2010 = vld [vmem:[%s17 + $0x38] sm:$0xff]
  %v2011 = vld [vmem:[%s17 + $0x40] sm:$0xff]
  %v2012 = vld [vmem:[%s17 + $0x48] sm:$0xff]
  %v2013 = vld [vmem:[%s17 + $0x50] sm:$0xff]
  %v2014 = vld [vmem:[%s17 + $0x58] sm:$0xff]
  %v2015 = vld [vmem:[%s17 + $0x60] sm:$0xff]
  %v2016 = vld [vmem:[%s17 + $0x68] sm:$0xff]
  %v2017 = vld [vmem:[%s17 + $0x70] sm:$0xff]
  %v2018 = vld [vmem:[%s17 + $0x78] sm:$0xff]
  %v2019 = vld [vmem:[%s18] sm:$0x1]
  %v2020 = vld [vmem:[%s3] sm:$0xff]
  %v2021 = vld [vmem:[%s3 + $0x8] sm:$0xff]
  %v2022 = vld [vmem:[%s3 + $0x10] sm:$0xff]
  %v2023 = vld [vmem:[%s3 + $0x18] sm:$0xff]
  %v2024 = vld [vmem:[%s3 + $0x20] sm:$0xff]
  %v2025 = vld [vmem:[%s3 + $0x28] sm:$0xff]
  %v2026 = vld [vmem:[%s3 + $0x30] sm:$0xff]
  %v2027 = vld [vmem:[%s3 + $0x38] sm:$0xff]
  %v2028 = vld [vmem:[%s3 + $0x40] sm:$0xff]
  %v2029 = vld [vmem:[%s3 + $0x48] sm:$0xff]
  %v2030 = vld [vmem:[%s3 + $0x50] sm:$0xff]
  %v2031 = vld [vmem:[%s3 + $0x58] sm:$0xff]
  %v2032 = vld [vmem:[%s3 + $0x60] sm:$0xff]
  %v2033 = vld [vmem:[%s3 + $0x68] sm:$0xff]
  %v2034 = vld [vmem:[%s3 + $0x70] sm:$0xff]
  %v2035 = vld [vmem:[%s3 + $0x78] sm:$0xff]
  %v2037 = vlaneseq
  %v2038 = vshrl.u32 %v2037, 7
  %v2039 = vsub.s32 0, %v2038
  %v2040 = vrot.slane %v1986, %v2039
  %2042 = vmatprep.subr.mxu0 0.0
  %2043 = vmatpush1.msra.mxu0 %v1970
  %2044 = vmatprep.subr.mxu0 0.0
  %2045 = vmatpush1.msra.mxu0 %v1971
  %2046 = vmatprep.subr.mxu0 0.0
  %2047 = vmatpush1.msra.mxu0 %v1972
  %2048 = vmatprep.subr.mxu0 0.0
  %2049 = vmatpush1.msra.mxu0 %v1973
  %2050 = vmatprep.subr.mxu0 0.0
  %2051 = vmatpush1.msra.mxu0 %v1974
  %2052 = vmatprep.subr.mxu0 0.0
  %2053 = vmatpush1.msra.mxu0 %v1975
  %2054 = vmatprep.subr.mxu0 0.0
  %2055 = vmatpush1.msra.mxu0 %v1976
  %2056 = vmatprep.subr.mxu0 0.0
  %2057 = vmatpush1.msra.mxu0 %v1977
  %2058 = vmatprep.subr.mxu0 0.0
  %2059 = vmatpush1.msra.mxu0 %v1978
  %2060 = vmatprep.subr.mxu0 0.0
  %2061 = vmatpush1.msra.mxu0 %v1979
  %2062 = vmatprep.subr.mxu0 0.0
  %2063 = vmatpush1.msra.mxu0 %v1980
  %2064 = vmatprep.subr.mxu0 0.0
  %2065 = vmatpush1.msra.mxu0 %v1981
  %2066 = vmatprep.subr.mxu0 0.0
  %2067 = vmatpush1.msra.mxu0 %v1982
  %2068 = vmatprep.subr.mxu0 0.0
  %2069 = vmatpush1.msra.mxu0 %v1983
  %2070 = vmatprep.subr.mxu0 0.0
  %2071 = vmatpush1.msra.mxu0 %v1984
  %2072 = vmatprep.subr.mxu0 0.0
  %2073 = vmatpush1.msra.mxu0 %v1985
  %2074 = vmatprep.subr.mxu0 0.0
  %2075 = vmatpush1.msra.mxu0 0.0
  %2076 = vmatprep.subr.mxu0 0.0
  %2077 = vmatpush1.msra.mxu0 0.0
  %2078 = vmatprep.subr.mxu0 0.0
  %2079 = vmatpush1.msra.mxu0 0.0
  %2080 = vmatprep.subr.mxu0 0.0
  %2081 = vmatpush1.msra.mxu0 0.0
  %2082 = vmatprep.subr.mxu0 0.0
  %2083 = vmatpush1.msra.mxu0 0.0
  %2084 = vmatprep.subr.mxu0 0.0
  %2085 = vmatpush1.msra.mxu0 0.0
  %2086 = vmatprep.subr.mxu0 0.0
  %2087 = vmatpush1.msra.mxu0 0.0
  %2088 = vmatprep.subr.mxu0 0.0
  %2089 = vmatpush1.msra.mxu0 0.0
  %2090 = vmatprep.subr.mxu0 0.0
  %2091 = vmatpush1.msra.mxu0 0.0
  %2092 = vmatprep.subr.mxu0 0.0
  %2093 = vmatpush1.msra.mxu0 0.0
  %2094 = vmatprep.subr.mxu0 0.0
  %2095 = vmatpush1.msra.mxu0 0.0
  %2096 = vmatprep.subr.mxu0 0.0
  %2097 = vmatpush1.msra.mxu0 0.0
  %2098 = vmatprep.subr.mxu0 0.0
  %2099 = vmatpush1.msra.mxu0 0.0
  %2100 = vmatprep.subr.mxu0 0.0
  %2101 = vmatpush1.msra.mxu0 0.0
  %2102 = vmatprep.subr.mxu0 0.0
  %2103 = vmatpush1.msra.mxu0 0.0
  %2104 = vmatprep.subr.mxu0 0.0
  %2105 = vmatpush1.msra.mxu0 0.0
  %2106 = vmatprep.mubr.f32.mxu0 0.0
  %2107 = vmatmul.mubr.f32.gmra.mrb[0].mxu0 %v1954
  %v2108 = vpop.f32.mrb[0].mxu0
  %v2109 = vadd.f32 %v2040, %v2108
  %v2110 = vpop.f32.mrb[0].mxu0
  %2111 = vmatprep.mubr.f32.mxu0 0.0
  %2112 = vmatmul.mubr.f32.gmra.mrb[0].mxu0 %v1955
  %v2113 = vpop.f32.mrb[0].mxu0
  %v2114 = vadd.f32 %v2040, %v2113
  %v2115 = vpop.f32.mrb[0].mxu0
  %2116 = vmatprep.mubr.f32.mxu0 0.0
  %2117 = vmatmul.mubr.f32.gmra.mrb[0].mxu0 %v1956
  %v2118 = vpop.f32.mrb[0].mxu0
  %v2119 = vadd.f32 %v2040, %v2118
  %v2120 = vpop.f32.mrb[0].mxu0
  %2121 = vmatprep.mubr.f32.mxu0 0.0
  %2122 = vmatmul.mubr.f32.gmra.mrb[0].mxu0 %v1957
  %v2123 = vpop.f32.mrb[0].mxu0
  %v2124 = vadd.f32 %v2040, %v2123
  %v2125 = vpop.f32.mrb[0].mxu0
  %2126 = vmatprep.mubr.f32.mxu0 0.0
  %2127 = vmatmul.mubr.f32.gmra.mrb[0].mxu0 %v1958
  %v2128 = vpop.f32.mrb[0].mxu0
  %v2129 = vadd.f32 %v2040, %v2128
  %v2130 = vpop.f32.mrb[0].mxu0
  %2131 = vmatprep.mubr.f32.mxu0 0.0
  %2132 = vmatmul.mubr.f32.gmra.mrb[0].mxu0 %v1959
  %v2133 = vpop.f32.mrb[0].mxu0
  %v2134 = vadd.f32 %v2040, %v2133
  %v2135 = vpop.f32.mrb[0].mxu0
  %2136 = vmatprep.mubr.f32.mxu0 0.0
  %2137 = vmatmul.mubr.f32.gmra.mrb[0].mxu0 %v1960
  %v2138 = vpop.f32.mrb[0].mxu0
  %v2139 = vadd.f32 %v2040, %v2138
  %v2140 = vpop.f32.mrb[0].mxu0
  %2141 = vmatprep.mubr.f32.mxu0 0.0
  %2142 = vmatmul.mubr.f32.gmra.mrb[0].mxu0 %v1961
  %v2143 = vpop.f32.mrb[0].mxu0
  %v2144 = vadd.f32 %v2040, %v2143
  %v2145 = vpop.f32.mrb[0].mxu0
  %2146 = vmatprep.mubr.f32.mxu0 0.0
  %2147 = vmatmul.mubr.f32.gmra.mrb[0].mxu0 %v1962
  %v2148 = vpop.f32.mrb[0].mxu0
  %v2149 = vadd.f32 %v2040, %v2148
  %v2150 = vpop.f32.mrb[0].mxu0
  %2151 = vmatprep.mubr.f32.mxu0 0.0
  %2152 = vmatmul.mubr.f32.gmra.mrb[0].mxu0 %v1963
  %v2153 = vpop.f32.mrb[0].mxu0
  %v2154 = vadd.f32 %v2040, %v2153
  %v2155 = vpop.f32.mrb[0].mxu0
  %2156 = vmatprep.mubr.f32.mxu0 0.0
  %2157 = vmatmul.mubr.f32.gmra.mrb[0].mxu0 %v1964
  %v2158 = vpop.f32.mrb[0].mxu0
  %v2159 = vadd.f32 %v2040, %v2158
  %v2160 = vpop.f32.mrb[0].mxu0
  %2161 = vmatprep.mubr.f32.mxu0 0.0
  %2162 = vmatmul.mubr.f32.gmra.mrb[0].mxu0 %v1965
  %v2163 = vpop.f32.mrb[0].mxu0
  %v2164 = vadd.f32 %v2040, %v2163
  %v2165 = vpop.f32.mrb[0].mxu0
  %2166 = vmatprep.mubr.f32.mxu0 0.0
  %2167 = vmatmul.mubr.f32.gmra.mrb[0].mxu0 %v1966
  %v2168 = vpop.f32.mrb[0].mxu0
  %v2169 = vadd.f32 %v2040, %v2168
  %v2170 = vpop.f32.mrb[0].mxu0
  %2171 = vmatprep.mubr.f32.mxu0 0.0
  %2172 = vmatmul.mubr.f32.gmra.mrb[0].mxu0 %v1967
  %v2173 = vpop.f32.mrb[0].mxu0
  %v2174 = vadd.f32 %v2040, %v2173
  %v2175 = vpop.f32.mrb[0].mxu0
  %2176 = vmatprep.mubr.f32.mxu0 0.0
  %2177 = vmatmul.mubr.f32.gmra.mrb[0].mxu0 %v1968
  %v2178 = vpop.f32.mrb[0].mxu0
  %v2179 = vadd.f32 %v2040, %v2178
  %v2180 = vpop.f32.mrb[0].mxu0
  %2181 = vmatprep.mubr.f32.mxu0 0.0
  %2182 = vmatmul.mubr.f32.gmra.mrb[0].mxu0 %v1969
  %v2183 = vpop.f32.mrb[0].mxu0
  %v2184 = vadd.f32 %v2040, %v2183
  %v2185 = vpop.f32.mrb[0].mxu0
  %2186 = vdwg.mxu0
  %v2187 = vmax.f32 %v2109, 0.0
  %v2188 = vmax.f32 %v2114, 0.0
  %v2189 = vmax.f32 %v2119, 0.0
  %v2190 = vmax.f32 %v2124, 0.0
  %v2191 = vmax.f32 %v2129, 0.0
  %v2192 = vmax.f32 %v2134, 0.0
  %v2193 = vmax.f32 %v2139, 0.0
  %v2194 = vmax.f32 %v2144, 0.0
  %v2195 = vmax.f32 %v2149, 0.0
  %v2196 = vmax.f32 %v2154, 0.0
  %v2197 = vmax.f32 %v2159, 0.0
  %v2198 = vmax.f32 %v2164, 0.0
  %v2199 = vmax.f32 %v2169, 0.0
  %v2200 = vmax.f32 %v2174, 0.0
  %v2201 = vmax.f32 %v2179, 0.0
  %v2202 = vmax.f32 %v2184, 0.0
  %2203 = vmatprep.subr.mxu0 0.0
  %2204 = vmatpush1.msra.mxu0 %v2187
  %2205 = vmatprep.subr.mxu0 0.0
  %2206 = vmatpush1.msra.mxu0 %v2188
  %2207 = vmatprep.subr.mxu0 0.0
  %2208 = vmatpush1.msra.mxu0 %v2189
  %2209 = vmatprep.subr.mxu0 0.0
  %2210 = vmatpush1.msra.mxu0 %v2190
  %2211 = vmatprep.subr.mxu0 0.0
  %2212 = vmatpush1.msra.mxu0 %v2191
  %2213 = vmatprep.subr.mxu0 0.0
  %2214 = vmatpush1.msra.mxu0 %v2192
  %2215 = vmatprep.subr.mxu0 0.0
  %2216 = vmatpush1.msra.mxu0 %v2193
  %2217 = vmatprep.subr.mxu0 0.0
  %2218 = vmatpush1.msra.mxu0 %v2194
  %2219 = vmatprep.subr.mxu0 0.0
  %2220 = vmatpush1.msra.mxu0 %v2195
  %2221 = vmatprep.subr.mxu0 0.0
  %2222 = vmatpush1.msra.mxu0 %v2196
  %2223 = vmatprep.subr.mxu0 0.0
  %2224 = vmatpush1.msra.mxu0 %v2197
  %2225 = vmatprep.subr.mxu0 0.0
  %2226 = vmatpush1.msra.mxu0 %v2198
  %2227 = vmatprep.subr.mxu0 0.0
  %2228 = vmatpush1.msra.mxu0 %v2199
  %2229 = vmatprep.subr.mxu0 0.0
  %2230 = vmatpush1.msra.mxu0 %v2200
  %2231 = vmatprep.subr.mxu0 0.0
  %2232 = vmatpush1.msra.mxu0 %v2201
  %2233 = vmatprep.subr.mxu0 0.0
  %2234 = vmatpush1.msra.mxu0 %v2202
  %2235 = vmatprep.subr.mxu0 0.0
  %2236 = vmatpush1.msra.mxu0 0.0
  %2237 = vmatprep.subr.mxu0 0.0
  %2238 = vmatpush1.msra.mxu0 0.0
  %2239 = vmatprep.subr.mxu0 0.0
  %2240 = vmatpush1.msra.mxu0 0.0
  %2241 = vmatprep.subr.mxu0 0.0
  %2242 = vmatpush1.msra.mxu0 0.0
  %2243 = vmatprep.subr.mxu0 0.0
  %2244 = vmatpush1.msra.mxu0 0.0
  %2245 = vmatprep.subr.mxu0 0.0
  %2246 = vmatpush1.msra.mxu0 0.0
  %2247 = vmatprep.subr.mxu0 0.0
  %2248 = vmatpush1.msra.mxu0 0.0
  %2249 = vmatprep.subr.mxu0 0.0
  %2250 = vmatpush1.msra.mxu0 0.0
  %2251 = vmatprep.subr.mxu0 0.0
  %2252 = vmatpush1.msra.mxu0 0.0
  %2253 = vmatprep.subr.mxu0 0.0
  %2254 = vmatpush1.msra.mxu0 0.0
  %2255 = vmatprep.subr.mxu0 0.0
  %2256 = vmatpush1.msra.mxu0 0.0
  %2257 = vmatprep.subr.mxu0 0.0
  %2258 = vmatpush1.msra.mxu0 0.0
  %2259 = vmatprep.subr.mxu0 0.0
  %2260 = vmatpush1.msra.mxu0 0.0
  %2261 = vmatprep.subr.mxu0 0.0
  %2262 = vmatpush1.msra.mxu0 0.0
  %2263 = vmatprep.subr.mxu0 0.0
  %2264 = vmatpush1.msra.mxu0 0.0
  %2265 = vmatprep.subr.mxu0 0.0
  %2266 = vmatpush1.msra.mxu0 0.0
  %2267 = vmatprep.mubr.f32.mxu0 0.0
  %2268 = vmatmul.mubr.f32.gmra.mrb[0].mxu0 %v2020
  %v2269 = vpop.f32.mrb[0].mxu0
  %v2270 = vadd.f32 0.0, %v2269
  %v2271 = vpop.f32.mrb[0].mxu0
  %2272 = vmatprep.mubr.f32.mxu0 0.0
  %2273 = vmatmul.mubr.f32.gmra.mrb[0].mxu0 %v2021
  %v2274 = vpop.f32.mrb[0].mxu0
  %v2275 = vadd.f32 0.0, %v2274
  %v2276 = vpop.f32.mrb[0].mxu0
  %2277 = vmatprep.mubr.f32.mxu0 0.0
  %2278 = vmatmul.mubr.f32.gmra.mrb[0].mxu0 %v2022
  %v2279 = vpop.f32.mrb[0].mxu0
  %v2280 = vadd.f32 0.0, %v2279
  %v2281 = vpop.f32.mrb[0].mxu0
  %2282 = vmatprep.mubr.f32.mxu0 0.0
  %2283 = vmatmul.mubr.f32.gmra.mrb[0].mxu0 %v2023
  %v2284 = vpop.f32.mrb[0].mxu0
  %v2285 = vadd.f32 0.0, %v2284
  %v2286 = vpop.f32.mrb[0].mxu0
  %2287 = vmatprep.mubr.f32.mxu0 0.0
  %2288 = vmatmul.mubr.f32.gmra.mrb[0].mxu0 %v2024
  %v2289 = vpop.f32.mrb[0].mxu0
  %v2290 = vadd.f32 0.0, %v2289
  %v2291 = vpop.f32.mrb[0].mxu0
  %2292 = vmatprep.mubr.f32.mxu0 0.0
  %2293 = vmatmul.mubr.f32.gmra.mrb[0].mxu0 %v2025
  %v2294 = vpop.f32.mrb[0].mxu0
  %v2295 = vadd.f32 0.0, %v2294
  %v2296 = vpop.f32.mrb[0].mxu0
  %2297 = vmatprep.mubr.f32.mxu0 0.0
  %2298 = vmatmul.mubr.f32.gmra.mrb[0].mxu0 %v2026
  %v2299 = vpop.f32.mrb[0].mxu0
  %v2300 = vadd.f32 0.0, %v2299
  %v2301 = vpop.f32.mrb[0].mxu0
  %2302 = vmatprep.mubr.f32.mxu0 0.0
  %2303 = vmatmul.mubr.f32.gmra.mrb[0].mxu0 %v2027
  %v2304 = vpop.f32.mrb[0].mxu0
  %v2305 = vadd.f32 0.0, %v2304
  %v2306 = vpop.f32.mrb[0].mxu0
  %2307 = vmatprep.mubr.f32.mxu0 0.0
  %2308 = vmatmul.mubr.f32.gmra.mrb[0].mxu0 %v2028
  %v2309 = vpop.f32.mrb[0].mxu0
  %v2310 = vadd.f32 0.0, %v2309
  %v2311 = vpop.f32.mrb[0].mxu0
  %2312 = vmatprep.mubr.f32.mxu0 0.0
  %2313 = vmatmul.mubr.f32.gmra.mrb[0].mxu0 %v2029
  %v2314 = vpop.f32.mrb[0].mxu0
  %v2315 = vadd.f32 0.0, %v2314
  %v2316 = vpop.f32.mrb[0].mxu0
  %2317 = vmatprep.mubr.f32.mxu0 0.0
  %2318 = vmatmul.mubr.f32.gmra.mrb[0].mxu0 %v2030
  %v2319 = vpop.f32.mrb[0].mxu0
  %v2320 = vadd.f32 0.0, %v2319
  %v2321 = vpop.f32.mrb[0].mxu0
  %2322 = vmatprep.mubr.f32.mxu0 0.0
  %2323 = vmatmul.mubr.f32.gmra.mrb[0].mxu0 %v2031
  %v2324 = vpop.f32.mrb[0].mxu0
  %v2325 = vadd.f32 0.0, %v2324
  %v2326 = vpop.f32.mrb[0].mxu0
  %2327 = vmatprep.mubr.f32.mxu0 0.0
  %2328 = vmatmul.mubr.f32.gmra.mrb[0].mxu0 %v2032
  %v2329 = vpop.f32.mrb[0].mxu0
  %v2330 = vadd.f32 0.0, %v2329
  %v2331 = vpop.f32.mrb[0].mxu0
  %2332 = vmatprep.mubr.f32.mxu0 0.0
  %2333 = vmatmul.mubr.f32.gmra.mrb[0].mxu0 %v2033
  %v2334 = vpop.f32.mrb[0].mxu0
  %v2335 = vadd.f32 0.0, %v2334
  %v2336 = vpop.f32.mrb[0].mxu0
  %2337 = vmatprep.mubr.f32.mxu0 0.0
  %2338 = vmatmul.mubr.f32.gmra.mrb[0].mxu0 %v2034
  %v2339 = vpop.f32.mrb[0].mxu0
  %v2340 = vadd.f32 0.0, %v2339
  %v2341 = vpop.f32.mrb[0].mxu0
  %2342 = vmatprep.mubr.f32.mxu0 0.0
  %2343 = vmatmul.mubr.f32.gmra.mrb[0].mxu0 %v2035
  %v2344 = vpop.f32.mrb[0].mxu0
  %v2345 = vadd.f32 0.0, %v2344
  %v2346 = vpop.f32.mrb[0].mxu0
  %2347 = vdwg.mxu0
  %v2348 = vmax.f32 %v2270, 1.0
  %v2349 = vmax.f32 %v2275, 1.0
  %v2350 = vmax.f32 %v2280, 1.0
  %v2351 = vmax.f32 %v2285, 1.0
  %v2352 = vmax.f32 %v2290, 1.0
  %v2353 = vmax.f32 %v2295, 1.0
  %v2354 = vmax.f32 %v2300, 1.0
  %v2355 = vmax.f32 %v2305, 1.0
  %v2356 = vmax.f32 %v2310, 1.0
  %v2357 = vmax.f32 %v2315, 1.0
  %v2358 = vmax.f32 %v2320, 1.0
  %v2359 = vmax.f32 %v2325, 1.0
  %v2360 = vmax.f32 %v2330, 1.0
  %v2361 = vmax.f32 %v2335, 1.0
  %v2362 = vmax.f32 %v2340, 1.0
  %v2363 = vmax.f32 %v2345, 1.0
  %v2364 = vrcp.pop %v2348
  %v2365 = vrcp.pop %v2349
  %v2366 = vrcp.pop %v2350
  %v2367 = vrcp.pop %v2351
  %v2368 = vrcp.pop %v2352
  %v2369 = vrcp.pop %v2353
  %v2370 = vrcp.pop %v2354
  %v2371 = vrcp.pop %v2355
  %v2372 = vrcp.pop %v2356
  %v2373 = vrcp.pop %v2357
  %v2374 = vrcp.pop %v2358
  %v2375 = vrcp.pop %v2359
  %v2376 = vrcp.pop %v2360
  %v2377 = vrcp.pop %v2361
  %v2378 = vrcp.pop %v2362
  %v2379 = vrcp.pop %v2363
  %2381 = vset.pattern.permute.xlu0 127
  %2382 = vperm.xlu0 %2381, %v2364
  %v2383 = vpop.permute.xlu0 %2382
  %2386 = vset.pattern.permute.xlu0 127
  %2387 = vperm.xlu0 %2386, %v2365
  %v2388 = vpop.permute.xlu0 %2387
  %2391 = vset.pattern.permute.xlu0 127
  %2392 = vperm.xlu0 %2391, %v2366
  %v2393 = vpop.permute.xlu0 %2392
  %2396 = vset.pattern.permute.xlu0 127
  %2397 = vperm.xlu0 %2396, %v2367
  %v2398 = vpop.permute.xlu0 %2397
  %2401 = vset.pattern.permute.xlu0 127
  %2402 = vperm.xlu0 %2401, %v2368
  %v2403 = vpop.permute.xlu0 %2402
  %2406 = vset.pattern.permute.xlu0 127
  %2407 = vperm.xlu0 %2406, %v2369
  %v2408 = vpop.permute.xlu0 %2407
  %2411 = vset.pattern.permute.xlu0 127
  %2412 = vperm.xlu0 %2411, %v2370
  %v2413 = vpop.permute.xlu0 %2412
  %2416 = vset.pattern.permute.xlu0 127
  %2417 = vperm.xlu0 %2416, %v2371
  %v2418 = vpop.permute.xlu0 %2417
  %2421 = vset.pattern.permute.xlu0 127
  %2422 = vperm.xlu0 %2421, %v2372
  %v2423 = vpop.permute.xlu0 %2422
  %2426 = vset.pattern.permute.xlu0 127
  %2427 = vperm.xlu0 %2426, %v2373
  %v2428 = vpop.permute.xlu0 %2427
  %2431 = vset.pattern.permute.xlu0 127
  %2432 = vperm.xlu0 %2431, %v2374
  %v2433 = vpop.permute.xlu0 %2432
  %2436 = vset.pattern.permute.xlu0 127
  %2437 = vperm.xlu0 %2436, %v2375
  %v2438 = vpop.permute.xlu0 %2437
  %2441 = vset.pattern.permute.xlu0 127
  %2442 = vperm.xlu0 %2441, %v2376
  %v2443 = vpop.permute.xlu0 %2442
  %2446 = vset.pattern.permute.xlu0 127
  %2447 = vperm.xlu0 %2446, %v2377
  %v2448 = vpop.permute.xlu0 %2447
  %2451 = vset.pattern.permute.xlu0 127
  %2452 = vperm.xlu0 %2451, %v2378
  %v2453 = vpop.permute.xlu0 %2452
  %2456 = vset.pattern.permute.xlu0 127
  %2457 = vperm.xlu0 %2456, %v2379
  %v2458 = vpop.permute.xlu0 %2457
  %v2460 = vmul.f32 %v2270, %v2383
  %v2461 = vmul.f32 %v2275, %v2388
  %v2462 = vmul.f32 %v2280, %v2393
  %v2463 = vmul.f32 %v2285, %v2398
  %v2464 = vmul.f32 %v2290, %v2403
  %v2465 = vmul.f32 %v2295, %v2408
  %v2466 = vmul.f32 %v2300, %v2413
  %v2467 = vmul.f32 %v2305, %v2418
  %v2468 = vmul.f32 %v2310, %v2423
  %v2469 = vmul.f32 %v2315, %v2428
  %v2470 = vmul.f32 %v2320, %v2433
  %v2471 = vmul.f32 %v2325, %v2438
  %v2472 = vmul.f32 %v2330, %v2443
  %v2473 = vmul.f32 %v2335, %v2448
  %v2474 = vmul.f32 %v2340, %v2453
  %v2475 = vmul.f32 %v2345, %v2458
  %2476 = vmatprep.subr.mxu0 0.0
  %2477 = vmatpush1.msra.mxu0 %v2003
  %2478 = vmatprep.subr.mxu0 0.0
  %2479 = vmatpush1.msra.mxu0 %v2004
  %2480 = vmatprep.subr.mxu0 0.0
  %2481 = vmatpush1.msra.mxu0 %v2005
  %2482 = vmatprep.subr.mxu0 0.0
  %2483 = vmatpush1.msra.mxu0 %v2006
  %2484 = vmatprep.subr.mxu0 0.0
  %2485 = vmatpush1.msra.mxu0 %v2007
  %2486 = vmatprep.subr.mxu0 0.0
  %2487 = vmatpush1.msra.mxu0 %v2008
  %2488 = vmatprep.subr.mxu0 0.0
  %2489 = vmatpush1.msra.mxu0 %v2009
  %2490 = vmatprep.subr.mxu0 0.0
  %2491 = vmatpush1.msra.mxu0 %v2010
  %2492 = vmatprep.subr.mxu0 0.0
  %2493 = vmatpush1.msra.mxu0 %v2011
  %2494 = vmatprep.subr.mxu0 0.0
  %2495 = vmatpush1.msra.mxu0 %v2012
  %2496 = vmatprep.subr.mxu0 0.0
  %2497 = vmatpush1.msra.mxu0 %v2013
  %2498 = vmatprep.subr.mxu0 0.0
  %2499 = vmatpush1.msra.mxu0 %v2014
  %2500 = vmatprep.subr.mxu0 0.0
  %2501 = vmatpush1.msra.mxu0 %v2015
  %2502 = vmatprep.subr.mxu0 0.0
  %2503 = vmatpush1.msra.mxu0 %v2016
  %2504 = vmatprep.subr.mxu0 0.0
  %2505 = vmatpush1.msra.mxu0 %v2017
  %2506 = vmatprep.subr.mxu0 0.0
  %2507 = vmatpush1.msra.mxu0 %v2018
  %2508 = vmatprep.subr.mxu0 0.0
  %2509 = vmatpush1.msra.mxu0 0.0
  %2510 = vmatprep.subr.mxu0 0.0
  %2511 = vmatpush1.msra.mxu0 0.0
  %2512 = vmatprep.subr.mxu0 0.0
  %2513 = vmatpush1.msra.mxu0 0.0
  %2514 = vmatprep.subr.mxu0 0.0
  %2515 = vmatpush1.msra.mxu0 0.0
  %2516 = vmatprep.subr.mxu0 0.0
  %2517 = vmatpush1.msra.mxu0 0.0
  %2518 = vmatprep.subr.mxu0 0.0
  %2519 = vmatpush1.msra.mxu0 0.0
  %2520 = vmatprep.subr.mxu0 0.0
  %2521 = vmatpush1.msra.mxu0 0.0
  %2522 = vmatprep.subr.mxu0 0.0
  %2523 = vmatpush1.msra.mxu0 0.0
  %2524 = vmatprep.subr.mxu0 0.0
  %2525 = vmatpush1.msra.mxu0 0.0
  %2526 = vmatprep.subr.mxu0 0.0
  %2527 = vmatpush1.msra.mxu0 0.0
  %2528 = vmatprep.subr.mxu0 0.0
  %2529 = vmatpush1.msra.mxu0 0.0
  %2530 = vmatprep.subr.mxu0 0.0
  %2531 = vmatpush1.msra.mxu0 0.0
  %2532 = vmatprep.subr.mxu0 0.0
  %2533 = vmatpush1.msra.mxu0 0.0
  %2534 = vmatprep.subr.mxu0 0.0
  %2535 = vmatpush1.msra.mxu0 0.0
  %2536 = vmatprep.subr.mxu0 0.0
  %2537 = vmatpush1.msra.mxu0 0.0
  %2538 = vmatprep.subr.mxu0 0.0
  %2539 = vmatpush1.msra.mxu0 0.0
  %2540 = vmatprep.mubr.f32.mxu0 0.0
  %2541 = vmatmul.mubr.f32.gmra.mrb[0].mxu0 %v1954
  %v2542 = vpop.f32.mrb[0].mxu0
  %v2543 = vadd.f32 0.0, %v2542
  %v2544 = vpop.f32.mrb[0].mxu0
  %2545 = vmatprep.mubr.f32.mxu0 0.0
  %2546 = vmatmul.mubr.f32.gmra.mrb[0].mxu0 %v1955
  %v2547 = vpop.f32.mrb[0].mxu0
  %v2548 = vadd.f32 0.0, %v2547
  %v2549 = vpop.f32.mrb[0].mxu0
  %2550 = vmatprep.mubr.f32.mxu0 0.0
  %2551 = vmatmul.mubr.f32.gmra.mrb[0].mxu0 %v1956
  %v2552 = vpop.f32.mrb[0].mxu0
  %v2553 = vadd.f32 0.0, %v2552
  %v2554 = vpop.f32.mrb[0].mxu0
  %2555 = vmatprep.mubr.f32.mxu0 0.0
  %2556 = vmatmul.mubr.f32.gmra.mrb[0].mxu0 %v1957
  %v2557 = vpop.f32.mrb[0].mxu0
  %v2558 = vadd.f32 0.0, %v2557
  %v2559 = vpop.f32.mrb[0].mxu0
  %2560 = vmatprep.mubr.f32.mxu0 0.0
  %2561 = vmatmul.mubr.f32.gmra.mrb[0].mxu0 %v1958
  %v2562 = vpop.f32.mrb[0].mxu0
  %v2563 = vadd.f32 0.0, %v2562
  %v2564 = vpop.f32.mrb[0].mxu0
  %2565 = vmatprep.mubr.f32.mxu0 0.0
  %2566 = vmatmul.mubr.f32.gmra.mrb[0].mxu0 %v1959
  %v2567 = vpop.f32.mrb[0].mxu0
  %v2568 = vadd.f32 0.0, %v2567
  %v2569 = vpop.f32.mrb[0].mxu0
  %2570 = vmatprep.mubr.f32.mxu0 0.0
  %2571 = vmatmul.mubr.f32.gmra.mrb[0].mxu0 %v1960
  %v2572 = vpop.f32.mrb[0].mxu0
  %v2573 = vadd.f32 0.0, %v2572
  %v2574 = vpop.f32.mrb[0].mxu0
  %2575 = vmatprep.mubr.f32.mxu0 0.0
  %2576 = vmatmul.mubr.f32.gmra.mrb[0].mxu0 %v1961
  %v2577 = vpop.f32.mrb[0].mxu0
  %v2578 = vadd.f32 0.0, %v2577
  %v2579 = vpop.f32.mrb[0].mxu0
  %2580 = vmatprep.mubr.f32.mxu0 0.0
  %2581 = vmatmul.mubr.f32.gmra.mrb[0].mxu0 %v1962
  %v2582 = vpop.f32.mrb[0].mxu0
  %v2583 = vadd.f32 0.0, %v2582
  %v2584 = vpop.f32.mrb[0].mxu0
  %2585 = vmatprep.mubr.f32.mxu0 0.0
  %2586 = vmatmul.mubr.f32.gmra.mrb[0].mxu0 %v1963
  %v2587 = vpop.f32.mrb[0].mxu0
  %v2588 = vadd.f32 0.0, %v2587
  %v2589 = vpop.f32.mrb[0].mxu0
  %2590 = vmatprep.mubr.f32.mxu0 0.0
  %2591 = vmatmul.mubr.f32.gmra.mrb[0].mxu0 %v1964
  %v2592 = vpop.f32.mrb[0].mxu0
  %v2593 = vadd.f32 0.0, %v2592
  %v2594 = vpop.f32.mrb[0].mxu0
  %2595 = vmatprep.mubr.f32.mxu0 0.0
  %2596 = vmatmul.mubr.f32.gmra.mrb[0].mxu0 %v1965
  %v2597 = vpop.f32.mrb[0].mxu0
  %v2598 = vadd.f32 0.0, %v2597
  %v2599 = vpop.f32.mrb[0].mxu0
  %2600 = vmatprep.mubr.f32.mxu0 0.0
  %2601 = vmatmul.mubr.f32.gmra.mrb[0].mxu0 %v1966
  %v2602 = vpop.f32.mrb[0].mxu0
  %v2603 = vadd.f32 0.0, %v2602
  %v2604 = vpop.f32.mrb[0].mxu0
  %2605 = vmatprep.mubr.f32.mxu0 0.0
  %2606 = vmatmul.mubr.f32.gmra.mrb[0].mxu0 %v1967
  %v2607 = vpop.f32.mrb[0].mxu0
  %v2608 = vadd.f32 0.0, %v2607
  %v2609 = vpop.f32.mrb[0].mxu0
  %2610 = vmatprep.mubr.f32.mxu0 0.0
  %2611 = vmatmul.mubr.f32.gmra.mrb[0].mxu0 %v1968
  %v2612 = vpop.f32.mrb[0].mxu0
  %v2613 = vadd.f32 0.0, %v2612
  %v2614 = vpop.f32.mrb[0].mxu0
  %2615 = vmatprep.mubr.f32.mxu0 0.0
  %2616 = vmatmul.mubr.f32.gmra.mrb[0].mxu0 %v1969
  %v2617 = vpop.f32.mrb[0].mxu0
  %v2618 = vadd.f32 0.0, %v2617
  %v2619 = vpop.f32.mrb[0].mxu0
  %2620 = vdwg.mxu0
  %2621 = vmatprep.subr.mxu0 0.0
  %2622 = vmatpush1.msra.mxu0 %v1987
  %2623 = vmatprep.subr.mxu0 0.0
  %2624 = vmatpush1.msra.mxu0 %v1988
  %2625 = vmatprep.subr.mxu0 0.0
  %2626 = vmatpush1.msra.mxu0 %v1989
  %2627 = vmatprep.subr.mxu0 0.0
  %2628 = vmatpush1.msra.mxu0 %v1990
  %2629 = vmatprep.subr.mxu0 0.0
  %2630 = vmatpush1.msra.mxu0 %v1991
  %2631 = vmatprep.subr.mxu0 0.0
  %2632 = vmatpush1.msra.mxu0 %v1992
  %2633 = vmatprep.subr.mxu0 0.0
  %2634 = vmatpush1.msra.mxu0 %v1993
  %2635 = vmatprep.subr.mxu0 0.0
  %2636 = vmatpush1.msra.mxu0 %v1994
  %2637 = vmatprep.subr.mxu0 0.0
  %2638 = vmatpush1.msra.mxu0 %v1995
  %2639 = vmatprep.subr.mxu0 0.0
  %2640 = vmatpush1.msra.mxu0 %v1996
  %2641 = vmatprep.subr.mxu0 0.0
  %2642 = vmatpush1.msra.mxu0 %v1997
  %2643 = vmatprep.subr.mxu0 0.0
  %2644 = vmatpush1.msra.mxu0 %v1998
  %2645 = vmatprep.subr.mxu0 0.0
  %2646 = vmatpush1.msra.mxu0 %v1999
  %2647 = vmatprep.subr.mxu0 0.0
  %2648 = vmatpush1.msra.mxu0 %v2000
  %2649 = vmatprep.subr.mxu0 0.0
  %2650 = vmatpush1.msra.mxu0 %v2001
  %2651 = vmatprep.subr.mxu0 0.0
  %2652 = vmatpush1.msra.mxu0 %v2002
  %2653 = vmatprep.subr.mxu0 0.0
  %2654 = vmatpush1.msra.mxu0 0.0
  %2655 = vmatprep.subr.mxu0 0.0
  %2656 = vmatpush1.msra.mxu0 0.0
  %2657 = vmatprep.subr.mxu0 0.0
  %2658 = vmatpush1.msra.mxu0 0.0
  %2659 = vmatprep.subr.mxu0 0.0
  %2660 = vmatpush1.msra.mxu0 0.0
  %2661 = vmatprep.subr.mxu0 0.0
  %2662 = vmatpush1.msra.mxu0 0.0
  %2663 = vmatprep.subr.mxu0 0.0
  %2664 = vmatpush1.msra.mxu0 0.0
  %2665 = vmatprep.subr.mxu0 0.0
  %2666 = vmatpush1.msra.mxu0 0.0
  %2667 = vmatprep.subr.mxu0 0.0
  %2668 = vmatpush1.msra.mxu0 0.0
  %2669 = vmatprep.subr.mxu0 0.0
  %2670 = vmatpush1.msra.mxu0 0.0
  %2671 = vmatprep.subr.mxu0 0.0
  %2672 = vmatpush1.msra.mxu0 0.0
  %2673 = vmatprep.subr.mxu0 0.0
  %2674 = vmatpush1.msra.mxu0 0.0
  %2675 = vmatprep.subr.mxu0 0.0
  %2676 = vmatpush1.msra.mxu0 0.0
  %2677 = vmatprep.subr.mxu0 0.0
  %2678 = vmatpush1.msra.mxu0 0.0
  %2679 = vmatprep.subr.mxu0 0.0
  %2680 = vmatpush1.msra.mxu0 0.0
  %2681 = vmatprep.subr.mxu0 0.0
  %2682 = vmatpush1.msra.mxu0 0.0
  %2683 = vmatprep.subr.mxu0 0.0
  %2684 = vmatpush1.msra.mxu0 0.0
  %2685 = vmatprep.mubr.f32.mxu0 0.0
  %2686 = vmatmul.mubr.f32.gmra.mrb[0].mxu0 %v2460
  %v2687 = vpop.f32.mrb[0].mxu0
  %v2688 = vadd.f32 %v2543, %v2687
  %v2689 = vpop.f32.mrb[0].mxu0
  %2690 = vmatprep.mubr.f32.mxu0 0.0
  %2691 = vmatmul.mubr.f32.gmra.mrb[0].mxu0 %v2461
  %v2692 = vpop.f32.mrb[0].mxu0
  %v2693 = vadd.f32 %v2548, %v2692
  %v2694 = vpop.f32.mrb[0].mxu0
  %2695 = vmatprep.mubr.f32.mxu0 0.0
  %2696 = vmatmul.mubr.f32.gmra.mrb[0].mxu0 %v2462
  %v2697 = vpop.f32.mrb[0].mxu0
  %v2698 = vadd.f32 %v2553, %v2697
  %v2699 = vpop.f32.mrb[0].mxu0
  %2700 = vmatprep.mubr.f32.mxu0 0.0
  %2701 = vmatmul.mubr.f32.gmra.mrb[0].mxu0 %v2463
  %v2702 = vpop.f32.mrb[0].mxu0
  %v2703 = vadd.f32 %v2558, %v2702
  %v2704 = vpop.f32.mrb[0].mxu0
  %2705 = vmatprep.mubr.f32.mxu0 0.0
  %2706 = vmatmul.mubr.f32.gmra.mrb[0].mxu0 %v2464
  %v2707 = vpop.f32.mrb[0].mxu0
  %v2708 = vadd.f32 %v2563, %v2707
  %v2709 = vpop.f32.mrb[0].mxu0
  %2710 = vmatprep.mubr.f32.mxu0 0.0
  %2711 = vmatmul.mubr.f32.gmra.mrb[0].mxu0 %v2465
  %v2712 = vpop.f32.mrb[0].mxu0
  %v2713 = vadd.f32 %v2568, %v2712
  %v2714 = vpop.f32.mrb[0].mxu0
  %2715 = vmatprep.mubr.f32.mxu0 0.0
  %2716 = vmatmul.mubr.f32.gmra.mrb[0].mxu0 %v2466
  %v2717 = vpop.f32.mrb[0].mxu0
  %v2718 = vadd.f32 %v2573, %v2717
  %v2719 = vpop.f32.mrb[0].mxu0
  %2720 = vmatprep.mubr.f32.mxu0 0.0
  %2721 = vmatmul.mubr.f32.gmra.mrb[0].mxu0 %v2467
  %v2722 = vpop.f32.mrb[0].mxu0
  %v2723 = vadd.f32 %v2578, %v2722
  %v2724 = vpop.f32.mrb[0].mxu0
  %2725 = vmatprep.mubr.f32.mxu0 0.0
  %2726 = vmatmul.mubr.f32.gmra.mrb[0].mxu0 %v2468
  %v2727 = vpop.f32.mrb[0].mxu0
  %v2728 = vadd.f32 %v2583, %v2727
  %v2729 = vpop.f32.mrb[0].mxu0
  %2730 = vmatprep.mubr.f32.mxu0 0.0
  %2731 = vmatmul.mubr.f32.gmra.mrb[0].mxu0 %v2469
  %v2732 = vpop.f32.mrb[0].mxu0
  %v2733 = vadd.f32 %v2588, %v2732
  %v2734 = vpop.f32.mrb[0].mxu0
  %2735 = vmatprep.mubr.f32.mxu0 0.0
  %2736 = vmatmul.mubr.f32.gmra.mrb[0].mxu0 %v2470
  %v2737 = vpop.f32.mrb[0].mxu0
  %v2738 = vadd.f32 %v2593, %v2737
  %v2739 = vpop.f32.mrb[0].mxu0
  %2740 = vmatprep.mubr.f32.mxu0 0.0
  %2741 = vmatmul.mubr.f32.gmra.mrb[0].mxu0 %v2471
  %v2742 = vpop.f32.mrb[0].mxu0
  %v2743 = vadd.f32 %v2598, %v2742
  %v2744 = vpop.f32.mrb[0].mxu0
  %2745 = vmatprep.mubr.f32.mxu0 0.0
  %2746 = vmatmul.mubr.f32.gmra.mrb[0].mxu0 %v2472
  %v2747 = vpop.f32.mrb[0].mxu0
  %v2748 = vadd.f32 %v2603, %v2747
  %v2749 = vpop.f32.mrb[0].mxu0
  %2750 = vmatprep.mubr.f32.mxu0 0.0
  %2751 = vmatmul.mubr.f32.gmra.mrb[0].mxu0 %v2473
  %v2752 = vpop.f32.mrb[0].mxu0
  %v2753 = vadd.f32 %v2608, %v2752
  %v2754 = vpop.f32.mrb[0].mxu0
  %2755 = vmatprep.mubr.f32.mxu0 0.0
  %2756 = vmatmul.mubr.f32.gmra.mrb[0].mxu0 %v2474
  %v2757 = vpop.f32.mrb[0].mxu0
  %v2758 = vadd.f32 %v2613, %v2757
  %v2759 = vpop.f32.mrb[0].mxu0
  %2760 = vmatprep.mubr.f32.mxu0 0.0
  %2761 = vmatmul.mubr.f32.gmra.mrb[0].mxu0 %v2475
  %v2762 = vpop.f32.mrb[0].mxu0
  %v2763 = vadd.f32 %v2618, %v2762
  %v2764 = vpop.f32.mrb[0].mxu0
  %2765 = vdwg.mxu0
  %v2767 = vlaneseq
  %v2768 = vshrl.u32 %v2767, 7
  %v2769 = vsub.s32 0, %v2768
  %v2770 = vrot.slane %v2019, %v2769
  %v2772 = vadd.f32 %v2688, %v2770
  %v2773 = vadd.f32 %v2693, %v2770
  %v2774 = vadd.f32 %v2698, %v2770
  %v2775 = vadd.f32 %v2703, %v2770
  %v2776 = vadd.f32 %v2708, %v2770
  %v2777 = vadd.f32 %v2713, %v2770
  %v2778 = vadd.f32 %v2718, %v2770
  %v2779 = vadd.f32 %v2723, %v2770
  %v2780 = vadd.f32 %v2728, %v2770
  %v2781 = vadd.f32 %v2733, %v2770
  %v2782 = vadd.f32 %v2738, %v2770
  %v2783 = vadd.f32 %v2743, %v2770
  %v2784 = vadd.f32 %v2748, %v2770
  %v2785 = vadd.f32 %v2753, %v2770
  %v2786 = vadd.f32 %v2758, %v2770
  %v2787 = vadd.f32 %v2763, %v2770
  %v2788 = vmax.f32 %v2772, 0.0
  %v2789 = vmax.f32 %v2773, 0.0
  %v2790 = vmax.f32 %v2774, 0.0
  %v2791 = vmax.f32 %v2775, 0.0
  %v2792 = vmax.f32 %v2776, 0.0
  %v2793 = vmax.f32 %v2777, 0.0
  %v2794 = vmax.f32 %v2778, 0.0
  %v2795 = vmax.f32 %v2779, 0.0
  %v2796 = vmax.f32 %v2780, 0.0
  %v2797 = vmax.f32 %v2781, 0.0
  %v2798 = vmax.f32 %v2782, 0.0
  %v2799 = vmax.f32 %v2783, 0.0
  %v2800 = vmax.f32 %v2784, 0.0
  %v2801 = vmax.f32 %v2785, 0.0
  %v2802 = vmax.f32 %v2786, 0.0
  %v2803 = vmax.f32 %v2787, 0.0
  %v2804 = vmul.f32 %v2788, %v2788
  %v2805 = vmul.f32 %v2789, %v2789
  %v2806 = vmul.f32 %v2790, %v2790
  %v2807 = vmul.f32 %v2791, %v2791
  %v2808 = vmul.f32 %v2792, %v2792
  %v2809 = vmul.f32 %v2793, %v2793
  %v2810 = vmul.f32 %v2794, %v2794
  %v2811 = vmul.f32 %v2795, %v2795
  %v2812 = vmul.f32 %v2796, %v2796
  %v2813 = vmul.f32 %v2797, %v2797
  %v2814 = vmul.f32 %v2798, %v2798
  %v2815 = vmul.f32 %v2799, %v2799
  %v2816 = vmul.f32 %v2800, %v2800
  %v2817 = vmul.f32 %v2801, %v2801
  %v2818 = vmul.f32 %v2802, %v2802
  %v2819 = vmul.f32 %v2803, %v2803
  %2820 = vadd.xlane.f32.xlu0 %v2804
  %v2821 = vpop.xlane.xlu0 %2820
  %2822 = vadd.xlane.f32.xlu0 %v2805
  %v2823 = vpop.xlane.xlu0 %2822
  %2824 = vadd.xlane.f32.xlu0 %v2806
  %v2825 = vpop.xlane.xlu0 %2824
  %2826 = vadd.xlane.f32.xlu0 %v2807
  %v2827 = vpop.xlane.xlu0 %2826
  %2828 = vadd.xlane.f32.xlu0 %v2808
  %v2829 = vpop.xlane.xlu0 %2828
  %2830 = vadd.xlane.f32.xlu0 %v2809
  %v2831 = vpop.xlane.xlu0 %2830
  %2832 = vadd.xlane.f32.xlu0 %v2810
  %v2833 = vpop.xlane.xlu0 %2832
  %2834 = vadd.xlane.f32.xlu0 %v2811
  %v2835 = vpop.xlane.xlu0 %2834
  %2836 = vadd.xlane.f32.xlu0 %v2812
  %v2837 = vpop.xlane.xlu0 %2836
  %2838 = vadd.xlane.f32.xlu0 %v2813
  %v2839 = vpop.xlane.xlu0 %2838
  %2840 = vadd.xlane.f32.xlu0 %v2814
  %v2841 = vpop.xlane.xlu0 %2840
  %2842 = vadd.xlane.f32.xlu0 %v2815
  %v2843 = vpop.xlane.xlu0 %2842
  %2844 = vadd.xlane.f32.xlu0 %v2816
  %v2845 = vpop.xlane.xlu0 %2844
  %2846 = vadd.xlane.f32.xlu0 %v2817
  %v2847 = vpop.xlane.xlu0 %2846
  %2848 = vadd.xlane.f32.xlu0 %v2818
  %v2849 = vpop.xlane.xlu0 %2848
  %2850 = vadd.xlane.f32.xlu0 %v2819
  %v2851 = vpop.xlane.xlu0 %2850
  %vm2852 = vcmp.gt.f32.partialorder %v2821, 0.0
  %vm2853 = vcmp.gt.f32.partialorder %v2823, 0.0
  %vm2854 = vcmp.gt.f32.partialorder %v2825, 0.0
  %vm2855 = vcmp.gt.f32.partialorder %v2827, 0.0
  %vm2856 = vcmp.gt.f32.partialorder %v2829, 0.0
  %vm2857 = vcmp.gt.f32.partialorder %v2831, 0.0
  %vm2858 = vcmp.gt.f32.partialorder %v2833, 0.0
  %vm2859 = vcmp.gt.f32.partialorder %v2835, 0.0
  %vm2860 = vcmp.gt.f32.partialorder %v2837, 0.0
  %vm2861 = vcmp.gt.f32.partialorder %v2839, 0.0
  %vm2862 = vcmp.gt.f32.partialorder %v2841, 0.0
  %vm2863 = vcmp.gt.f32.partialorder %v2843, 0.0
  %vm2864 = vcmp.gt.f32.partialorder %v2845, 0.0
  %vm2865 = vcmp.gt.f32.partialorder %v2847, 0.0
  %vm2866 = vcmp.gt.f32.partialorder %v2849, 0.0
  %vm2867 = vcmp.gt.f32.partialorder %v2851, 0.0
  %v2868 = vrsqrt.pop %v2821
  %v2869 = vrsqrt.pop %v2823
  %v2870 = vrsqrt.pop %v2825
  %v2871 = vrsqrt.pop %v2827
  %v2872 = vrsqrt.pop %v2829
  %v2873 = vrsqrt.pop %v2831
  %v2874 = vrsqrt.pop %v2833
  %v2875 = vrsqrt.pop %v2835
  %v2876 = vrsqrt.pop %v2837
  %v2877 = vrsqrt.pop %v2839
  %v2878 = vrsqrt.pop %v2841
  %v2879 = vrsqrt.pop %v2843
  %v2880 = vrsqrt.pop %v2845
  %v2881 = vrsqrt.pop %v2847
  %v2882 = vrsqrt.pop %v2849
  %v2883 = vrsqrt.pop %v2851
  %v2884 = vsel %vm2852, %v2868, 1.0
  %v2885 = vsel %vm2853, %v2869, 1.0
  %v2886 = vsel %vm2854, %v2870, 1.0
  %v2887 = vsel %vm2855, %v2871, 1.0
  %v2888 = vsel %vm2856, %v2872, 1.0
  %v2889 = vsel %vm2857, %v2873, 1.0
  %v2890 = vsel %vm2858, %v2874, 1.0
  %v2891 = vsel %vm2859, %v2875, 1.0
  %v2892 = vsel %vm2860, %v2876, 1.0
  %v2893 = vsel %vm2861, %v2877, 1.0
  %v2894 = vsel %vm2862, %v2878, 1.0
  %v2895 = vsel %vm2863, %v2879, 1.0
  %v2896 = vsel %vm2864, %v2880, 1.0
  %v2897 = vsel %vm2865, %v2881, 1.0
  %v2898 = vsel %vm2866, %v2882, 1.0
  %v2899 = vsel %vm2867, %v2883, 1.0
  %v2900 = vmul.f32 %v2788, %v2884
  %v2901 = vmul.f32 %v2789, %v2885
  %v2902 = vmul.f32 %v2790, %v2886
  %v2903 = vmul.f32 %v2791, %v2887
  %v2904 = vmul.f32 %v2792, %v2888
  %v2905 = vmul.f32 %v2793, %v2889
  %v2906 = vmul.f32 %v2794, %v2890
  %v2907 = vmul.f32 %v2795, %v2891
  %v2908 = vmul.f32 %v2796, %v2892
  %v2909 = vmul.f32 %v2797, %v2893
  %v2910 = vmul.f32 %v2798, %v2894
  %v2911 = vmul.f32 %v2799, %v2895
  %v2912 = vmul.f32 %v2800, %v2896
  %v2913 = vmul.f32 %v2801, %v2897
  %v2914 = vmul.f32 %v2802, %v2898
  %v2915 = vmul.f32 %v2803, %v2899
  %2916 = vst [vmem:[%s19] sm:$0xff] %v2900
  %2917 = vst [vmem:[%s19 + $0x8] sm:$0xff] %v2901
  %2918 = vst [vmem:[%s19 + $0x10] sm:$0xff] %v2902
  %2919 = vst [vmem:[%s19 + $0x18] sm:$0xff] %v2903
  %2920 = vst [vmem:[%s19 + $0x20] sm:$0xff] %v2904
  %2921 = vst [vmem:[%s19 + $0x28] sm:$0xff] %v2905
  %2922 = vst [vmem:[%s19 + $0x30] sm:$0xff] %v2906
  %2923 = vst [vmem:[%s19 + $0x38] sm:$0xff] %v2907
  %2924 = vst [vmem:[%s19 + $0x40] sm:$0xff] %v2908
  %2925 = vst [vmem:[%s19 + $0x48] sm:$0xff] %v2909
  %2926 = vst [vmem:[%s19 + $0x50] sm:$0xff] %v2910
  %2927 = vst [vmem:[%s19 + $0x58] sm:$0xff] %v2911
  %2928 = vst [vmem:[%s19 + $0x60] sm:$0xff] %v2912
  %2929 = vst [vmem:[%s19 + $0x68] sm:$0xff] %v2913
  %2930 = vst [vmem:[%s19 + $0x70] sm:$0xff] %v2914
  %2931 = vst [vmem:[%s19 + $0x78] sm:$0xff] %v2915
  // Predicated region
  $region78: #{pinsage_forward.1} parent=0 // pred_check
    _
  $region79: #{pinsage_forward.1} parent=0 // pred_check_branch
    %2933 = sbr.rel (0) target = $region81
  $region80: #{pinsage_forward.1} parent=0 // pred_region
    _
  $region81: #{pinsage_forward.1} parent=0 // pred_fallthru
    _
  // Predicated region
  $region82: #{pinsage_forward.1} parent=0 // pred_check
    _
  $region83: #{pinsage_forward.1} parent=0 // pred_check_branch
    %2935 = sbr.rel (0) target = $region85
  $region84: #{pinsage_forward.1} parent=0 // pred_region
    _
  $region85: #{pinsage_forward.1} parent=0 // pred_fallthru
    _

</llo_original>
